<compile_context>
chip_gen: v6e
topology: v6e:2x2x1
jax: 0.10.0
libtpu: 0.0.40
codegen_flags: <defaults>
</compile_context>

<pallas_src>
import jax
import jax.numpy as jnp
from jax.experimental import pallas as pl
from jax.experimental.pallas import tpu as pltpu


def _als_kernel(uid_ref, iid_ref, u_tab_ref, i_tab_ref, o_ref, u_rows, v_rows):
    """One grid step scores TB batch elements.

    uid_ref / iid_ref : (B_pad,) int32 ids, SMEM (scalar-prefetched)
    u_tab_ref         : (Ru, F) f32 user table, whole-array VMEM resident
    i_tab_ref         : (Ri, F) f32 item table, whole-array VMEM resident
    o_ref             : (TB, 1) f32 output block
    u_rows / v_rows   : (TB, F) f32 VMEM scratch for the gathered rows
    """
    tb = u_rows.shape[0]
    base = pl.program_id(0) * tb

    # Id-driven row gather from the resident tables: O(F) per element, no
    # R-proportional one-hot matmul, no (R, TB) intermediate.
    def gather_one(i, carry):
        uid = uid_ref[base + i]
        iid = iid_ref[base + i]
        u_rows[pl.ds(i, 1), :] = u_tab_ref[pl.ds(uid, 1), :]
        v_rows[pl.ds(i, 1), :] = i_tab_ref[pl.ds(iid, 1), :]
        return carry

    jax.lax.fori_loop(0, tb, gather_one, 0, unroll=False)

    u = u_rows[...]                                         # (TB, F)
    v = v_rows[...]

    # nn.Embedding(max_norm=1): rows with ||row|| > 1 are scaled by
    # 1 / (||row|| + 1e-7). Scales are fused into the final dot product
    # rather than rescaling the full (TB, F) tensors.
    nu = jnp.sqrt(jnp.sum(u * u, axis=1, keepdims=True))    # (TB, 1)
    nv = jnp.sqrt(jnp.sum(v * v, axis=1, keepdims=True))
    su = jnp.where(nu > 1.0, 1.0 / (nu + 1e-7), 1.0)
    sv = jnp.where(nv > 1.0, 1.0 / (nv + 1e-7), 1.0)

    dot = jnp.sum(u * v, axis=1, keepdims=True)             # (TB, 1)
    # Note: output block is (TB, 1) (gather-natural layout); output traffic is
    # only TB*4 bytes/step, so the masked-store cost is negligible here.
    o_ref[...] = jax.nn.sigmoid(dot * su * sv)


def als_forward(user_ids, item_ids, user_emb, item_emb, *, tb=512):
    """sigmoid(<user_emb[user_ids], item_emb[item_ids]>), shape [batch]."""
    B = int(user_ids.shape[0])
    Ru, F = int(user_emb.shape[0]), int(user_emb.shape[1])
    Ri = int(item_emb.shape[0])

    nt = max(1, pl.cdiv(B, tb))
    b_pad = nt * tb

    def prep_ids(ids, n_rows):
        # Clamp rather than letting an out-of-range id read OOB VMEM
        # (PyTorch raises on OOB ids); padded tail ids read row 0 and the
        # corresponding outputs are sliced off below.
        ids = jnp.clip(ids.astype(jnp.int32), 0, n_rows - 1)
        if b_pad != B:
            ids = jnp.pad(ids, (0, b_pad - B))
        return ids

    uids = prep_ids(user_ids, Ru)
    iids = prep_ids(item_ids, Ri)

    # Natural (R, F) layout -- no per-call transpose of the tables.
    u_tab = user_emb.astype(jnp.float32)
    i_tab = item_emb.astype(jnp.float32)

    # VMEM budget: single-buffered resident tables + gather scratch + output.
    def rup(x, m):
        return ((x + m - 1) // m) * m

    lane_f = rup(F, 128)
    needed = ((rup(Ru, 8) + rup(Ri, 8)) * lane_f * 4          # resident tables
              + 2 * rup(tb, 8) * lane_f * 4                   # gather scratch
              + 2 * rup(tb, 8) * 128 * 4)                     # out tiles (2 bufs)
    try:
        vmem_cap = int(pltpu.get_tpu_info().vmem_capacity_bytes)
    except Exception:
        vmem_cap = 64 << 20                                   # v7x per-TC floor
    vmem_limit = int(min(max(needed + (16 << 20), 32 << 20), vmem_cap))

    grid_spec = pltpu.PrefetchScalarGridSpec(
        num_scalar_prefetch=2,                                # uids, iids -> SMEM
        grid=(nt,),
        in_specs=[
            # Whole-table VMEM residents: copied in once, single buffer.
            pl.BlockSpec(memory_space=pltpu.MemorySpace.VMEM),
            pl.BlockSpec(memory_space=pltpu.MemorySpace.VMEM),
        ],
        out_specs=pl.BlockSpec((tb, 1), lambda i, uids, iids: (i, 0)),
        scratch_shapes=[
            pltpu.VMEM((tb, F), jnp.float32),
            pltpu.VMEM((tb, F), jnp.float32),
        ],
    )

    out = pl.pallas_call(
        _als_kernel,
        out_shape=jax.ShapeDtypeStruct((b_pad, 1), jnp.float32),
        grid_spec=grid_spec,
        compiler_params=pltpu.CompilerParams(
            # "arbitrary" avoids per-core duplication of the resident tables
            # on v7x's 2 TCs (64 MiB each).
            dimension_semantics=("arbitrary",),
            vmem_limit_bytes=vmem_limit,
        ),
    )(uids, iids, u_tab, i_tab)

    return out[:B, 0]


def als_reference(user_ids, item_ids, user_emb, item_emb):
    """Pure-JAX reference mirroring the PyTorch forward (incl. max_norm=1)."""
    def renorm(rows):
        n = jnp.linalg.norm(rows, axis=-1, keepdims=True)
        return rows * jnp.where(n > 1.0, 1.0 / (n + 1e-7), 1.0)

    u = renorm(user_emb[user_ids])
    v = renorm(item_emb[item_ids])
    return jax.nn.sigmoid(jnp.sum(u * v, axis=-1))


if __name__ == "__main__":
    n_users, n_items, n_factors = 50, 40, 32
    batch = 600          # non-multiple of TB exercises padding; 2 grid steps

    key = jax.random.PRNGKey(0)
    k_u, k_i, k_uid, k_iid = jax.random.split(key, 4)

    # nn.Embedding default init ~ N(0, 1)
    user_emb = jax.random.normal(k_u, (n_users, n_factors), dtype=jnp.float32)
    item_emb = jax.random.normal(k_i, (n_items, n_factors), dtype=jnp.float32)

    user_ids = jax.random.randint(k_uid, (batch,), 0, n_users, dtype=jnp.int32)
    item_ids = jax.random.randint(k_iid, (batch,), 0, n_items, dtype=jnp.int32)

    scores = als_forward(user_ids, item_ids, user_emb, item_emb)
    scores = jax.block_until_ready(scores)

    ref = als_reference(user_ids, item_ids, user_emb, item_emb)
    assert scores.shape == (batch,)
    assert jnp.allclose(scores, ref, atol=1e-5, rtol=1e-5), \
        float(jnp.max(jnp.abs(scores - ref)))

    print("KERNEL_OK")
</pallas_src>

<mosaic_0001>
module attributes {stable_mosaic.version = 11 : i64} {
  func.func @_als_kernel(%arg0: i32, %arg1: memref<1024xi32, #tpu.memory_space<smem>>, %arg2: memref<1024xi32, #tpu.memory_space<smem>>, %arg3: memref<50x32xf32, #tpu.memory_space<vmem>>, %arg4: memref<40x32xf32, #tpu.memory_space<vmem>>, %arg5: memref<512x1xf32, #tpu.memory_space<vmem>>, %arg6: memref<512x32xf32, #tpu.memory_space<vmem>>, %arg7: memref<512x32xf32, #tpu.memory_space<vmem>>) attributes {dimension_semantics = [#tpu.dimension_semantics<arbitrary>], iteration_bounds = array<i64: 2>, scalar_prefetch = 2 : i64, scratch_operands = 2 : i64, tpu.core_type = #tpu.core_type<tc>, window_params = [{pipeline_mode = #tpu.pipeline_mode<synchronous>, transform_indices = @transform_0, window_bounds = array<i64: 50, 32>}, {pipeline_mode = #tpu.pipeline_mode<synchronous>, transform_indices = @transform_1, window_bounds = array<i64: 40, 32>}, {transform_indices = @transform_2, window_bounds = array<i64: 512, 1>}]} {
    %c512_i32 = arith.constant 512 : i32
    %0 = arith.muli %arg0, %c512_i32 : i32
    %c0_i32 = arith.constant 0 : i32
    %c512_i32_0 = arith.constant 512 : i32
    %1 = arith.addi %c0_i32, %c512_i32_0 : i32
    %c1_i32 = arith.constant 1 : i32
    scf.for %arg8 = %c0_i32 to %1 step %c1_i32  : i32 {
      %39 = arith.addi %0, %arg8 : i32
      %40 = arith.index_cast %39 : i32 to index
      %41 = memref.load %arg1[%40] : memref<1024xi32, #tpu.memory_space<smem>>
      %42 = arith.addi %0, %arg8 : i32
      %43 = arith.index_cast %42 : i32 to index
      %44 = memref.load %arg2[%43] : memref<1024xi32, #tpu.memory_space<smem>>
      %45 = arith.index_cast %41 : i32 to index
      %c0_18 = arith.constant 0 : index
      %46 = vector.load %arg3[%45, %c0_18] : memref<50x32xf32, #tpu.memory_space<vmem>>, vector<1x32xf32>
      %47 = arith.index_cast %arg8 : i32 to index
      %c0_19 = arith.constant 0 : index
      %48 = vector.load %arg6[%47, %c0_19] : memref<512x32xf32, #tpu.memory_space<vmem>>, vector<1x32xf32>
      tpu.vector_store %arg6[%47, %c0_19], %46 {strides = array<i32>} : memref<512x32xf32, #tpu.memory_space<vmem>>, vector<1x32xf32>,
      %49 = arith.index_cast %44 : i32 to index
      %c0_20 = arith.constant 0 : index
      %50 = vector.load %arg4[%49, %c0_20] : memref<40x32xf32, #tpu.memory_space<vmem>>, vector<1x32xf32>
      %51 = arith.index_cast %arg8 : i32 to index
      %c0_21 = arith.constant 0 : index
      %52 = vector.load %arg7[%51, %c0_21] : memref<512x32xf32, #tpu.memory_space<vmem>>, vector<1x32xf32>
      tpu.vector_store %arg7[%51, %c0_21], %50 {strides = array<i32>} : memref<512x32xf32, #tpu.memory_space<vmem>>, vector<1x32xf32>,
    }
    %c512_i32_1 = arith.constant 512 : i32
    %c0 = arith.constant 0 : index
    %c0_2 = arith.constant 0 : index
    %2 = vector.load %arg6[%c0, %c0_2] : memref<512x32xf32, #tpu.memory_space<vmem>>, vector<512x32xf32>
    %c0_3 = arith.constant 0 : index
    %c0_4 = arith.constant 0 : index
    %3 = vector.load %arg7[%c0_3, %c0_4] : memref<512x32xf32, #tpu.memory_space<vmem>>, vector<512x32xf32>
    %4 = arith.mulf %2, %2 : vector<512x32xf32>
    %cst = arith.constant dense<0.000000e+00> : vector<512xf32>
    %5 = vector.multi_reduction <add>, %4, %cst [1] : vector<512x32xf32> to vector<512xf32>
    %6 = vector.shape_cast %5 : vector<512xf32> to vector<512x1xf32>
    %7 = math.sqrt %6 : vector<512x1xf32>
    %8 = arith.mulf %3, %3 : vector<512x32xf32>
    %cst_5 = arith.constant dense<0.000000e+00> : vector<512xf32>
    %9 = vector.multi_reduction <add>, %8, %cst_5 [1] : vector<512x32xf32> to vector<512xf32>
    %10 = vector.shape_cast %9 : vector<512xf32> to vector<512x1xf32>
    %11 = math.sqrt %10 : vector<512x1xf32>
    %cst_6 = arith.constant 1.000000e+00 : f32
    %12 = vector.broadcast %cst_6 : f32 to vector<512x1xf32>
    %13 = arith.cmpf ogt, %7, %12 : vector<512x1xf32>
    %cst_7 = arith.constant 1.000000e-07 : f32
    %14 = vector.broadcast %cst_7 : f32 to vector<512x1xf32>
    %15 = arith.addf %7, %14 : vector<512x1xf32>
    %cst_8 = arith.constant 1.000000e+00 : f32
    %16 = vector.broadcast %cst_8 : f32 to vector<512x1xf32>
    %17 = arith.divf %16, %15 : vector<512x1xf32>
    %cst_9 = arith.constant 1.000000e+00 : f32
    %18 = vector.broadcast %cst_9 : f32 to vector<512x1xf32>
    %19 = arith.select %13, %17, %18 : vector<512x1xi1>, vector<512x1xf32>
    %cst_10 = arith.constant 1.000000e+00 : f32
    %20 = vector.broadcast %cst_10 : f32 to vector<512x1xf32>
    %21 = arith.cmpf ogt, %11, %20 : vector<512x1xf32>
    %cst_11 = arith.constant 1.000000e-07 : f32
    %22 = vector.broadcast %cst_11 : f32 to vector<512x1xf32>
    %23 = arith.addf %11, %22 : vector<512x1xf32>
    %cst_12 = arith.constant 1.000000e+00 : f32
    %24 = vector.broadcast %cst_12 : f32 to vector<512x1xf32>
    %25 = arith.divf %24, %23 : vector<512x1xf32>
    %cst_13 = arith.constant 1.000000e+00 : f32
    %26 = vector.broadcast %cst_13 : f32 to vector<512x1xf32>
    %27 = arith.select %21, %25, %26 : vector<512x1xi1>, vector<512x1xf32>
    %28 = arith.mulf %2, %3 : vector<512x32xf32>
    %cst_14 = arith.constant dense<0.000000e+00> : vector<512xf32>
    %29 = vector.multi_reduction <add>, %28, %cst_14 [1] : vector<512x32xf32> to vector<512xf32>
    %30 = vector.shape_cast %29 : vector<512xf32> to vector<512x1xf32>
    %31 = arith.mulf %30, %19 : vector<512x1xf32>
    %32 = arith.mulf %31, %27 : vector<512x1xf32>
    %33 = arith.negf %32 : vector<512x1xf32>
    %34 = math.exp %33 : vector<512x1xf32>
    %cst_15 = arith.constant 1.000000e+00 : f32
    %35 = vector.broadcast %cst_15 : f32 to vector<512x1xf32>
    %36 = arith.addf %35, %34 : vector<512x1xf32>
    %37 = arith.divf %35, %36 : vector<512x1xf32>
    %c0_16 = arith.constant 0 : index
    %c0_17 = arith.constant 0 : index
    %38 = vector.load %arg5[%c0_16, %c0_17] : memref<512x1xf32, #tpu.memory_space<vmem>>, vector<512x1xf32>
    tpu.vector_store %arg5[%c0_16, %c0_17], %37 {strides = array<i32>} : memref<512x1xf32, #tpu.memory_space<vmem>>, vector<512x1xf32>,
    return
  }
  func.func @transform_0(%arg0: i32, %arg1: memref<1024xi32, #tpu.memory_space<smem>>, %arg2: memref<1024xi32, #tpu.memory_space<smem>>) -> (i32, i32) {
    %c0_i32 = arith.constant 0 : i32
    %c0_i32_0 = arith.constant 0 : i32
    %c0_i32_1 = arith.constant 0 : i32
    return %c0_i32, %c0_i32_0 : i32, i32
  }
  func.func @transform_1(%arg0: i32, %arg1: memref<1024xi32, #tpu.memory_space<smem>>, %arg2: memref<1024xi32, #tpu.memory_space<smem>>) -> (i32, i32) {
    %c0_i32 = arith.constant 0 : i32
    %c0_i32_0 = arith.constant 0 : i32
    %c0_i32_1 = arith.constant 0 : i32
    return %c0_i32, %c0_i32_0 : i32, i32
  }
  func.func @transform_2(%arg0: i32, %arg1: memref<1024xi32, #tpu.memory_space<smem>>, %arg2: memref<1024xi32, #tpu.memory_space<smem>>) -> (i32, i32) {
    %c0_i32 = arith.constant 0 : i32
    %c0_i32_0 = arith.constant 0 : i32
    return %arg0, %c0_i32 : i32, i32
  }
}

</mosaic_0001>

<llo_original>
// kernel: tpu_custom_call.1
$region0: #{tpu_custom_call.1}
  #allocation0 [shape = 'u32[]', space=smem, size = 0x4, offset = 0x4, fixed_abs, tag = 'smem constant byte address 0x4 - core index']
  #allocation1 [shape = 'u32[144,128]{1,0:T(1,128)}', space=vmem, size = 0x12000, scoped, tag = 'internal scratch']
  #allocation2 [shape = 'f32[512,32]{1,0:T(8,128)}', space=vmem, size = 0x40000, scoped, tag = 'scratch operand']
  #allocation3 [shape = 'f32[512,32]{1,0:T(8,128)}', space=vmem, size = 0x40000, scoped, tag = 'scratch operand']
  #allocation4 [shape = 's32[1]{0}', space=sflag, size = 0x4, scoped, tag = 'scoped memory for tpu_custom_call.1']
  #allocation5 [shape = 'u8[4096]{0}', space=smem, size = 0x1000, scoped, tag = 'prefetched SMEM operand 0']
  #allocation6 [shape = 'u8[4096]{0}', space=smem, size = 0x1000, scoped, tag = 'prefetched SMEM operand 1']
  %s0 = inlined_call_operand.vmem [shape: s32[1024], index: 0, kind: input, shape index: {}]
  %s1 = inlined_call_operand.vmem [shape: s32[1024], index: 1, kind: input, shape index: {}]
  %s2 = inlined_call_operand.vmem [shape: f32[50,32], index: 2, kind: input, shape index: {}]
  %s3 = inlined_call_operand.vmem [shape: f32[40,32], index: 3, kind: input, shape index: {}]
  %s4 = inlined_call_operand.vmem [shape: f32[1024,1], index: 4, kind: output, shape index: {}]
  %s5 = sld [smem:[#allocation0]]
  $region48: #{tpu_custom_call.1} parent=0
    _
  %s7 = ssub.s32 1, %s5
  %s8 = scalar_select 0, %s7, %s5
  %s9 = sshll.u32 %s0, 4
  %s10 = int_to_ptr.vmem [resolvable:$true] %s9
  %12 = dma.vmem_to_smem %s10, 128, [#allocation5], [#allocation4]
  %s13 = sshll.u32 %s1, 4
  %s14 = int_to_ptr.vmem [resolvable:$true] %s13
  %16 = dma.vmem_to_smem %s14, 128, [#allocation6], [#allocation4]
  %17 = dma.done [#allocation4], 256
  %18 = sfence
  loop: start=0, step=1, limit=4
  $region2: #{tpu_custom_call.1} parent=0 // loop_pre_header
    _
  $region3: #{tpu_custom_call.1} parent=0 // loop_header
    %s20 = sphi 0, %s24
    %p21 = scmp.ge.s32.totalorder %s20, 4
    %s28 = sphi 0, %s28
    %s30 = sphi 0, %s28
    %s31 = sphi 0, %s30
    %s45 = sphi 0, %s31
    %s49 = sphi 0, %s49
    %s51 = sphi 0, %s49
    %s52 = sphi 0, %s51
    %s66 = sphi 0, %s52
    %s72 = sphi 0, %s74
    %s75 = sphi 0, %s72
    %s76 = sphi 0, %s75
    %s92 = sphi 0, %s76
  $region4: #{tpu_custom_call.1} parent=0 // loop_header_branch
    %23 = sbr.rel (%p21) target = $region8
  $region5: #{tpu_custom_call.1} parent=0 // loop_body
    %s25 = ssub.s32 %s20, 1
    %s26 = ssub.s32 %s20, 2
    %s27 = sadd.s32 %s20, 1
    %s29 = sadd.s32 %s28, 1
    %p32 = scmp.eq.s32.totalorder %s20, 1
    %p33 = scmp.ne.s32.totalorder %s28, %s30
    %p34 = scmp.eq.s32.totalorder %s20, 0
    %p35 = por %p33, %p34
    %p36 = scmp.ne.s32.totalorder %s28, %s30
    %p37 = scmp.eq.s32.totalorder %s25, 1
    %p38 = por %p36, %p37
    %p39 = scmp.ne.s32.totalorder %s30, %s31
    %p40 = scmp.eq.s32.totalorder %s25, 0
    %p41 = por %p39, %p40
    %p42 = scmp.ne.s32.totalorder %s30, %s31
    %p43 = scmp.eq.s32.totalorder %s26, 1
    %p44 = por %p42, %p43
    %p46 = scmp.ne.s32.totalorder %s31, %s45
    %p47 = scmp.eq.s32.totalorder %s26, 0
    %p48 = por %p46, %p47
    %s50 = sadd.s32 %s49, 1
    %p53 = scmp.eq.s32.totalorder %s20, 1
    %p54 = scmp.ne.s32.totalorder %s49, %s51
    %p55 = scmp.eq.s32.totalorder %s20, 0
    %p56 = por %p54, %p55
    %p57 = scmp.ne.s32.totalorder %s49, %s51
    %p58 = scmp.eq.s32.totalorder %s25, 1
    %p59 = por %p57, %p58
    %p60 = scmp.ne.s32.totalorder %s51, %s52
    %p61 = scmp.eq.s32.totalorder %s25, 0
    %p62 = por %p60, %p61
    %p63 = scmp.ne.s32.totalorder %s51, %s52
    %p64 = scmp.eq.s32.totalorder %s26, 1
    %p65 = por %p63, %p64
    %p67 = scmp.ne.s32.totalorder %s52, %s66
    %p68 = scmp.eq.s32.totalorder %s26, 0
    %p69 = por %p67, %p68
    %s70 = ssub.s32 %s20, %s27
    %p71 = scmp.eq.s32.totalorder %s70, 0
    %s73 = sadd.s32 %s72, 1
    %s74 = scalar_select %p71, %s72, %s73
    %p77 = pneg %p71
    %p78 = scmp.eq.s32.totalorder %s20, 1
    %p79 = por %p77, %p78
    %p80 = scmp.ne.s32.totalorder %s72, %s75
    %p81 = scmp.eq.s32.totalorder %s20, 0
    %p82 = por %p80, %p81
    %p83 = scmp.ne.s32.totalorder %s72, %s75
    %p84 = scmp.eq.s32.totalorder %s25, 1
    %p85 = por %p83, %p84
    %p86 = scmp.ne.s32.totalorder %s75, %s76
    %p87 = scmp.eq.s32.totalorder %s25, 0
    %p88 = por %p86, %p87
    %p89 = scmp.ne.s32.totalorder %s75, %s76
    %p90 = scmp.eq.s32.totalorder %s26, 1
    %p91 = por %p89, %p90
    %p93 = scmp.ne.s32.totalorder %s76, %s92
    %p94 = scmp.eq.s32.totalorder %s26, 0
    %p95 = por %p93, %p94
    %p96 = scmp.le.s32.totalorder 1, %s20
    %p97 = scmp.lt.s32.totalorder %s20, 3
    %p98 = pnand %p96, %p97
    %p99 = pneg %p98
    // Predicated region
    $region9: #{tpu_custom_call.1} parent=5 // pred_check
      _
    $region10: #{tpu_custom_call.1} parent=5 // pred_check_branch
      %101 = sbr.rel (%p98) target = $region12
    $region11: #{tpu_custom_call.1} parent=5 // pred_region
      %s102 = ssub.s32 %s20, 1
      // Predicated region
      $region13: #{tpu_custom_call.1} parent=11 // pred_check
        %p103 = pneg %p41
      $region14: #{tpu_custom_call.1} parent=11 // pred_check_branch
        %105 = sbr.rel (%p103) target = $region16
      $region15: #{tpu_custom_call.1} parent=11 // pred_region
        _
      $region16: #{tpu_custom_call.1} parent=11 // pred_fallthru
        _
      // Predicated region
      $region17: #{tpu_custom_call.1} parent=11 // pred_check
        %p106 = pneg %p62
      $region18: #{tpu_custom_call.1} parent=11 // pred_check_branch
        %108 = sbr.rel (%p106) target = $region20
      $region19: #{tpu_custom_call.1} parent=11 // pred_region
        _
      $region20: #{tpu_custom_call.1} parent=11 // pred_fallthru
        _
    $region12: #{tpu_custom_call.1} parent=5 // pred_fallthru
      _
    %p109 = scmp.lt.s32.totalorder %s20, 2
    // Predicated region
    $region21: #{tpu_custom_call.1} parent=5 // pred_check
      %p110 = pneg %p109
    $region22: #{tpu_custom_call.1} parent=5 // pred_check_branch
      %112 = sbr.rel (%p110) target = $region24
    $region23: #{tpu_custom_call.1} parent=5 // pred_region
      _
    $region24: #{tpu_custom_call.1} parent=5 // pred_fallthru
      _
    %p113 = scmp.le.s32.totalorder 1, %s20
    %p114 = scmp.lt.s32.totalorder %s20, 3
    %p115 = pnand %p113, %p114
    %p116 = pneg %p115
    // Predicated region
    $region25: #{tpu_custom_call.1} parent=5 // pred_check
      _
    $region26: #{tpu_custom_call.1} parent=5 // pred_check_branch
      %118 = sbr.rel (%p115) target = $region28
    $region27: #{tpu_custom_call.1} parent=5 // pred_region
      %s119 = ssub.s32 %s20, 1
      %p120 = pneg %p41
      %p121 = pneg %p38
      %p122 = pneg %p62
      %p123 = pneg %p59
      %p124 = pneg %p88
      %p125 = pneg %p85
      %s126 = smul.u32 64, %s25
      %p127 = scmp.lt.s32.totalorder %s126, 127
      %s128 = scalar_select %p127, %s126, 127
      %s129 = smul.addr %s128, 8
      %s130 = scalar_lea.vmem %s4, %s129
      %s131 = smul.u32 64, %s25
      %p132 = scmp.lt.s32.totalorder %s131, 127
      %s133 = scalar_select %p132, %s131, 127
      %s134 = smul.addr %s133, 8
      %s135 = scalar_lea.vmem %s4, %s134
      %s136 = smul.u32 64, %s25
      %s137 = smul.u32 %s25, 512
      loop: start=0, step=1, limit=512
      $region29: #{tpu_custom_call.1} parent=27 // loop_pre_header
        _
      $region30: #{tpu_custom_call.1} parent=27 // loop_header
        %s139 = sphi 0, %s143
        %p140 = scmp.ge.s32.totalorder %s139, 512
      $region31: #{tpu_custom_call.1} parent=27 // loop_header_branch
        %142 = sbr.rel (%p140) target = $region35
      $region32: #{tpu_custom_call.1} parent=27 // loop_body
        %s144 = sadd.s32 %s137, %s139
        %s145 = sld [smem:[#allocation5 + %s144]]
        %s146 = sld [smem:[#allocation6 + %s144]]
        %s147 = scalar_lea.vmem %s2, %s145
        %v148 = vld [vmem:[%s147] sm:$0x1]
        %s149 = scalar_lea.vmem [#allocation2], %s139
        %vm150 = vcmask 253952
        %151 = vst.msk [vmem:[%s149] sm:$0x1] %vm150, %v148
        %s152 = scalar_lea.vmem %s3, %s146
        %v153 = vld [vmem:[%s152] sm:$0x1]
        %s154 = scalar_lea.vmem [#allocation3], %s139
        %155 = vst.msk [vmem:[%s154] sm:$0x1] %vm150, %v153
      $region33: #{tpu_custom_call.1} parent=27 // loop_footer
        %s143 = sadd.s32 1, %s139
      $region34: #{tpu_custom_call.1} parent=27 // loop_footer_branch
        %138 = sbr.rel target = $region30
      $region35: #{tpu_custom_call.1} parent=27 // loop_exit
        _
      %v156 = vld [vmem:[#allocation2] sm:$0xff]
      %v157 = vld [vmem:[#allocation2 + $0x8] sm:$0xff]
      %v158 = vld [vmem:[#allocation2 + $0x10] sm:$0xff]
      %v159 = vld [vmem:[#allocation2 + $0x18] sm:$0xff]
      %v160 = vld [vmem:[#allocation2 + $0x20] sm:$0xff]
      %v161 = vld [vmem:[#allocation2 + $0x28] sm:$0xff]
      %v162 = vld [vmem:[#allocation2 + $0x30] sm:$0xff]
      %v163 = vld [vmem:[#allocation2 + $0x38] sm:$0xff]
      %v164 = vld [vmem:[#allocation2 + $0x40] sm:$0xff]
      %v165 = vld [vmem:[#allocation2 + $0x48] sm:$0xff]
      %v166 = vld [vmem:[#allocation2 + $0x50] sm:$0xff]
      %v167 = vld [vmem:[#allocation2 + $0x58] sm:$0xff]
      %v168 = vld [vmem:[#allocation2 + $0x60] sm:$0xff]
      %v169 = vld [vmem:[#allocation2 + $0x68] sm:$0xff]
      %v170 = vld [vmem:[#allocation2 + $0x70] sm:$0xff]
      %v171 = vld [vmem:[#allocation2 + $0x78] sm:$0xff]
      %v172 = vld [vmem:[#allocation2 + $0x80] sm:$0xff]
      %v173 = vld [vmem:[#allocation2 + $0x88] sm:$0xff]
      %v174 = vld [vmem:[#allocation2 + $0x90] sm:$0xff]
      %v175 = vld [vmem:[#allocation2 + $0x98] sm:$0xff]
      %v176 = vld [vmem:[#allocation2 + $0xa0] sm:$0xff]
      %v177 = vld [vmem:[#allocation2 + $0xa8] sm:$0xff]
      %v178 = vld [vmem:[#allocation2 + $0xb0] sm:$0xff]
      %v179 = vld [vmem:[#allocation2 + $0xb8] sm:$0xff]
      %v180 = vld [vmem:[#allocation2 + $0xc0] sm:$0xff]
      %v181 = vld [vmem:[#allocation2 + $0xc8] sm:$0xff]
      %v182 = vld [vmem:[#allocation2 + $0xd0] sm:$0xff]
      %v183 = vld [vmem:[#allocation2 + $0xd8] sm:$0xff]
      %v184 = vld [vmem:[#allocation2 + $0xe0] sm:$0xff]
      %v185 = vld [vmem:[#allocation2 + $0xe8] sm:$0xff]
      %v186 = vld [vmem:[#allocation2 + $0xf0] sm:$0xff]
      %v187 = vld [vmem:[#allocation2 + $0xf8] sm:$0xff]
      %v188 = vld [vmem:[#allocation2 + $0x100] sm:$0xff]
      %v189 = vld [vmem:[#allocation2 + $0x108] sm:$0xff]
      %v190 = vld [vmem:[#allocation2 + $0x110] sm:$0xff]
      %v191 = vld [vmem:[#allocation2 + $0x118] sm:$0xff]
      %v192 = vld [vmem:[#allocation2 + $0x120] sm:$0xff]
      %v193 = vld [vmem:[#allocation2 + $0x128] sm:$0xff]
      %v194 = vld [vmem:[#allocation2 + $0x130] sm:$0xff]
      %v195 = vld [vmem:[#allocation2 + $0x138] sm:$0xff]
      %v196 = vld [vmem:[#allocation2 + $0x140] sm:$0xff]
      %v197 = vld [vmem:[#allocation2 + $0x148] sm:$0xff]
      %v198 = vld [vmem:[#allocation2 + $0x150] sm:$0xff]
      %v199 = vld [vmem:[#allocation2 + $0x158] sm:$0xff]
      %v200 = vld [vmem:[#allocation2 + $0x160] sm:$0xff]
      %v201 = vld [vmem:[#allocation2 + $0x168] sm:$0xff]
      %v202 = vld [vmem:[#allocation2 + $0x170] sm:$0xff]
      %v203 = vld [vmem:[#allocation2 + $0x178] sm:$0xff]
      %v204 = vld [vmem:[#allocation2 + $0x180] sm:$0xff]
      %v205 = vld [vmem:[#allocation2 + $0x188] sm:$0xff]
      %v206 = vld [vmem:[#allocation2 + $0x190] sm:$0xff]
      %v207 = vld [vmem:[#allocation2 + $0x198] sm:$0xff]
      %v208 = vld [vmem:[#allocation2 + $0x1a0] sm:$0xff]
      %v209 = vld [vmem:[#allocation2 + $0x1a8] sm:$0xff]
      %v210 = vld [vmem:[#allocation2 + $0x1b0] sm:$0xff]
      %v211 = vld [vmem:[#allocation2 + $0x1b8] sm:$0xff]
      %v212 = vld [vmem:[#allocation2 + $0x1c0] sm:$0xff]
      %v213 = vld [vmem:[#allocation2 + $0x1c8] sm:$0xff]
      %v214 = vld [vmem:[#allocation2 + $0x1d0] sm:$0xff]
      %v215 = vld [vmem:[#allocation2 + $0x1d8] sm:$0xff]
      %v216 = vld [vmem:[#allocation2 + $0x1e0] sm:$0xff]
      %v217 = vld [vmem:[#allocation2 + $0x1e8] sm:$0xff]
      %v218 = vld [vmem:[#allocation2 + $0x1f0] sm:$0xff]
      %v219 = vld [vmem:[#allocation2 + $0x1f8] sm:$0xff]
      %v220 = vld [vmem:[#allocation3] sm:$0xff]
      %v221 = vld [vmem:[#allocation3 + $0x8] sm:$0xff]
      %v222 = vld [vmem:[#allocation3 + $0x10] sm:$0xff]
      %v223 = vld [vmem:[#allocation3 + $0x18] sm:$0xff]
      %v224 = vld [vmem:[#allocation3 + $0x20] sm:$0xff]
      %v225 = vld [vmem:[#allocation3 + $0x28] sm:$0xff]
      %v226 = vld [vmem:[#allocation3 + $0x30] sm:$0xff]
      %v227 = vld [vmem:[#allocation3 + $0x38] sm:$0xff]
      %v228 = vld [vmem:[#allocation3 + $0x40] sm:$0xff]
      %v229 = vld [vmem:[#allocation3 + $0x48] sm:$0xff]
      %v230 = vld [vmem:[#allocation3 + $0x50] sm:$0xff]
      %v231 = vld [vmem:[#allocation3 + $0x58] sm:$0xff]
      %v232 = vld [vmem:[#allocation3 + $0x60] sm:$0xff]
      %v233 = vld [vmem:[#allocation3 + $0x68] sm:$0xff]
      %v234 = vld [vmem:[#allocation3 + $0x70] sm:$0xff]
      %v235 = vld [vmem:[#allocation3 + $0x78] sm:$0xff]
      %v236 = vld [vmem:[#allocation3 + $0x80] sm:$0xff]
      %v237 = vld [vmem:[#allocation3 + $0x88] sm:$0xff]
      %v238 = vld [vmem:[#allocation3 + $0x90] sm:$0xff]
      %v239 = vld [vmem:[#allocation3 + $0x98] sm:$0xff]
      %v240 = vld [vmem:[#allocation3 + $0xa0] sm:$0xff]
      %v241 = vld [vmem:[#allocation3 + $0xa8] sm:$0xff]
      %v242 = vld [vmem:[#allocation3 + $0xb0] sm:$0xff]
      %v243 = vld [vmem:[#allocation3 + $0xb8] sm:$0xff]
      %v244 = vld [vmem:[#allocation3 + $0xc0] sm:$0xff]
      %v245 = vld [vmem:[#allocation3 + $0xc8] sm:$0xff]
      %v246 = vld [vmem:[#allocation3 + $0xd0] sm:$0xff]
      %v247 = vld [vmem:[#allocation3 + $0xd8] sm:$0xff]
      %v248 = vld [vmem:[#allocation3 + $0xe0] sm:$0xff]
      %v249 = vld [vmem:[#allocation3 + $0xe8] sm:$0xff]
      %v250 = vld [vmem:[#allocation3 + $0xf0] sm:$0xff]
      %v251 = vld [vmem:[#allocation3 + $0xf8] sm:$0xff]
      %v252 = vld [vmem:[#allocation3 + $0x100] sm:$0xff]
      %v253 = vld [vmem:[#allocation3 + $0x108] sm:$0xff]
      %v254 = vld [vmem:[#allocation3 + $0x110] sm:$0xff]
      %v255 = vld [vmem:[#allocation3 + $0x118] sm:$0xff]
      %v256 = vld [vmem:[#allocation3 + $0x120] sm:$0xff]
      %v257 = vld [vmem:[#allocation3 + $0x128] sm:$0xff]
      %v258 = vld [vmem:[#allocation3 + $0x130] sm:$0xff]
      %v259 = vld [vmem:[#allocation3 + $0x138] sm:$0xff]
      %v260 = vld [vmem:[#allocation3 + $0x140] sm:$0xff]
      %v261 = vld [vmem:[#allocation3 + $0x148] sm:$0xff]
      %v262 = vld [vmem:[#allocation3 + $0x150] sm:$0xff]
      %v263 = vld [vmem:[#allocation3 + $0x158] sm:$0xff]
      %v264 = vld [vmem:[#allocation3 + $0x160] sm:$0xff]
      %v265 = vld [vmem:[#allocation3 + $0x168] sm:$0xff]
      %v266 = vld [vmem:[#allocation3 + $0x170] sm:$0xff]
      %v267 = vld [vmem:[#allocation3 + $0x178] sm:$0xff]
      %v268 = vld [vmem:[#allocation3 + $0x180] sm:$0xff]
      %v269 = vld [vmem:[#allocation3 + $0x188] sm:$0xff]
      %v270 = vld [vmem:[#allocation3 + $0x190] sm:$0xff]
      %v271 = vld [vmem:[#allocation3 + $0x198] sm:$0xff]
      %v272 = vld [vmem:[#allocation3 + $0x1a0] sm:$0xff]
      %v273 = vld [vmem:[#allocation3 + $0x1a8] sm:$0xff]
      %v274 = vld [vmem:[#allocation3 + $0x1b0] sm:$0xff]
      %v275 = vld [vmem:[#allocation3 + $0x1b8] sm:$0xff]
      %v276 = vld [vmem:[#allocation3 + $0x1c0] sm:$0xff]
      %v277 = vld [vmem:[#allocation3 + $0x1c8] sm:$0xff]
      %v278 = vld [vmem:[#allocation3 + $0x1d0] sm:$0xff]
      %v279 = vld [vmem:[#allocation3 + $0x1d8] sm:$0xff]
      %v280 = vld [vmem:[#allocation3 + $0x1e0] sm:$0xff]
      %v281 = vld [vmem:[#allocation3 + $0x1e8] sm:$0xff]
      %v282 = vld [vmem:[#allocation3 + $0x1f0] sm:$0xff]
      %v283 = vld [vmem:[#allocation3 + $0x1f8] sm:$0xff]
      %v284 = vmul.f32 %v156, %v156
      %v285 = vmul.f32 %v157, %v157
      %v286 = vmul.f32 %v158, %v158
      %v287 = vmul.f32 %v159, %v159
      %v288 = vmul.f32 %v160, %v160
      %v289 = vmul.f32 %v161, %v161
      %v290 = vmul.f32 %v162, %v162
      %v291 = vmul.f32 %v163, %v163
      %v292 = vmul.f32 %v164, %v164
      %v293 = vmul.f32 %v165, %v165
      %v294 = vmul.f32 %v166, %v166
      %v295 = vmul.f32 %v167, %v167
      %v296 = vmul.f32 %v168, %v168
      %v297 = vmul.f32 %v169, %v169
      %v298 = vmul.f32 %v170, %v170
      %v299 = vmul.f32 %v171, %v171
      %v300 = vmul.f32 %v172, %v172
      %v301 = vmul.f32 %v173, %v173
      %v302 = vmul.f32 %v174, %v174
      %v303 = vmul.f32 %v175, %v175
      %v304 = vmul.f32 %v176, %v176
      %v305 = vmul.f32 %v177, %v177
      %v306 = vmul.f32 %v178, %v178
      %v307 = vmul.f32 %v179, %v179
      %v308 = vmul.f32 %v180, %v180
      %v309 = vmul.f32 %v181, %v181
      %v310 = vmul.f32 %v182, %v182
      %v311 = vmul.f32 %v183, %v183
      %v312 = vmul.f32 %v184, %v184
      %v313 = vmul.f32 %v185, %v185
      %v314 = vmul.f32 %v186, %v186
      %v315 = vmul.f32 %v187, %v187
      %v316 = vmul.f32 %v188, %v188
      %v317 = vmul.f32 %v189, %v189
      %v318 = vmul.f32 %v190, %v190
      %v319 = vmul.f32 %v191, %v191
      %v320 = vmul.f32 %v192, %v192
      %v321 = vmul.f32 %v193, %v193
      %v322 = vmul.f32 %v194, %v194
      %v323 = vmul.f32 %v195, %v195
      %v324 = vmul.f32 %v196, %v196
      %v325 = vmul.f32 %v197, %v197
      %v326 = vmul.f32 %v198, %v198
      %v327 = vmul.f32 %v199, %v199
      %v328 = vmul.f32 %v200, %v200
      %v329 = vmul.f32 %v201, %v201
      %v330 = vmul.f32 %v202, %v202
      %v331 = vmul.f32 %v203, %v203
      %v332 = vmul.f32 %v204, %v204
      %v333 = vmul.f32 %v205, %v205
      %v334 = vmul.f32 %v206, %v206
      %v335 = vmul.f32 %v207, %v207
      %v336 = vmul.f32 %v208, %v208
      %v337 = vmul.f32 %v209, %v209
      %v338 = vmul.f32 %v210, %v210
      %v339 = vmul.f32 %v211, %v211
      %v340 = vmul.f32 %v212, %v212
      %v341 = vmul.f32 %v213, %v213
      %v342 = vmul.f32 %v214, %v214
      %v343 = vmul.f32 %v215, %v215
      %v344 = vmul.f32 %v216, %v216
      %v345 = vmul.f32 %v217, %v217
      %v346 = vmul.f32 %v218, %v218
      %v347 = vmul.f32 %v219, %v219
      %vm348 = vcmask 261120
      %v349 = vsel %vm348, %v284, 0.0
      %350 = vadd.xlane.f32.xlu0 %v349
      %v351 = vpop.xlane.xlu0 %350
      %v352 = vsel %vm348, %v285, 0.0
      %353 = vadd.xlane.f32.xlu0 %v352
      %v354 = vpop.xlane.xlu0 %353
      %v355 = vsel %vm348, %v286, 0.0
      %356 = vadd.xlane.f32.xlu0 %v355
      %v357 = vpop.xlane.xlu0 %356
      %v358 = vsel %vm348, %v287, 0.0
      %359 = vadd.xlane.f32.xlu0 %v358
      %v360 = vpop.xlane.xlu0 %359
      %v361 = vsel %vm348, %v288, 0.0
      %362 = vadd.xlane.f32.xlu0 %v361
      %v363 = vpop.xlane.xlu0 %362
      %v364 = vsel %vm348, %v289, 0.0
      %365 = vadd.xlane.f32.xlu0 %v364
      %v366 = vpop.xlane.xlu0 %365
      %v367 = vsel %vm348, %v290, 0.0
      %368 = vadd.xlane.f32.xlu0 %v367
      %v369 = vpop.xlane.xlu0 %368
      %v370 = vsel %vm348, %v291, 0.0
      %371 = vadd.xlane.f32.xlu0 %v370
      %v372 = vpop.xlane.xlu0 %371
      %v373 = vsel %vm348, %v292, 0.0
      %374 = vadd.xlane.f32.xlu0 %v373
      %v375 = vpop.xlane.xlu0 %374
      %v376 = vsel %vm348, %v293, 0.0
      %377 = vadd.xlane.f32.xlu0 %v376
      %v378 = vpop.xlane.xlu0 %377
      %v379 = vsel %vm348, %v294, 0.0
      %380 = vadd.xlane.f32.xlu0 %v379
      %v381 = vpop.xlane.xlu0 %380
      %v382 = vsel %vm348, %v295, 0.0
      %383 = vadd.xlane.f32.xlu0 %v382
      %v384 = vpop.xlane.xlu0 %383
      %v385 = vsel %vm348, %v296, 0.0
      %386 = vadd.xlane.f32.xlu0 %v385
      %v387 = vpop.xlane.xlu0 %386
      %v388 = vsel %vm348, %v297, 0.0
      %389 = vadd.xlane.f32.xlu0 %v388
      %v390 = vpop.xlane.xlu0 %389
      %v391 = vsel %vm348, %v298, 0.0
      %392 = vadd.xlane.f32.xlu0 %v391
      %v393 = vpop.xlane.xlu0 %392
      %v394 = vsel %vm348, %v299, 0.0
      %395 = vadd.xlane.f32.xlu0 %v394
      %v396 = vpop.xlane.xlu0 %395
      %v397 = vsel %vm348, %v300, 0.0
      %398 = vadd.xlane.f32.xlu0 %v397
      %v399 = vpop.xlane.xlu0 %398
      %v400 = vsel %vm348, %v301, 0.0
      %401 = vadd.xlane.f32.xlu0 %v400
      %v402 = vpop.xlane.xlu0 %401
      %v403 = vsel %vm348, %v302, 0.0
      %404 = vadd.xlane.f32.xlu0 %v403
      %v405 = vpop.xlane.xlu0 %404
      %v406 = vsel %vm348, %v303, 0.0
      %407 = vadd.xlane.f32.xlu0 %v406
      %v408 = vpop.xlane.xlu0 %407
      %v409 = vsel %vm348, %v304, 0.0
      %410 = vadd.xlane.f32.xlu0 %v409
      %v411 = vpop.xlane.xlu0 %410
      %v412 = vsel %vm348, %v305, 0.0
      %413 = vadd.xlane.f32.xlu0 %v412
      %v414 = vpop.xlane.xlu0 %413
      %v415 = vsel %vm348, %v306, 0.0
      %416 = vadd.xlane.f32.xlu0 %v415
      %v417 = vpop.xlane.xlu0 %416
      %v418 = vsel %vm348, %v307, 0.0
      %419 = vadd.xlane.f32.xlu0 %v418
      %v420 = vpop.xlane.xlu0 %419
      %v421 = vsel %vm348, %v308, 0.0
      %422 = vadd.xlane.f32.xlu0 %v421
      %v423 = vpop.xlane.xlu0 %422
      %v424 = vsel %vm348, %v309, 0.0
      %425 = vadd.xlane.f32.xlu0 %v424
      %v426 = vpop.xlane.xlu0 %425
      %v427 = vsel %vm348, %v310, 0.0
      %428 = vadd.xlane.f32.xlu0 %v427
      %v429 = vpop.xlane.xlu0 %428
      %v430 = vsel %vm348, %v311, 0.0
      %431 = vadd.xlane.f32.xlu0 %v430
      %v432 = vpop.xlane.xlu0 %431
      %v433 = vsel %vm348, %v312, 0.0
      %434 = vadd.xlane.f32.xlu0 %v433
      %v435 = vpop.xlane.xlu0 %434
      %v436 = vsel %vm348, %v313, 0.0
      %437 = vadd.xlane.f32.xlu0 %v436
      %v438 = vpop.xlane.xlu0 %437
      %v439 = vsel %vm348, %v314, 0.0
      %440 = vadd.xlane.f32.xlu0 %v439
      %v441 = vpop.xlane.xlu0 %440
      %v442 = vsel %vm348, %v315, 0.0
      %443 = vadd.xlane.f32.xlu0 %v442
      %v444 = vpop.xlane.xlu0 %443
      %v445 = vsel %vm348, %v316, 0.0
      %446 = vadd.xlane.f32.xlu0 %v445
      %v447 = vpop.xlane.xlu0 %446
      %v448 = vsel %vm348, %v317, 0.0
      %449 = vadd.xlane.f32.xlu0 %v448
      %v450 = vpop.xlane.xlu0 %449
      %v451 = vsel %vm348, %v318, 0.0
      %452 = vadd.xlane.f32.xlu0 %v451
      %v453 = vpop.xlane.xlu0 %452
      %v454 = vsel %vm348, %v319, 0.0
      %455 = vadd.xlane.f32.xlu0 %v454
      %v456 = vpop.xlane.xlu0 %455
      %v457 = vsel %vm348, %v320, 0.0
      %458 = vadd.xlane.f32.xlu0 %v457
      %v459 = vpop.xlane.xlu0 %458
      %v460 = vsel %vm348, %v321, 0.0
      %461 = vadd.xlane.f32.xlu0 %v460
      %v462 = vpop.xlane.xlu0 %461
      %v463 = vsel %vm348, %v322, 0.0
      %464 = vadd.xlane.f32.xlu0 %v463
      %v465 = vpop.xlane.xlu0 %464
      %v466 = vsel %vm348, %v323, 0.0
      %467 = vadd.xlane.f32.xlu0 %v466
      %v468 = vpop.xlane.xlu0 %467
      %v469 = vsel %vm348, %v324, 0.0
      %470 = vadd.xlane.f32.xlu0 %v469
      %v471 = vpop.xlane.xlu0 %470
      %v472 = vsel %vm348, %v325, 0.0
      %473 = vadd.xlane.f32.xlu0 %v472
      %v474 = vpop.xlane.xlu0 %473
      %v475 = vsel %vm348, %v326, 0.0
      %476 = vadd.xlane.f32.xlu0 %v475
      %v477 = vpop.xlane.xlu0 %476
      %v478 = vsel %vm348, %v327, 0.0
      %479 = vadd.xlane.f32.xlu0 %v478
      %v480 = vpop.xlane.xlu0 %479
      %v481 = vsel %vm348, %v328, 0.0
      %482 = vadd.xlane.f32.xlu0 %v481
      %v483 = vpop.xlane.xlu0 %482
      %v484 = vsel %vm348, %v329, 0.0
      %485 = vadd.xlane.f32.xlu0 %v484
      %v486 = vpop.xlane.xlu0 %485
      %v487 = vsel %vm348, %v330, 0.0
      %488 = vadd.xlane.f32.xlu0 %v487
      %v489 = vpop.xlane.xlu0 %488
      %v490 = vsel %vm348, %v331, 0.0
      %491 = vadd.xlane.f32.xlu0 %v490
      %v492 = vpop.xlane.xlu0 %491
      %v493 = vsel %vm348, %v332, 0.0
      %494 = vadd.xlane.f32.xlu0 %v493
      %v495 = vpop.xlane.xlu0 %494
      %v496 = vsel %vm348, %v333, 0.0
      %497 = vadd.xlane.f32.xlu0 %v496
      %v498 = vpop.xlane.xlu0 %497
      %v499 = vsel %vm348, %v334, 0.0
      %500 = vadd.xlane.f32.xlu0 %v499
      %v501 = vpop.xlane.xlu0 %500
      %v502 = vsel %vm348, %v335, 0.0
      %503 = vadd.xlane.f32.xlu0 %v502
      %v504 = vpop.xlane.xlu0 %503
      %v505 = vsel %vm348, %v336, 0.0
      %506 = vadd.xlane.f32.xlu0 %v505
      %v507 = vpop.xlane.xlu0 %506
      %v508 = vsel %vm348, %v337, 0.0
      %509 = vadd.xlane.f32.xlu0 %v508
      %v510 = vpop.xlane.xlu0 %509
      %v511 = vsel %vm348, %v338, 0.0
      %512 = vadd.xlane.f32.xlu0 %v511
      %v513 = vpop.xlane.xlu0 %512
      %v514 = vsel %vm348, %v339, 0.0
      %515 = vadd.xlane.f32.xlu0 %v514
      %v516 = vpop.xlane.xlu0 %515
      %v517 = vsel %vm348, %v340, 0.0
      %518 = vadd.xlane.f32.xlu0 %v517
      %v519 = vpop.xlane.xlu0 %518
      %v520 = vsel %vm348, %v341, 0.0
      %521 = vadd.xlane.f32.xlu0 %v520
      %v522 = vpop.xlane.xlu0 %521
      %v523 = vsel %vm348, %v342, 0.0
      %524 = vadd.xlane.f32.xlu0 %v523
      %v525 = vpop.xlane.xlu0 %524
      %v526 = vsel %vm348, %v343, 0.0
      %527 = vadd.xlane.f32.xlu0 %v526
      %v528 = vpop.xlane.xlu0 %527
      %v529 = vsel %vm348, %v344, 0.0
      %530 = vadd.xlane.f32.xlu0 %v529
      %v531 = vpop.xlane.xlu0 %530
      %v532 = vsel %vm348, %v345, 0.0
      %533 = vadd.xlane.f32.xlu0 %v532
      %v534 = vpop.xlane.xlu0 %533
      %v535 = vsel %vm348, %v346, 0.0
      %536 = vadd.xlane.f32.xlu0 %v535
      %v537 = vpop.xlane.xlu0 %536
      %v538 = vsel %vm348, %v347, 0.0
      %539 = vadd.xlane.f32.xlu0 %v538
      %v540 = vpop.xlane.xlu0 %539
      %v541 = vrsqrt.pop %v351
      %v542 = vmul.f32 %v351, %v541
      %vm543 = vcmp.eq.f32.partialorder %v351, inf
      %v544 = vsel %vm543, %v351, %v542
      %vm545 = vcmp.eq.f32.partialorder %v351, 0.0
      %v546 = vand.u32 %v351, 2147483648
      %v547 = vsel %vm545, %v546, %v544
      %v548 = vrsqrt.pop %v354
      %v549 = vmul.f32 %v354, %v548
      %vm550 = vcmp.eq.f32.partialorder %v354, inf
      %v551 = vsel %vm550, %v354, %v549
      %vm552 = vcmp.eq.f32.partialorder %v354, 0.0
      %v553 = vand.u32 %v354, 2147483648
      %v554 = vsel %vm552, %v553, %v551
      %v555 = vrsqrt.pop %v357
      %v556 = vmul.f32 %v357, %v555
      %vm557 = vcmp.eq.f32.partialorder %v357, inf
      %v558 = vsel %vm557, %v357, %v556
      %vm559 = vcmp.eq.f32.partialorder %v357, 0.0
      %v560 = vand.u32 %v357, 2147483648
      %v561 = vsel %vm559, %v560, %v558
      %v562 = vrsqrt.pop %v360
      %v563 = vmul.f32 %v360, %v562
      %vm564 = vcmp.eq.f32.partialorder %v360, inf
      %v565 = vsel %vm564, %v360, %v563
      %vm566 = vcmp.eq.f32.partialorder %v360, 0.0
      %v567 = vand.u32 %v360, 2147483648
      %v568 = vsel %vm566, %v567, %v565
      %v569 = vrsqrt.pop %v363
      %v570 = vmul.f32 %v363, %v569
      %vm571 = vcmp.eq.f32.partialorder %v363, inf
      %v572 = vsel %vm571, %v363, %v570
      %vm573 = vcmp.eq.f32.partialorder %v363, 0.0
      %v574 = vand.u32 %v363, 2147483648
      %v575 = vsel %vm573, %v574, %v572
      %v576 = vrsqrt.pop %v366
      %v577 = vmul.f32 %v366, %v576
      %vm578 = vcmp.eq.f32.partialorder %v366, inf
      %v579 = vsel %vm578, %v366, %v577
      %vm580 = vcmp.eq.f32.partialorder %v366, 0.0
      %v581 = vand.u32 %v366, 2147483648
      %v582 = vsel %vm580, %v581, %v579
      %v583 = vrsqrt.pop %v369
      %v584 = vmul.f32 %v369, %v583
      %vm585 = vcmp.eq.f32.partialorder %v369, inf
      %v586 = vsel %vm585, %v369, %v584
      %vm587 = vcmp.eq.f32.partialorder %v369, 0.0
      %v588 = vand.u32 %v369, 2147483648
      %v589 = vsel %vm587, %v588, %v586
      %v590 = vrsqrt.pop %v372
      %v591 = vmul.f32 %v372, %v590
      %vm592 = vcmp.eq.f32.partialorder %v372, inf
      %v593 = vsel %vm592, %v372, %v591
      %vm594 = vcmp.eq.f32.partialorder %v372, 0.0
      %v595 = vand.u32 %v372, 2147483648
      %v596 = vsel %vm594, %v595, %v593
      %v597 = vrsqrt.pop %v375
      %v598 = vmul.f32 %v375, %v597
      %vm599 = vcmp.eq.f32.partialorder %v375, inf
      %v600 = vsel %vm599, %v375, %v598
      %vm601 = vcmp.eq.f32.partialorder %v375, 0.0
      %v602 = vand.u32 %v375, 2147483648
      %v603 = vsel %vm601, %v602, %v600
      %v604 = vrsqrt.pop %v378
      %v605 = vmul.f32 %v378, %v604
      %vm606 = vcmp.eq.f32.partialorder %v378, inf
      %v607 = vsel %vm606, %v378, %v605
      %vm608 = vcmp.eq.f32.partialorder %v378, 0.0
      %v609 = vand.u32 %v378, 2147483648
      %v610 = vsel %vm608, %v609, %v607
      %v611 = vrsqrt.pop %v381
      %v612 = vmul.f32 %v381, %v611
      %vm613 = vcmp.eq.f32.partialorder %v381, inf
      %v614 = vsel %vm613, %v381, %v612
      %vm615 = vcmp.eq.f32.partialorder %v381, 0.0
      %v616 = vand.u32 %v381, 2147483648
      %v617 = vsel %vm615, %v616, %v614
      %v618 = vrsqrt.pop %v384
      %v619 = vmul.f32 %v384, %v618
      %vm620 = vcmp.eq.f32.partialorder %v384, inf
      %v621 = vsel %vm620, %v384, %v619
      %vm622 = vcmp.eq.f32.partialorder %v384, 0.0
      %v623 = vand.u32 %v384, 2147483648
      %v624 = vsel %vm622, %v623, %v621
      %v625 = vrsqrt.pop %v387
      %v626 = vmul.f32 %v387, %v625
      %vm627 = vcmp.eq.f32.partialorder %v387, inf
      %v628 = vsel %vm627, %v387, %v626
      %vm629 = vcmp.eq.f32.partialorder %v387, 0.0
      %v630 = vand.u32 %v387, 2147483648
      %v631 = vsel %vm629, %v630, %v628
      %v632 = vrsqrt.pop %v390
      %v633 = vmul.f32 %v390, %v632
      %vm634 = vcmp.eq.f32.partialorder %v390, inf
      %v635 = vsel %vm634, %v390, %v633
      %vm636 = vcmp.eq.f32.partialorder %v390, 0.0
      %v637 = vand.u32 %v390, 2147483648
      %v638 = vsel %vm636, %v637, %v635
      %v639 = vrsqrt.pop %v393
      %v640 = vmul.f32 %v393, %v639
      %vm641 = vcmp.eq.f32.partialorder %v393, inf
      %v642 = vsel %vm641, %v393, %v640
      %vm643 = vcmp.eq.f32.partialorder %v393, 0.0
      %v644 = vand.u32 %v393, 2147483648
      %v645 = vsel %vm643, %v644, %v642
      %v646 = vrsqrt.pop %v396
      %v647 = vmul.f32 %v396, %v646
      %vm648 = vcmp.eq.f32.partialorder %v396, inf
      %v649 = vsel %vm648, %v396, %v647
      %vm650 = vcmp.eq.f32.partialorder %v396, 0.0
      %v651 = vand.u32 %v396, 2147483648
      %v652 = vsel %vm650, %v651, %v649
      %v653 = vrsqrt.pop %v399
      %v654 = vmul.f32 %v399, %v653
      %vm655 = vcmp.eq.f32.partialorder %v399, inf
      %v656 = vsel %vm655, %v399, %v654
      %vm657 = vcmp.eq.f32.partialorder %v399, 0.0
      %v658 = vand.u32 %v399, 2147483648
      %v659 = vsel %vm657, %v658, %v656
      %v660 = vrsqrt.pop %v402
      %v661 = vmul.f32 %v402, %v660
      %vm662 = vcmp.eq.f32.partialorder %v402, inf
      %v663 = vsel %vm662, %v402, %v661
      %vm664 = vcmp.eq.f32.partialorder %v402, 0.0
      %v665 = vand.u32 %v402, 2147483648
      %v666 = vsel %vm664, %v665, %v663
      %v667 = vrsqrt.pop %v405
      %v668 = vmul.f32 %v405, %v667
      %vm669 = vcmp.eq.f32.partialorder %v405, inf
      %v670 = vsel %vm669, %v405, %v668
      %vm671 = vcmp.eq.f32.partialorder %v405, 0.0
      %v672 = vand.u32 %v405, 2147483648
      %v673 = vsel %vm671, %v672, %v670
      %v674 = vrsqrt.pop %v408
      %v675 = vmul.f32 %v408, %v674
      %vm676 = vcmp.eq.f32.partialorder %v408, inf
      %v677 = vsel %vm676, %v408, %v675
      %vm678 = vcmp.eq.f32.partialorder %v408, 0.0
      %v679 = vand.u32 %v408, 2147483648
      %v680 = vsel %vm678, %v679, %v677
      %v681 = vrsqrt.pop %v411
      %v682 = vmul.f32 %v411, %v681
      %vm683 = vcmp.eq.f32.partialorder %v411, inf
      %v684 = vsel %vm683, %v411, %v682
      %vm685 = vcmp.eq.f32.partialorder %v411, 0.0
      %v686 = vand.u32 %v411, 2147483648
      %v687 = vsel %vm685, %v686, %v684
      %v688 = vrsqrt.pop %v414
      %v689 = vmul.f32 %v414, %v688
      %vm690 = vcmp.eq.f32.partialorder %v414, inf
      %v691 = vsel %vm690, %v414, %v689
      %vm692 = vcmp.eq.f32.partialorder %v414, 0.0
      %v693 = vand.u32 %v414, 2147483648
      %v694 = vsel %vm692, %v693, %v691
      %v695 = vrsqrt.pop %v417
      %v696 = vmul.f32 %v417, %v695
      %vm697 = vcmp.eq.f32.partialorder %v417, inf
      %v698 = vsel %vm697, %v417, %v696
      %vm699 = vcmp.eq.f32.partialorder %v417, 0.0
      %v700 = vand.u32 %v417, 2147483648
      %v701 = vsel %vm699, %v700, %v698
      %v702 = vrsqrt.pop %v420
      %v703 = vmul.f32 %v420, %v702
      %vm704 = vcmp.eq.f32.partialorder %v420, inf
      %v705 = vsel %vm704, %v420, %v703
      %vm706 = vcmp.eq.f32.partialorder %v420, 0.0
      %v707 = vand.u32 %v420, 2147483648
      %v708 = vsel %vm706, %v707, %v705
      %v709 = vrsqrt.pop %v423
      %v710 = vmul.f32 %v423, %v709
      %vm711 = vcmp.eq.f32.partialorder %v423, inf
      %v712 = vsel %vm711, %v423, %v710
      %vm713 = vcmp.eq.f32.partialorder %v423, 0.0
      %v714 = vand.u32 %v423, 2147483648
      %v715 = vsel %vm713, %v714, %v712
      %v716 = vrsqrt.pop %v426
      %v717 = vmul.f32 %v426, %v716
      %vm718 = vcmp.eq.f32.partialorder %v426, inf
      %v719 = vsel %vm718, %v426, %v717
      %vm720 = vcmp.eq.f32.partialorder %v426, 0.0
      %v721 = vand.u32 %v426, 2147483648
      %v722 = vsel %vm720, %v721, %v719
      %v723 = vrsqrt.pop %v429
      %v724 = vmul.f32 %v429, %v723
      %vm725 = vcmp.eq.f32.partialorder %v429, inf
      %v726 = vsel %vm725, %v429, %v724
      %vm727 = vcmp.eq.f32.partialorder %v429, 0.0
      %v728 = vand.u32 %v429, 2147483648
      %v729 = vsel %vm727, %v728, %v726
      %v730 = vrsqrt.pop %v432
      %v731 = vmul.f32 %v432, %v730
      %vm732 = vcmp.eq.f32.partialorder %v432, inf
      %v733 = vsel %vm732, %v432, %v731
      %vm734 = vcmp.eq.f32.partialorder %v432, 0.0
      %v735 = vand.u32 %v432, 2147483648
      %v736 = vsel %vm734, %v735, %v733
      %v737 = vrsqrt.pop %v435
      %v738 = vmul.f32 %v435, %v737
      %vm739 = vcmp.eq.f32.partialorder %v435, inf
      %v740 = vsel %vm739, %v435, %v738
      %vm741 = vcmp.eq.f32.partialorder %v435, 0.0
      %v742 = vand.u32 %v435, 2147483648
      %v743 = vsel %vm741, %v742, %v740
      %v744 = vrsqrt.pop %v438
      %v745 = vmul.f32 %v438, %v744
      %vm746 = vcmp.eq.f32.partialorder %v438, inf
      %v747 = vsel %vm746, %v438, %v745
      %vm748 = vcmp.eq.f32.partialorder %v438, 0.0
      %v749 = vand.u32 %v438, 2147483648
      %v750 = vsel %vm748, %v749, %v747
      %v751 = vrsqrt.pop %v441
      %v752 = vmul.f32 %v441, %v751
      %vm753 = vcmp.eq.f32.partialorder %v441, inf
      %v754 = vsel %vm753, %v441, %v752
      %vm755 = vcmp.eq.f32.partialorder %v441, 0.0
      %v756 = vand.u32 %v441, 2147483648
      %v757 = vsel %vm755, %v756, %v754
      %v758 = vrsqrt.pop %v444
      %v759 = vmul.f32 %v444, %v758
      %vm760 = vcmp.eq.f32.partialorder %v444, inf
      %v761 = vsel %vm760, %v444, %v759
      %vm762 = vcmp.eq.f32.partialorder %v444, 0.0
      %v763 = vand.u32 %v444, 2147483648
      %v764 = vsel %vm762, %v763, %v761
      %v765 = vrsqrt.pop %v447
      %v766 = vmul.f32 %v447, %v765
      %vm767 = vcmp.eq.f32.partialorder %v447, inf
      %v768 = vsel %vm767, %v447, %v766
      %vm769 = vcmp.eq.f32.partialorder %v447, 0.0
      %v770 = vand.u32 %v447, 2147483648
      %v771 = vsel %vm769, %v770, %v768
      %v772 = vrsqrt.pop %v450
      %v773 = vmul.f32 %v450, %v772
      %vm774 = vcmp.eq.f32.partialorder %v450, inf
      %v775 = vsel %vm774, %v450, %v773
      %vm776 = vcmp.eq.f32.partialorder %v450, 0.0
      %v777 = vand.u32 %v450, 2147483648
      %v778 = vsel %vm776, %v777, %v775
      %v779 = vrsqrt.pop %v453
      %v780 = vmul.f32 %v453, %v779
      %vm781 = vcmp.eq.f32.partialorder %v453, inf
      %v782 = vsel %vm781, %v453, %v780
      %vm783 = vcmp.eq.f32.partialorder %v453, 0.0
      %v784 = vand.u32 %v453, 2147483648
      %v785 = vsel %vm783, %v784, %v782
      %v786 = vrsqrt.pop %v456
      %v787 = vmul.f32 %v456, %v786
      %vm788 = vcmp.eq.f32.partialorder %v456, inf
      %v789 = vsel %vm788, %v456, %v787
      %vm790 = vcmp.eq.f32.partialorder %v456, 0.0
      %v791 = vand.u32 %v456, 2147483648
      %v792 = vsel %vm790, %v791, %v789
      %v793 = vrsqrt.pop %v459
      %v794 = vmul.f32 %v459, %v793
      %vm795 = vcmp.eq.f32.partialorder %v459, inf
      %v796 = vsel %vm795, %v459, %v794
      %vm797 = vcmp.eq.f32.partialorder %v459, 0.0
      %v798 = vand.u32 %v459, 2147483648
      %v799 = vsel %vm797, %v798, %v796
      %v800 = vrsqrt.pop %v462
      %v801 = vmul.f32 %v462, %v800
      %vm802 = vcmp.eq.f32.partialorder %v462, inf
      %v803 = vsel %vm802, %v462, %v801
      %vm804 = vcmp.eq.f32.partialorder %v462, 0.0
      %v805 = vand.u32 %v462, 2147483648
      %v806 = vsel %vm804, %v805, %v803
      %v807 = vrsqrt.pop %v465
      %v808 = vmul.f32 %v465, %v807
      %vm809 = vcmp.eq.f32.partialorder %v465, inf
      %v810 = vsel %vm809, %v465, %v808
      %vm811 = vcmp.eq.f32.partialorder %v465, 0.0
      %v812 = vand.u32 %v465, 2147483648
      %v813 = vsel %vm811, %v812, %v810
      %v814 = vrsqrt.pop %v468
      %v815 = vmul.f32 %v468, %v814
      %vm816 = vcmp.eq.f32.partialorder %v468, inf
      %v817 = vsel %vm816, %v468, %v815
      %vm818 = vcmp.eq.f32.partialorder %v468, 0.0
      %v819 = vand.u32 %v468, 2147483648
      %v820 = vsel %vm818, %v819, %v817
      %v821 = vrsqrt.pop %v471
      %v822 = vmul.f32 %v471, %v821
      %vm823 = vcmp.eq.f32.partialorder %v471, inf
      %v824 = vsel %vm823, %v471, %v822
      %vm825 = vcmp.eq.f32.partialorder %v471, 0.0
      %v826 = vand.u32 %v471, 2147483648
      %v827 = vsel %vm825, %v826, %v824
      %v828 = vrsqrt.pop %v474
      %v829 = vmul.f32 %v474, %v828
      %vm830 = vcmp.eq.f32.partialorder %v474, inf
      %v831 = vsel %vm830, %v474, %v829
      %vm832 = vcmp.eq.f32.partialorder %v474, 0.0
      %v833 = vand.u32 %v474, 2147483648
      %v834 = vsel %vm832, %v833, %v831
      %v835 = vrsqrt.pop %v477
      %v836 = vmul.f32 %v477, %v835
      %vm837 = vcmp.eq.f32.partialorder %v477, inf
      %v838 = vsel %vm837, %v477, %v836
      %vm839 = vcmp.eq.f32.partialorder %v477, 0.0
      %v840 = vand.u32 %v477, 2147483648
      %v841 = vsel %vm839, %v840, %v838
      %v842 = vrsqrt.pop %v480
      %v843 = vmul.f32 %v480, %v842
      %vm844 = vcmp.eq.f32.partialorder %v480, inf
      %v845 = vsel %vm844, %v480, %v843
      %vm846 = vcmp.eq.f32.partialorder %v480, 0.0
      %v847 = vand.u32 %v480, 2147483648
      %v848 = vsel %vm846, %v847, %v845
      %v849 = vrsqrt.pop %v483
      %v850 = vmul.f32 %v483, %v849
      %vm851 = vcmp.eq.f32.partialorder %v483, inf
      %v852 = vsel %vm851, %v483, %v850
      %vm853 = vcmp.eq.f32.partialorder %v483, 0.0
      %v854 = vand.u32 %v483, 2147483648
      %v855 = vsel %vm853, %v854, %v852
      %v856 = vrsqrt.pop %v486
      %v857 = vmul.f32 %v486, %v856
      %vm858 = vcmp.eq.f32.partialorder %v486, inf
      %v859 = vsel %vm858, %v486, %v857
      %vm860 = vcmp.eq.f32.partialorder %v486, 0.0
      %v861 = vand.u32 %v486, 2147483648
      %v862 = vsel %vm860, %v861, %v859
      %v863 = vrsqrt.pop %v489
      %v864 = vmul.f32 %v489, %v863
      %vm865 = vcmp.eq.f32.partialorder %v489, inf
      %v866 = vsel %vm865, %v489, %v864
      %vm867 = vcmp.eq.f32.partialorder %v489, 0.0
      %v868 = vand.u32 %v489, 2147483648
      %v869 = vsel %vm867, %v868, %v866
      %v870 = vrsqrt.pop %v492
      %v871 = vmul.f32 %v492, %v870
      %vm872 = vcmp.eq.f32.partialorder %v492, inf
      %v873 = vsel %vm872, %v492, %v871
      %vm874 = vcmp.eq.f32.partialorder %v492, 0.0
      %v875 = vand.u32 %v492, 2147483648
      %v876 = vsel %vm874, %v875, %v873
      %v877 = vrsqrt.pop %v495
      %v878 = vmul.f32 %v495, %v877
      %vm879 = vcmp.eq.f32.partialorder %v495, inf
      %v880 = vsel %vm879, %v495, %v878
      %vm881 = vcmp.eq.f32.partialorder %v495, 0.0
      %v882 = vand.u32 %v495, 2147483648
      %v883 = vsel %vm881, %v882, %v880
      %v884 = vrsqrt.pop %v498
      %v885 = vmul.f32 %v498, %v884
      %vm886 = vcmp.eq.f32.partialorder %v498, inf
      %v887 = vsel %vm886, %v498, %v885
      %vm888 = vcmp.eq.f32.partialorder %v498, 0.0
      %v889 = vand.u32 %v498, 2147483648
      %v890 = vsel %vm888, %v889, %v887
      %v891 = vrsqrt.pop %v501
      %v892 = vmul.f32 %v501, %v891
      %vm893 = vcmp.eq.f32.partialorder %v501, inf
      %v894 = vsel %vm893, %v501, %v892
      %vm895 = vcmp.eq.f32.partialorder %v501, 0.0
      %v896 = vand.u32 %v501, 2147483648
      %v897 = vsel %vm895, %v896, %v894
      %v898 = vrsqrt.pop %v504
      %v899 = vmul.f32 %v504, %v898
      %vm900 = vcmp.eq.f32.partialorder %v504, inf
      %v901 = vsel %vm900, %v504, %v899
      %vm902 = vcmp.eq.f32.partialorder %v504, 0.0
      %v903 = vand.u32 %v504, 2147483648
      %v904 = vsel %vm902, %v903, %v901
      %v905 = vrsqrt.pop %v507
      %v906 = vmul.f32 %v507, %v905
      %vm907 = vcmp.eq.f32.partialorder %v507, inf
      %v908 = vsel %vm907, %v507, %v906
      %vm909 = vcmp.eq.f32.partialorder %v507, 0.0
      %v910 = vand.u32 %v507, 2147483648
      %v911 = vsel %vm909, %v910, %v908
      %v912 = vrsqrt.pop %v510
      %v913 = vmul.f32 %v510, %v912
      %vm914 = vcmp.eq.f32.partialorder %v510, inf
      %v915 = vsel %vm914, %v510, %v913
      %vm916 = vcmp.eq.f32.partialorder %v510, 0.0
      %v917 = vand.u32 %v510, 2147483648
      %v918 = vsel %vm916, %v917, %v915
      %v919 = vrsqrt.pop %v513
      %v920 = vmul.f32 %v513, %v919
      %vm921 = vcmp.eq.f32.partialorder %v513, inf
      %v922 = vsel %vm921, %v513, %v920
      %vm923 = vcmp.eq.f32.partialorder %v513, 0.0
      %v924 = vand.u32 %v513, 2147483648
      %v925 = vsel %vm923, %v924, %v922
      %v926 = vrsqrt.pop %v516
      %v927 = vmul.f32 %v516, %v926
      %vm928 = vcmp.eq.f32.partialorder %v516, inf
      %v929 = vsel %vm928, %v516, %v927
      %vm930 = vcmp.eq.f32.partialorder %v516, 0.0
      %v931 = vand.u32 %v516, 2147483648
      %v932 = vsel %vm930, %v931, %v929
      %v933 = vrsqrt.pop %v519
      %v934 = vmul.f32 %v519, %v933
      %vm935 = vcmp.eq.f32.partialorder %v519, inf
      %v936 = vsel %vm935, %v519, %v934
      %vm937 = vcmp.eq.f32.partialorder %v519, 0.0
      %v938 = vand.u32 %v519, 2147483648
      %v939 = vsel %vm937, %v938, %v936
      %v940 = vrsqrt.pop %v522
      %v941 = vmul.f32 %v522, %v940
      %vm942 = vcmp.eq.f32.partialorder %v522, inf
      %v943 = vsel %vm942, %v522, %v941
      %vm944 = vcmp.eq.f32.partialorder %v522, 0.0
      %v945 = vand.u32 %v522, 2147483648
      %v946 = vsel %vm944, %v945, %v943
      %v947 = vrsqrt.pop %v525
      %v948 = vmul.f32 %v525, %v947
      %vm949 = vcmp.eq.f32.partialorder %v525, inf
      %v950 = vsel %vm949, %v525, %v948
      %vm951 = vcmp.eq.f32.partialorder %v525, 0.0
      %v952 = vand.u32 %v525, 2147483648
      %v953 = vsel %vm951, %v952, %v950
      %v954 = vrsqrt.pop %v528
      %v955 = vmul.f32 %v528, %v954
      %vm956 = vcmp.eq.f32.partialorder %v528, inf
      %v957 = vsel %vm956, %v528, %v955
      %vm958 = vcmp.eq.f32.partialorder %v528, 0.0
      %v959 = vand.u32 %v528, 2147483648
      %v960 = vsel %vm958, %v959, %v957
      %v961 = vrsqrt.pop %v531
      %v962 = vmul.f32 %v531, %v961
      %vm963 = vcmp.eq.f32.partialorder %v531, inf
      %v964 = vsel %vm963, %v531, %v962
      %vm965 = vcmp.eq.f32.partialorder %v531, 0.0
      %v966 = vand.u32 %v531, 2147483648
      %v967 = vsel %vm965, %v966, %v964
      %v968 = vrsqrt.pop %v534
      %v969 = vmul.f32 %v534, %v968
      %vm970 = vcmp.eq.f32.partialorder %v534, inf
      %v971 = vsel %vm970, %v534, %v969
      %vm972 = vcmp.eq.f32.partialorder %v534, 0.0
      %v973 = vand.u32 %v534, 2147483648
      %v974 = vsel %vm972, %v973, %v971
      %v975 = vrsqrt.pop %v537
      %v976 = vmul.f32 %v537, %v975
      %vm977 = vcmp.eq.f32.partialorder %v537, inf
      %v978 = vsel %vm977, %v537, %v976
      %vm979 = vcmp.eq.f32.partialorder %v537, 0.0
      %v980 = vand.u32 %v537, 2147483648
      %v981 = vsel %vm979, %v980, %v978
      %v982 = vrsqrt.pop %v540
      %v983 = vmul.f32 %v540, %v982
      %vm984 = vcmp.eq.f32.partialorder %v540, inf
      %v985 = vsel %vm984, %v540, %v983
      %vm986 = vcmp.eq.f32.partialorder %v540, 0.0
      %v987 = vand.u32 %v540, 2147483648
      %v988 = vsel %vm986, %v987, %v985
      %v989 = vmul.f32 %v220, %v220
      %v990 = vmul.f32 %v221, %v221
      %v991 = vmul.f32 %v222, %v222
      %v992 = vmul.f32 %v223, %v223
      %v993 = vmul.f32 %v224, %v224
      %v994 = vmul.f32 %v225, %v225
      %v995 = vmul.f32 %v226, %v226
      %v996 = vmul.f32 %v227, %v227
      %v997 = vmul.f32 %v228, %v228
      %v998 = vmul.f32 %v229, %v229
      %v999 = vmul.f32 %v230, %v230
      %v1000 = vmul.f32 %v231, %v231
      %v1001 = vmul.f32 %v232, %v232
      %v1002 = vmul.f32 %v233, %v233
      %v1003 = vmul.f32 %v234, %v234
      %v1004 = vmul.f32 %v235, %v235
      %v1005 = vmul.f32 %v236, %v236
      %v1006 = vmul.f32 %v237, %v237
      %v1007 = vmul.f32 %v238, %v238
      %v1008 = vmul.f32 %v239, %v239
      %v1009 = vmul.f32 %v240, %v240
      %v1010 = vmul.f32 %v241, %v241
      %v1011 = vmul.f32 %v242, %v242
      %v1012 = vmul.f32 %v243, %v243
      %v1013 = vmul.f32 %v244, %v244
      %v1014 = vmul.f32 %v245, %v245
      %v1015 = vmul.f32 %v246, %v246
      %v1016 = vmul.f32 %v247, %v247
      %v1017 = vmul.f32 %v248, %v248
      %v1018 = vmul.f32 %v249, %v249
      %v1019 = vmul.f32 %v250, %v250
      %v1020 = vmul.f32 %v251, %v251
      %v1021 = vmul.f32 %v252, %v252
      %v1022 = vmul.f32 %v253, %v253
      %v1023 = vmul.f32 %v254, %v254
      %v1024 = vmul.f32 %v255, %v255
      %v1025 = vmul.f32 %v256, %v256
      %v1026 = vmul.f32 %v257, %v257
      %v1027 = vmul.f32 %v258, %v258
      %v1028 = vmul.f32 %v259, %v259
      %v1029 = vmul.f32 %v260, %v260
      %v1030 = vmul.f32 %v261, %v261
      %v1031 = vmul.f32 %v262, %v262
      %v1032 = vmul.f32 %v263, %v263
      %v1033 = vmul.f32 %v264, %v264
      %v1034 = vmul.f32 %v265, %v265
      %v1035 = vmul.f32 %v266, %v266
      %v1036 = vmul.f32 %v267, %v267
      %v1037 = vmul.f32 %v268, %v268
      %v1038 = vmul.f32 %v269, %v269
      %v1039 = vmul.f32 %v270, %v270
      %v1040 = vmul.f32 %v271, %v271
      %v1041 = vmul.f32 %v272, %v272
      %v1042 = vmul.f32 %v273, %v273
      %v1043 = vmul.f32 %v274, %v274
      %v1044 = vmul.f32 %v275, %v275
      %v1045 = vmul.f32 %v276, %v276
      %v1046 = vmul.f32 %v277, %v277
      %v1047 = vmul.f32 %v278, %v278
      %v1048 = vmul.f32 %v279, %v279
      %v1049 = vmul.f32 %v280, %v280
      %v1050 = vmul.f32 %v281, %v281
      %v1051 = vmul.f32 %v282, %v282
      %v1052 = vmul.f32 %v283, %v283
      %v1053 = vsel %vm348, %v989, 0.0
      %1054 = vadd.xlane.f32.xlu0 %v1053
      %v1055 = vpop.xlane.xlu0 %1054
      %v1056 = vsel %vm348, %v990, 0.0
      %1057 = vadd.xlane.f32.xlu0 %v1056
      %v1058 = vpop.xlane.xlu0 %1057
      %v1059 = vsel %vm348, %v991, 0.0
      %1060 = vadd.xlane.f32.xlu0 %v1059
      %v1061 = vpop.xlane.xlu0 %1060
      %v1062 = vsel %vm348, %v992, 0.0
      %1063 = vadd.xlane.f32.xlu0 %v1062
      %v1064 = vpop.xlane.xlu0 %1063
      %v1065 = vsel %vm348, %v993, 0.0
      %1066 = vadd.xlane.f32.xlu0 %v1065
      %v1067 = vpop.xlane.xlu0 %1066
      %v1068 = vsel %vm348, %v994, 0.0
      %1069 = vadd.xlane.f32.xlu0 %v1068
      %v1070 = vpop.xlane.xlu0 %1069
      %v1071 = vsel %vm348, %v995, 0.0
      %1072 = vadd.xlane.f32.xlu0 %v1071
      %v1073 = vpop.xlane.xlu0 %1072
      %v1074 = vsel %vm348, %v996, 0.0
      %1075 = vadd.xlane.f32.xlu0 %v1074
      %v1076 = vpop.xlane.xlu0 %1075
      %v1077 = vsel %vm348, %v997, 0.0
      %1078 = vadd.xlane.f32.xlu0 %v1077
      %v1079 = vpop.xlane.xlu0 %1078
      %v1080 = vsel %vm348, %v998, 0.0
      %1081 = vadd.xlane.f32.xlu0 %v1080
      %v1082 = vpop.xlane.xlu0 %1081
      %v1083 = vsel %vm348, %v999, 0.0
      %1084 = vadd.xlane.f32.xlu0 %v1083
      %v1085 = vpop.xlane.xlu0 %1084
      %v1086 = vsel %vm348, %v1000, 0.0
      %1087 = vadd.xlane.f32.xlu0 %v1086
      %v1088 = vpop.xlane.xlu0 %1087
      %v1089 = vsel %vm348, %v1001, 0.0
      %1090 = vadd.xlane.f32.xlu0 %v1089
      %v1091 = vpop.xlane.xlu0 %1090
      %v1092 = vsel %vm348, %v1002, 0.0
      %1093 = vadd.xlane.f32.xlu0 %v1092
      %v1094 = vpop.xlane.xlu0 %1093
      %v1095 = vsel %vm348, %v1003, 0.0
      %1096 = vadd.xlane.f32.xlu0 %v1095
      %v1097 = vpop.xlane.xlu0 %1096
      %v1098 = vsel %vm348, %v1004, 0.0
      %1099 = vadd.xlane.f32.xlu0 %v1098
      %v1100 = vpop.xlane.xlu0 %1099
      %v1101 = vsel %vm348, %v1005, 0.0
      %1102 = vadd.xlane.f32.xlu0 %v1101
      %v1103 = vpop.xlane.xlu0 %1102
      %v1104 = vsel %vm348, %v1006, 0.0
      %1105 = vadd.xlane.f32.xlu0 %v1104
      %v1106 = vpop.xlane.xlu0 %1105
      %v1107 = vsel %vm348, %v1007, 0.0
      %1108 = vadd.xlane.f32.xlu0 %v1107
      %v1109 = vpop.xlane.xlu0 %1108
      %v1110 = vsel %vm348, %v1008, 0.0
      %1111 = vadd.xlane.f32.xlu0 %v1110
      %v1112 = vpop.xlane.xlu0 %1111
      %v1113 = vsel %vm348, %v1009, 0.0
      %1114 = vadd.xlane.f32.xlu0 %v1113
      %v1115 = vpop.xlane.xlu0 %1114
      %v1116 = vsel %vm348, %v1010, 0.0
      %1117 = vadd.xlane.f32.xlu0 %v1116
      %v1118 = vpop.xlane.xlu0 %1117
      %v1119 = vsel %vm348, %v1011, 0.0
      %1120 = vadd.xlane.f32.xlu0 %v1119
      %v1121 = vpop.xlane.xlu0 %1120
      %v1122 = vsel %vm348, %v1012, 0.0
      %1123 = vadd.xlane.f32.xlu0 %v1122
      %v1124 = vpop.xlane.xlu0 %1123
      %v1125 = vsel %vm348, %v1013, 0.0
      %1126 = vadd.xlane.f32.xlu0 %v1125
      %v1127 = vpop.xlane.xlu0 %1126
      %v1128 = vsel %vm348, %v1014, 0.0
      %1129 = vadd.xlane.f32.xlu0 %v1128
      %v1130 = vpop.xlane.xlu0 %1129
      %v1131 = vsel %vm348, %v1015, 0.0
      %1132 = vadd.xlane.f32.xlu0 %v1131
      %v1133 = vpop.xlane.xlu0 %1132
      %v1134 = vsel %vm348, %v1016, 0.0
      %1135 = vadd.xlane.f32.xlu0 %v1134
      %v1136 = vpop.xlane.xlu0 %1135
      %v1137 = vsel %vm348, %v1017, 0.0
      %1138 = vadd.xlane.f32.xlu0 %v1137
      %v1139 = vpop.xlane.xlu0 %1138
      %v1140 = vsel %vm348, %v1018, 0.0
      %1141 = vadd.xlane.f32.xlu0 %v1140
      %v1142 = vpop.xlane.xlu0 %1141
      %v1143 = vsel %vm348, %v1019, 0.0
      %1144 = vadd.xlane.f32.xlu0 %v1143
      %v1145 = vpop.xlane.xlu0 %1144
      %v1146 = vsel %vm348, %v1020, 0.0
      %1147 = vadd.xlane.f32.xlu0 %v1146
      %v1148 = vpop.xlane.xlu0 %1147
      %v1149 = vsel %vm348, %v1021, 0.0
      %1150 = vadd.xlane.f32.xlu0 %v1149
      %v1151 = vpop.xlane.xlu0 %1150
      %v1152 = vsel %vm348, %v1022, 0.0
      %1153 = vadd.xlane.f32.xlu0 %v1152
      %v1154 = vpop.xlane.xlu0 %1153
      %v1155 = vsel %vm348, %v1023, 0.0
      %1156 = vadd.xlane.f32.xlu0 %v1155
      %v1157 = vpop.xlane.xlu0 %1156
      %v1158 = vsel %vm348, %v1024, 0.0
      %1159 = vadd.xlane.f32.xlu0 %v1158
      %v1160 = vpop.xlane.xlu0 %1159
      %v1161 = vsel %vm348, %v1025, 0.0
      %1162 = vadd.xlane.f32.xlu0 %v1161
      %v1163 = vpop.xlane.xlu0 %1162
      %v1164 = vsel %vm348, %v1026, 0.0
      %1165 = vadd.xlane.f32.xlu0 %v1164
      %v1166 = vpop.xlane.xlu0 %1165
      %v1167 = vsel %vm348, %v1027, 0.0
      %1168 = vadd.xlane.f32.xlu0 %v1167
      %v1169 = vpop.xlane.xlu0 %1168
      %v1170 = vsel %vm348, %v1028, 0.0
      %1171 = vadd.xlane.f32.xlu0 %v1170
      %v1172 = vpop.xlane.xlu0 %1171
      %v1173 = vsel %vm348, %v1029, 0.0
      %1174 = vadd.xlane.f32.xlu0 %v1173
      %v1175 = vpop.xlane.xlu0 %1174
      %v1176 = vsel %vm348, %v1030, 0.0
      %1177 = vadd.xlane.f32.xlu0 %v1176
      %v1178 = vpop.xlane.xlu0 %1177
      %v1179 = vsel %vm348, %v1031, 0.0
      %1180 = vadd.xlane.f32.xlu0 %v1179
      %v1181 = vpop.xlane.xlu0 %1180
      %v1182 = vsel %vm348, %v1032, 0.0
      %1183 = vadd.xlane.f32.xlu0 %v1182
      %v1184 = vpop.xlane.xlu0 %1183
      %v1185 = vsel %vm348, %v1033, 0.0
      %1186 = vadd.xlane.f32.xlu0 %v1185
      %v1187 = vpop.xlane.xlu0 %1186
      %v1188 = vsel %vm348, %v1034, 0.0
      %1189 = vadd.xlane.f32.xlu0 %v1188
      %v1190 = vpop.xlane.xlu0 %1189
      %v1191 = vsel %vm348, %v1035, 0.0
      %1192 = vadd.xlane.f32.xlu0 %v1191
      %v1193 = vpop.xlane.xlu0 %1192
      %v1194 = vsel %vm348, %v1036, 0.0
      %1195 = vadd.xlane.f32.xlu0 %v1194
      %v1196 = vpop.xlane.xlu0 %1195
      %v1197 = vsel %vm348, %v1037, 0.0
      %1198 = vadd.xlane.f32.xlu0 %v1197
      %v1199 = vpop.xlane.xlu0 %1198
      %v1200 = vsel %vm348, %v1038, 0.0
      %1201 = vadd.xlane.f32.xlu0 %v1200
      %v1202 = vpop.xlane.xlu0 %1201
      %v1203 = vsel %vm348, %v1039, 0.0
      %1204 = vadd.xlane.f32.xlu0 %v1203
      %v1205 = vpop.xlane.xlu0 %1204
      %v1206 = vsel %vm348, %v1040, 0.0
      %1207 = vadd.xlane.f32.xlu0 %v1206
      %v1208 = vpop.xlane.xlu0 %1207
      %v1209 = vsel %vm348, %v1041, 0.0
      %1210 = vadd.xlane.f32.xlu0 %v1209
      %v1211 = vpop.xlane.xlu0 %1210
      %v1212 = vsel %vm348, %v1042, 0.0
      %1213 = vadd.xlane.f32.xlu0 %v1212
      %v1214 = vpop.xlane.xlu0 %1213
      %v1215 = vsel %vm348, %v1043, 0.0
      %1216 = vadd.xlane.f32.xlu0 %v1215
      %v1217 = vpop.xlane.xlu0 %1216
      %v1218 = vsel %vm348, %v1044, 0.0
      %1219 = vadd.xlane.f32.xlu0 %v1218
      %v1220 = vpop.xlane.xlu0 %1219
      %v1221 = vsel %vm348, %v1045, 0.0
      %1222 = vadd.xlane.f32.xlu0 %v1221
      %v1223 = vpop.xlane.xlu0 %1222
      %v1224 = vsel %vm348, %v1046, 0.0
      %1225 = vadd.xlane.f32.xlu0 %v1224
      %v1226 = vpop.xlane.xlu0 %1225
      %v1227 = vsel %vm348, %v1047, 0.0
      %1228 = vadd.xlane.f32.xlu0 %v1227
      %v1229 = vpop.xlane.xlu0 %1228
      %v1230 = vsel %vm348, %v1048, 0.0
      %1231 = vadd.xlane.f32.xlu0 %v1230
      %v1232 = vpop.xlane.xlu0 %1231
      %v1233 = vsel %vm348, %v1049, 0.0
      %1234 = vadd.xlane.f32.xlu0 %v1233
      %v1235 = vpop.xlane.xlu0 %1234
      %v1236 = vsel %vm348, %v1050, 0.0
      %1237 = vadd.xlane.f32.xlu0 %v1236
      %v1238 = vpop.xlane.xlu0 %1237
      %v1239 = vsel %vm348, %v1051, 0.0
      %1240 = vadd.xlane.f32.xlu0 %v1239
      %v1241 = vpop.xlane.xlu0 %1240
      %v1242 = vsel %vm348, %v1052, 0.0
      %1243 = vadd.xlane.f32.xlu0 %v1242
      %v1244 = vpop.xlane.xlu0 %1243
      %v1245 = vrsqrt.pop %v1055
      %v1246 = vmul.f32 %v1055, %v1245
      %vm1247 = vcmp.eq.f32.partialorder %v1055, inf
      %v1248 = vsel %vm1247, %v1055, %v1246
      %vm1249 = vcmp.eq.f32.partialorder %v1055, 0.0
      %v1250 = vand.u32 %v1055, 2147483648
      %v1251 = vsel %vm1249, %v1250, %v1248
      %v1252 = vrsqrt.pop %v1058
      %v1253 = vmul.f32 %v1058, %v1252
      %vm1254 = vcmp.eq.f32.partialorder %v1058, inf
      %v1255 = vsel %vm1254, %v1058, %v1253
      %vm1256 = vcmp.eq.f32.partialorder %v1058, 0.0
      %v1257 = vand.u32 %v1058, 2147483648
      %v1258 = vsel %vm1256, %v1257, %v1255
      %v1259 = vrsqrt.pop %v1061
      %v1260 = vmul.f32 %v1061, %v1259
      %vm1261 = vcmp.eq.f32.partialorder %v1061, inf
      %v1262 = vsel %vm1261, %v1061, %v1260
      %vm1263 = vcmp.eq.f32.partialorder %v1061, 0.0
      %v1264 = vand.u32 %v1061, 2147483648
      %v1265 = vsel %vm1263, %v1264, %v1262
      %v1266 = vrsqrt.pop %v1064
      %v1267 = vmul.f32 %v1064, %v1266
      %vm1268 = vcmp.eq.f32.partialorder %v1064, inf
      %v1269 = vsel %vm1268, %v1064, %v1267
      %vm1270 = vcmp.eq.f32.partialorder %v1064, 0.0
      %v1271 = vand.u32 %v1064, 2147483648
      %v1272 = vsel %vm1270, %v1271, %v1269
      %v1273 = vrsqrt.pop %v1067
      %v1274 = vmul.f32 %v1067, %v1273
      %vm1275 = vcmp.eq.f32.partialorder %v1067, inf
      %v1276 = vsel %vm1275, %v1067, %v1274
      %vm1277 = vcmp.eq.f32.partialorder %v1067, 0.0
      %v1278 = vand.u32 %v1067, 2147483648
      %v1279 = vsel %vm1277, %v1278, %v1276
      %v1280 = vrsqrt.pop %v1070
      %v1281 = vmul.f32 %v1070, %v1280
      %vm1282 = vcmp.eq.f32.partialorder %v1070, inf
      %v1283 = vsel %vm1282, %v1070, %v1281
      %vm1284 = vcmp.eq.f32.partialorder %v1070, 0.0
      %v1285 = vand.u32 %v1070, 2147483648
      %v1286 = vsel %vm1284, %v1285, %v1283
      %v1287 = vrsqrt.pop %v1073
      %v1288 = vmul.f32 %v1073, %v1287
      %vm1289 = vcmp.eq.f32.partialorder %v1073, inf
      %v1290 = vsel %vm1289, %v1073, %v1288
      %vm1291 = vcmp.eq.f32.partialorder %v1073, 0.0
      %v1292 = vand.u32 %v1073, 2147483648
      %v1293 = vsel %vm1291, %v1292, %v1290
      %v1294 = vrsqrt.pop %v1076
      %v1295 = vmul.f32 %v1076, %v1294
      %vm1296 = vcmp.eq.f32.partialorder %v1076, inf
      %v1297 = vsel %vm1296, %v1076, %v1295
      %vm1298 = vcmp.eq.f32.partialorder %v1076, 0.0
      %v1299 = vand.u32 %v1076, 2147483648
      %v1300 = vsel %vm1298, %v1299, %v1297
      %v1301 = vrsqrt.pop %v1079
      %v1302 = vmul.f32 %v1079, %v1301
      %vm1303 = vcmp.eq.f32.partialorder %v1079, inf
      %v1304 = vsel %vm1303, %v1079, %v1302
      %vm1305 = vcmp.eq.f32.partialorder %v1079, 0.0
      %v1306 = vand.u32 %v1079, 2147483648
      %v1307 = vsel %vm1305, %v1306, %v1304
      %v1308 = vrsqrt.pop %v1082
      %v1309 = vmul.f32 %v1082, %v1308
      %vm1310 = vcmp.eq.f32.partialorder %v1082, inf
      %v1311 = vsel %vm1310, %v1082, %v1309
      %vm1312 = vcmp.eq.f32.partialorder %v1082, 0.0
      %v1313 = vand.u32 %v1082, 2147483648
      %v1314 = vsel %vm1312, %v1313, %v1311
      %v1315 = vrsqrt.pop %v1085
      %v1316 = vmul.f32 %v1085, %v1315
      %vm1317 = vcmp.eq.f32.partialorder %v1085, inf
      %v1318 = vsel %vm1317, %v1085, %v1316
      %vm1319 = vcmp.eq.f32.partialorder %v1085, 0.0
      %v1320 = vand.u32 %v1085, 2147483648
      %v1321 = vsel %vm1319, %v1320, %v1318
      %v1322 = vrsqrt.pop %v1088
      %v1323 = vmul.f32 %v1088, %v1322
      %vm1324 = vcmp.eq.f32.partialorder %v1088, inf
      %v1325 = vsel %vm1324, %v1088, %v1323
      %vm1326 = vcmp.eq.f32.partialorder %v1088, 0.0
      %v1327 = vand.u32 %v1088, 2147483648
      %v1328 = vsel %vm1326, %v1327, %v1325
      %v1329 = vrsqrt.pop %v1091
      %v1330 = vmul.f32 %v1091, %v1329
      %vm1331 = vcmp.eq.f32.partialorder %v1091, inf
      %v1332 = vsel %vm1331, %v1091, %v1330
      %vm1333 = vcmp.eq.f32.partialorder %v1091, 0.0
      %v1334 = vand.u32 %v1091, 2147483648
      %v1335 = vsel %vm1333, %v1334, %v1332
      %v1336 = vrsqrt.pop %v1094
      %v1337 = vmul.f32 %v1094, %v1336
      %vm1338 = vcmp.eq.f32.partialorder %v1094, inf
      %v1339 = vsel %vm1338, %v1094, %v1337
      %vm1340 = vcmp.eq.f32.partialorder %v1094, 0.0
      %v1341 = vand.u32 %v1094, 2147483648
      %v1342 = vsel %vm1340, %v1341, %v1339
      %v1343 = vrsqrt.pop %v1097
      %v1344 = vmul.f32 %v1097, %v1343
      %vm1345 = vcmp.eq.f32.partialorder %v1097, inf
      %v1346 = vsel %vm1345, %v1097, %v1344
      %vm1347 = vcmp.eq.f32.partialorder %v1097, 0.0
      %v1348 = vand.u32 %v1097, 2147483648
      %v1349 = vsel %vm1347, %v1348, %v1346
      %v1350 = vrsqrt.pop %v1100
      %v1351 = vmul.f32 %v1100, %v1350
      %vm1352 = vcmp.eq.f32.partialorder %v1100, inf
      %v1353 = vsel %vm1352, %v1100, %v1351
      %vm1354 = vcmp.eq.f32.partialorder %v1100, 0.0
      %v1355 = vand.u32 %v1100, 2147483648
      %v1356 = vsel %vm1354, %v1355, %v1353
      %v1357 = vrsqrt.pop %v1103
      %v1358 = vmul.f32 %v1103, %v1357
      %vm1359 = vcmp.eq.f32.partialorder %v1103, inf
      %v1360 = vsel %vm1359, %v1103, %v1358
      %vm1361 = vcmp.eq.f32.partialorder %v1103, 0.0
      %v1362 = vand.u32 %v1103, 2147483648
      %v1363 = vsel %vm1361, %v1362, %v1360
      %v1364 = vrsqrt.pop %v1106
      %v1365 = vmul.f32 %v1106, %v1364
      %vm1366 = vcmp.eq.f32.partialorder %v1106, inf
      %v1367 = vsel %vm1366, %v1106, %v1365
      %vm1368 = vcmp.eq.f32.partialorder %v1106, 0.0
      %v1369 = vand.u32 %v1106, 2147483648
      %v1370 = vsel %vm1368, %v1369, %v1367
      %v1371 = vrsqrt.pop %v1109
      %v1372 = vmul.f32 %v1109, %v1371
      %vm1373 = vcmp.eq.f32.partialorder %v1109, inf
      %v1374 = vsel %vm1373, %v1109, %v1372
      %vm1375 = vcmp.eq.f32.partialorder %v1109, 0.0
      %v1376 = vand.u32 %v1109, 2147483648
      %v1377 = vsel %vm1375, %v1376, %v1374
      %v1378 = vrsqrt.pop %v1112
      %v1379 = vmul.f32 %v1112, %v1378
      %vm1380 = vcmp.eq.f32.partialorder %v1112, inf
      %v1381 = vsel %vm1380, %v1112, %v1379
      %vm1382 = vcmp.eq.f32.partialorder %v1112, 0.0
      %v1383 = vand.u32 %v1112, 2147483648
      %v1384 = vsel %vm1382, %v1383, %v1381
      %v1385 = vrsqrt.pop %v1115
      %v1386 = vmul.f32 %v1115, %v1385
      %vm1387 = vcmp.eq.f32.partialorder %v1115, inf
      %v1388 = vsel %vm1387, %v1115, %v1386
      %vm1389 = vcmp.eq.f32.partialorder %v1115, 0.0
      %v1390 = vand.u32 %v1115, 2147483648
      %v1391 = vsel %vm1389, %v1390, %v1388
      %v1392 = vrsqrt.pop %v1118
      %v1393 = vmul.f32 %v1118, %v1392
      %vm1394 = vcmp.eq.f32.partialorder %v1118, inf
      %v1395 = vsel %vm1394, %v1118, %v1393
      %vm1396 = vcmp.eq.f32.partialorder %v1118, 0.0
      %v1397 = vand.u32 %v1118, 2147483648
      %v1398 = vsel %vm1396, %v1397, %v1395
      %v1399 = vrsqrt.pop %v1121
      %v1400 = vmul.f32 %v1121, %v1399
      %vm1401 = vcmp.eq.f32.partialorder %v1121, inf
      %v1402 = vsel %vm1401, %v1121, %v1400
      %vm1403 = vcmp.eq.f32.partialorder %v1121, 0.0
      %v1404 = vand.u32 %v1121, 2147483648
      %v1405 = vsel %vm1403, %v1404, %v1402
      %v1406 = vrsqrt.pop %v1124
      %v1407 = vmul.f32 %v1124, %v1406
      %vm1408 = vcmp.eq.f32.partialorder %v1124, inf
      %v1409 = vsel %vm1408, %v1124, %v1407
      %vm1410 = vcmp.eq.f32.partialorder %v1124, 0.0
      %v1411 = vand.u32 %v1124, 2147483648
      %v1412 = vsel %vm1410, %v1411, %v1409
      %v1413 = vrsqrt.pop %v1127
      %v1414 = vmul.f32 %v1127, %v1413
      %vm1415 = vcmp.eq.f32.partialorder %v1127, inf
      %v1416 = vsel %vm1415, %v1127, %v1414
      %vm1417 = vcmp.eq.f32.partialorder %v1127, 0.0
      %v1418 = vand.u32 %v1127, 2147483648
      %v1419 = vsel %vm1417, %v1418, %v1416
      %v1420 = vrsqrt.pop %v1130
      %v1421 = vmul.f32 %v1130, %v1420
      %vm1422 = vcmp.eq.f32.partialorder %v1130, inf
      %v1423 = vsel %vm1422, %v1130, %v1421
      %vm1424 = vcmp.eq.f32.partialorder %v1130, 0.0
      %v1425 = vand.u32 %v1130, 2147483648
      %v1426 = vsel %vm1424, %v1425, %v1423
      %v1427 = vrsqrt.pop %v1133
      %v1428 = vmul.f32 %v1133, %v1427
      %vm1429 = vcmp.eq.f32.partialorder %v1133, inf
      %v1430 = vsel %vm1429, %v1133, %v1428
      %vm1431 = vcmp.eq.f32.partialorder %v1133, 0.0
      %v1432 = vand.u32 %v1133, 2147483648
      %v1433 = vsel %vm1431, %v1432, %v1430
      %v1434 = vrsqrt.pop %v1136
      %v1435 = vmul.f32 %v1136, %v1434
      %vm1436 = vcmp.eq.f32.partialorder %v1136, inf
      %v1437 = vsel %vm1436, %v1136, %v1435
      %vm1438 = vcmp.eq.f32.partialorder %v1136, 0.0
      %v1439 = vand.u32 %v1136, 2147483648
      %v1440 = vsel %vm1438, %v1439, %v1437
      %v1441 = vrsqrt.pop %v1139
      %v1442 = vmul.f32 %v1139, %v1441
      %vm1443 = vcmp.eq.f32.partialorder %v1139, inf
      %v1444 = vsel %vm1443, %v1139, %v1442
      %vm1445 = vcmp.eq.f32.partialorder %v1139, 0.0
      %v1446 = vand.u32 %v1139, 2147483648
      %v1447 = vsel %vm1445, %v1446, %v1444
      %v1448 = vrsqrt.pop %v1142
      %v1449 = vmul.f32 %v1142, %v1448
      %vm1450 = vcmp.eq.f32.partialorder %v1142, inf
      %v1451 = vsel %vm1450, %v1142, %v1449
      %vm1452 = vcmp.eq.f32.partialorder %v1142, 0.0
      %v1453 = vand.u32 %v1142, 2147483648
      %v1454 = vsel %vm1452, %v1453, %v1451
      %v1455 = vrsqrt.pop %v1145
      %v1456 = vmul.f32 %v1145, %v1455
      %vm1457 = vcmp.eq.f32.partialorder %v1145, inf
      %v1458 = vsel %vm1457, %v1145, %v1456
      %vm1459 = vcmp.eq.f32.partialorder %v1145, 0.0
      %v1460 = vand.u32 %v1145, 2147483648
      %v1461 = vsel %vm1459, %v1460, %v1458
      %v1462 = vrsqrt.pop %v1148
      %v1463 = vmul.f32 %v1148, %v1462
      %vm1464 = vcmp.eq.f32.partialorder %v1148, inf
      %v1465 = vsel %vm1464, %v1148, %v1463
      %vm1466 = vcmp.eq.f32.partialorder %v1148, 0.0
      %v1467 = vand.u32 %v1148, 2147483648
      %v1468 = vsel %vm1466, %v1467, %v1465
      %v1469 = vrsqrt.pop %v1151
      %v1470 = vmul.f32 %v1151, %v1469
      %vm1471 = vcmp.eq.f32.partialorder %v1151, inf
      %v1472 = vsel %vm1471, %v1151, %v1470
      %vm1473 = vcmp.eq.f32.partialorder %v1151, 0.0
      %v1474 = vand.u32 %v1151, 2147483648
      %v1475 = vsel %vm1473, %v1474, %v1472
      %v1476 = vrsqrt.pop %v1154
      %v1477 = vmul.f32 %v1154, %v1476
      %vm1478 = vcmp.eq.f32.partialorder %v1154, inf
      %v1479 = vsel %vm1478, %v1154, %v1477
      %vm1480 = vcmp.eq.f32.partialorder %v1154, 0.0
      %v1481 = vand.u32 %v1154, 2147483648
      %v1482 = vsel %vm1480, %v1481, %v1479
      %v1483 = vrsqrt.pop %v1157
      %v1484 = vmul.f32 %v1157, %v1483
      %vm1485 = vcmp.eq.f32.partialorder %v1157, inf
      %v1486 = vsel %vm1485, %v1157, %v1484
      %vm1487 = vcmp.eq.f32.partialorder %v1157, 0.0
      %v1488 = vand.u32 %v1157, 2147483648
      %v1489 = vsel %vm1487, %v1488, %v1486
      %v1490 = vrsqrt.pop %v1160
      %v1491 = vmul.f32 %v1160, %v1490
      %vm1492 = vcmp.eq.f32.partialorder %v1160, inf
      %v1493 = vsel %vm1492, %v1160, %v1491
      %vm1494 = vcmp.eq.f32.partialorder %v1160, 0.0
      %v1495 = vand.u32 %v1160, 2147483648
      %v1496 = vsel %vm1494, %v1495, %v1493
      %v1497 = vrsqrt.pop %v1163
      %v1498 = vmul.f32 %v1163, %v1497
      %vm1499 = vcmp.eq.f32.partialorder %v1163, inf
      %v1500 = vsel %vm1499, %v1163, %v1498
      %vm1501 = vcmp.eq.f32.partialorder %v1163, 0.0
      %v1502 = vand.u32 %v1163, 2147483648
      %v1503 = vsel %vm1501, %v1502, %v1500
      %v1504 = vrsqrt.pop %v1166
      %v1505 = vmul.f32 %v1166, %v1504
      %vm1506 = vcmp.eq.f32.partialorder %v1166, inf
      %v1507 = vsel %vm1506, %v1166, %v1505
      %vm1508 = vcmp.eq.f32.partialorder %v1166, 0.0
      %v1509 = vand.u32 %v1166, 2147483648
      %v1510 = vsel %vm1508, %v1509, %v1507
      %v1511 = vrsqrt.pop %v1169
      %v1512 = vmul.f32 %v1169, %v1511
      %vm1513 = vcmp.eq.f32.partialorder %v1169, inf
      %v1514 = vsel %vm1513, %v1169, %v1512
      %vm1515 = vcmp.eq.f32.partialorder %v1169, 0.0
      %v1516 = vand.u32 %v1169, 2147483648
      %v1517 = vsel %vm1515, %v1516, %v1514
      %v1518 = vrsqrt.pop %v1172
      %v1519 = vmul.f32 %v1172, %v1518
      %vm1520 = vcmp.eq.f32.partialorder %v1172, inf
      %v1521 = vsel %vm1520, %v1172, %v1519
      %vm1522 = vcmp.eq.f32.partialorder %v1172, 0.0
      %v1523 = vand.u32 %v1172, 2147483648
      %v1524 = vsel %vm1522, %v1523, %v1521
      %v1525 = vrsqrt.pop %v1175
      %v1526 = vmul.f32 %v1175, %v1525
      %vm1527 = vcmp.eq.f32.partialorder %v1175, inf
      %v1528 = vsel %vm1527, %v1175, %v1526
      %vm1529 = vcmp.eq.f32.partialorder %v1175, 0.0
      %v1530 = vand.u32 %v1175, 2147483648
      %v1531 = vsel %vm1529, %v1530, %v1528
      %v1532 = vrsqrt.pop %v1178
      %v1533 = vmul.f32 %v1178, %v1532
      %vm1534 = vcmp.eq.f32.partialorder %v1178, inf
      %v1535 = vsel %vm1534, %v1178, %v1533
      %vm1536 = vcmp.eq.f32.partialorder %v1178, 0.0
      %v1537 = vand.u32 %v1178, 2147483648
      %v1538 = vsel %vm1536, %v1537, %v1535
      %v1539 = vrsqrt.pop %v1181
      %v1540 = vmul.f32 %v1181, %v1539
      %vm1541 = vcmp.eq.f32.partialorder %v1181, inf
      %v1542 = vsel %vm1541, %v1181, %v1540
      %vm1543 = vcmp.eq.f32.partialorder %v1181, 0.0
      %v1544 = vand.u32 %v1181, 2147483648
      %v1545 = vsel %vm1543, %v1544, %v1542
      %v1546 = vrsqrt.pop %v1184
      %v1547 = vmul.f32 %v1184, %v1546
      %vm1548 = vcmp.eq.f32.partialorder %v1184, inf
      %v1549 = vsel %vm1548, %v1184, %v1547
      %vm1550 = vcmp.eq.f32.partialorder %v1184, 0.0
      %v1551 = vand.u32 %v1184, 2147483648
      %v1552 = vsel %vm1550, %v1551, %v1549
      %v1553 = vrsqrt.pop %v1187
      %v1554 = vmul.f32 %v1187, %v1553
      %vm1555 = vcmp.eq.f32.partialorder %v1187, inf
      %v1556 = vsel %vm1555, %v1187, %v1554
      %vm1557 = vcmp.eq.f32.partialorder %v1187, 0.0
      %v1558 = vand.u32 %v1187, 2147483648
      %v1559 = vsel %vm1557, %v1558, %v1556
      %v1560 = vrsqrt.pop %v1190
      %v1561 = vmul.f32 %v1190, %v1560
      %vm1562 = vcmp.eq.f32.partialorder %v1190, inf
      %v1563 = vsel %vm1562, %v1190, %v1561
      %vm1564 = vcmp.eq.f32.partialorder %v1190, 0.0
      %v1565 = vand.u32 %v1190, 2147483648
      %v1566 = vsel %vm1564, %v1565, %v1563
      %v1567 = vrsqrt.pop %v1193
      %v1568 = vmul.f32 %v1193, %v1567
      %vm1569 = vcmp.eq.f32.partialorder %v1193, inf
      %v1570 = vsel %vm1569, %v1193, %v1568
      %vm1571 = vcmp.eq.f32.partialorder %v1193, 0.0
      %v1572 = vand.u32 %v1193, 2147483648
      %v1573 = vsel %vm1571, %v1572, %v1570
      %v1574 = vrsqrt.pop %v1196
      %v1575 = vmul.f32 %v1196, %v1574
      %vm1576 = vcmp.eq.f32.partialorder %v1196, inf
      %v1577 = vsel %vm1576, %v1196, %v1575
      %vm1578 = vcmp.eq.f32.partialorder %v1196, 0.0
      %v1579 = vand.u32 %v1196, 2147483648
      %v1580 = vsel %vm1578, %v1579, %v1577
      %v1581 = vrsqrt.pop %v1199
      %v1582 = vmul.f32 %v1199, %v1581
      %vm1583 = vcmp.eq.f32.partialorder %v1199, inf
      %v1584 = vsel %vm1583, %v1199, %v1582
      %vm1585 = vcmp.eq.f32.partialorder %v1199, 0.0
      %v1586 = vand.u32 %v1199, 2147483648
      %v1587 = vsel %vm1585, %v1586, %v1584
      %v1588 = vrsqrt.pop %v1202
      %v1589 = vmul.f32 %v1202, %v1588
      %vm1590 = vcmp.eq.f32.partialorder %v1202, inf
      %v1591 = vsel %vm1590, %v1202, %v1589
      %vm1592 = vcmp.eq.f32.partialorder %v1202, 0.0
      %v1593 = vand.u32 %v1202, 2147483648
      %v1594 = vsel %vm1592, %v1593, %v1591
      %v1595 = vrsqrt.pop %v1205
      %v1596 = vmul.f32 %v1205, %v1595
      %vm1597 = vcmp.eq.f32.partialorder %v1205, inf
      %v1598 = vsel %vm1597, %v1205, %v1596
      %vm1599 = vcmp.eq.f32.partialorder %v1205, 0.0
      %v1600 = vand.u32 %v1205, 2147483648
      %v1601 = vsel %vm1599, %v1600, %v1598
      %v1602 = vrsqrt.pop %v1208
      %v1603 = vmul.f32 %v1208, %v1602
      %vm1604 = vcmp.eq.f32.partialorder %v1208, inf
      %v1605 = vsel %vm1604, %v1208, %v1603
      %vm1606 = vcmp.eq.f32.partialorder %v1208, 0.0
      %v1607 = vand.u32 %v1208, 2147483648
      %v1608 = vsel %vm1606, %v1607, %v1605
      %v1609 = vrsqrt.pop %v1211
      %v1610 = vmul.f32 %v1211, %v1609
      %vm1611 = vcmp.eq.f32.partialorder %v1211, inf
      %v1612 = vsel %vm1611, %v1211, %v1610
      %vm1613 = vcmp.eq.f32.partialorder %v1211, 0.0
      %v1614 = vand.u32 %v1211, 2147483648
      %v1615 = vsel %vm1613, %v1614, %v1612
      %v1616 = vrsqrt.pop %v1214
      %v1617 = vmul.f32 %v1214, %v1616
      %vm1618 = vcmp.eq.f32.partialorder %v1214, inf
      %v1619 = vsel %vm1618, %v1214, %v1617
      %vm1620 = vcmp.eq.f32.partialorder %v1214, 0.0
      %v1621 = vand.u32 %v1214, 2147483648
      %v1622 = vsel %vm1620, %v1621, %v1619
      %v1623 = vrsqrt.pop %v1217
      %v1624 = vmul.f32 %v1217, %v1623
      %vm1625 = vcmp.eq.f32.partialorder %v1217, inf
      %v1626 = vsel %vm1625, %v1217, %v1624
      %vm1627 = vcmp.eq.f32.partialorder %v1217, 0.0
      %v1628 = vand.u32 %v1217, 2147483648
      %v1629 = vsel %vm1627, %v1628, %v1626
      %v1630 = vrsqrt.pop %v1220
      %v1631 = vmul.f32 %v1220, %v1630
      %vm1632 = vcmp.eq.f32.partialorder %v1220, inf
      %v1633 = vsel %vm1632, %v1220, %v1631
      %vm1634 = vcmp.eq.f32.partialorder %v1220, 0.0
      %v1635 = vand.u32 %v1220, 2147483648
      %v1636 = vsel %vm1634, %v1635, %v1633
      %v1637 = vrsqrt.pop %v1223
      %v1638 = vmul.f32 %v1223, %v1637
      %vm1639 = vcmp.eq.f32.partialorder %v1223, inf
      %v1640 = vsel %vm1639, %v1223, %v1638
      %vm1641 = vcmp.eq.f32.partialorder %v1223, 0.0
      %v1642 = vand.u32 %v1223, 2147483648
      %v1643 = vsel %vm1641, %v1642, %v1640
      %v1644 = vrsqrt.pop %v1226
      %v1645 = vmul.f32 %v1226, %v1644
      %vm1646 = vcmp.eq.f32.partialorder %v1226, inf
      %v1647 = vsel %vm1646, %v1226, %v1645
      %vm1648 = vcmp.eq.f32.partialorder %v1226, 0.0
      %v1649 = vand.u32 %v1226, 2147483648
      %v1650 = vsel %vm1648, %v1649, %v1647
      %v1651 = vrsqrt.pop %v1229
      %v1652 = vmul.f32 %v1229, %v1651
      %vm1653 = vcmp.eq.f32.partialorder %v1229, inf
      %v1654 = vsel %vm1653, %v1229, %v1652
      %vm1655 = vcmp.eq.f32.partialorder %v1229, 0.0
      %v1656 = vand.u32 %v1229, 2147483648
      %v1657 = vsel %vm1655, %v1656, %v1654
      %v1658 = vrsqrt.pop %v1232
      %v1659 = vmul.f32 %v1232, %v1658
      %vm1660 = vcmp.eq.f32.partialorder %v1232, inf
      %v1661 = vsel %vm1660, %v1232, %v1659
      %vm1662 = vcmp.eq.f32.partialorder %v1232, 0.0
      %v1663 = vand.u32 %v1232, 2147483648
      %v1664 = vsel %vm1662, %v1663, %v1661
      %v1665 = vrsqrt.pop %v1235
      %v1666 = vmul.f32 %v1235, %v1665
      %vm1667 = vcmp.eq.f32.partialorder %v1235, inf
      %v1668 = vsel %vm1667, %v1235, %v1666
      %vm1669 = vcmp.eq.f32.partialorder %v1235, 0.0
      %v1670 = vand.u32 %v1235, 2147483648
      %v1671 = vsel %vm1669, %v1670, %v1668
      %v1672 = vrsqrt.pop %v1238
      %v1673 = vmul.f32 %v1238, %v1672
      %vm1674 = vcmp.eq.f32.partialorder %v1238, inf
      %v1675 = vsel %vm1674, %v1238, %v1673
      %vm1676 = vcmp.eq.f32.partialorder %v1238, 0.0
      %v1677 = vand.u32 %v1238, 2147483648
      %v1678 = vsel %vm1676, %v1677, %v1675
      %v1679 = vrsqrt.pop %v1241
      %v1680 = vmul.f32 %v1241, %v1679
      %vm1681 = vcmp.eq.f32.partialorder %v1241, inf
      %v1682 = vsel %vm1681, %v1241, %v1680
      %vm1683 = vcmp.eq.f32.partialorder %v1241, 0.0
      %v1684 = vand.u32 %v1241, 2147483648
      %v1685 = vsel %vm1683, %v1684, %v1682
      %v1686 = vrsqrt.pop %v1244
      %v1687 = vmul.f32 %v1244, %v1686
      %vm1688 = vcmp.eq.f32.partialorder %v1244, inf
      %v1689 = vsel %vm1688, %v1244, %v1687
      %vm1690 = vcmp.eq.f32.partialorder %v1244, 0.0
      %v1691 = vand.u32 %v1244, 2147483648
      %v1692 = vsel %vm1690, %v1691, %v1689
      %vm1693 = vcmp.gt.f32.partialorder %v547, 1.0
      %vm1694 = vcmp.gt.f32.partialorder %v554, 1.0
      %vm1695 = vcmp.gt.f32.partialorder %v561, 1.0
      %vm1696 = vcmp.gt.f32.partialorder %v568, 1.0
      %vm1697 = vcmp.gt.f32.partialorder %v575, 1.0
      %vm1698 = vcmp.gt.f32.partialorder %v582, 1.0
      %vm1699 = vcmp.gt.f32.partialorder %v589, 1.0
      %vm1700 = vcmp.gt.f32.partialorder %v596, 1.0
      %vm1701 = vcmp.gt.f32.partialorder %v603, 1.0
      %vm1702 = vcmp.gt.f32.partialorder %v610, 1.0
      %vm1703 = vcmp.gt.f32.partialorder %v617, 1.0
      %vm1704 = vcmp.gt.f32.partialorder %v624, 1.0
      %vm1705 = vcmp.gt.f32.partialorder %v631, 1.0
      %vm1706 = vcmp.gt.f32.partialorder %v638, 1.0
      %vm1707 = vcmp.gt.f32.partialorder %v645, 1.0
      %vm1708 = vcmp.gt.f32.partialorder %v652, 1.0
      %vm1709 = vcmp.gt.f32.partialorder %v659, 1.0
      %vm1710 = vcmp.gt.f32.partialorder %v666, 1.0
      %vm1711 = vcmp.gt.f32.partialorder %v673, 1.0
      %vm1712 = vcmp.gt.f32.partialorder %v680, 1.0
      %vm1713 = vcmp.gt.f32.partialorder %v687, 1.0
      %vm1714 = vcmp.gt.f32.partialorder %v694, 1.0
      %vm1715 = vcmp.gt.f32.partialorder %v701, 1.0
      %vm1716 = vcmp.gt.f32.partialorder %v708, 1.0
      %vm1717 = vcmp.gt.f32.partialorder %v715, 1.0
      %vm1718 = vcmp.gt.f32.partialorder %v722, 1.0
      %vm1719 = vcmp.gt.f32.partialorder %v729, 1.0
      %vm1720 = vcmp.gt.f32.partialorder %v736, 1.0
      %vm1721 = vcmp.gt.f32.partialorder %v743, 1.0
      %vm1722 = vcmp.gt.f32.partialorder %v750, 1.0
      %vm1723 = vcmp.gt.f32.partialorder %v757, 1.0
      %vm1724 = vcmp.gt.f32.partialorder %v764, 1.0
      %vm1725 = vcmp.gt.f32.partialorder %v771, 1.0
      %vm1726 = vcmp.gt.f32.partialorder %v778, 1.0
      %vm1727 = vcmp.gt.f32.partialorder %v785, 1.0
      %vm1728 = vcmp.gt.f32.partialorder %v792, 1.0
      %vm1729 = vcmp.gt.f32.partialorder %v799, 1.0
      %vm1730 = vcmp.gt.f32.partialorder %v806, 1.0
      %vm1731 = vcmp.gt.f32.partialorder %v813, 1.0
      %vm1732 = vcmp.gt.f32.partialorder %v820, 1.0
      %vm1733 = vcmp.gt.f32.partialorder %v827, 1.0
      %vm1734 = vcmp.gt.f32.partialorder %v834, 1.0
      %vm1735 = vcmp.gt.f32.partialorder %v841, 1.0
      %vm1736 = vcmp.gt.f32.partialorder %v848, 1.0
      %vm1737 = vcmp.gt.f32.partialorder %v855, 1.0
      %vm1738 = vcmp.gt.f32.partialorder %v862, 1.0
      %vm1739 = vcmp.gt.f32.partialorder %v869, 1.0
      %vm1740 = vcmp.gt.f32.partialorder %v876, 1.0
      %vm1741 = vcmp.gt.f32.partialorder %v883, 1.0
      %vm1742 = vcmp.gt.f32.partialorder %v890, 1.0
      %vm1743 = vcmp.gt.f32.partialorder %v897, 1.0
      %vm1744 = vcmp.gt.f32.partialorder %v904, 1.0
      %vm1745 = vcmp.gt.f32.partialorder %v911, 1.0
      %vm1746 = vcmp.gt.f32.partialorder %v918, 1.0
      %vm1747 = vcmp.gt.f32.partialorder %v925, 1.0
      %vm1748 = vcmp.gt.f32.partialorder %v932, 1.0
      %vm1749 = vcmp.gt.f32.partialorder %v939, 1.0
      %vm1750 = vcmp.gt.f32.partialorder %v946, 1.0
      %vm1751 = vcmp.gt.f32.partialorder %v953, 1.0
      %vm1752 = vcmp.gt.f32.partialorder %v960, 1.0
      %vm1753 = vcmp.gt.f32.partialorder %v967, 1.0
      %vm1754 = vcmp.gt.f32.partialorder %v974, 1.0
      %vm1755 = vcmp.gt.f32.partialorder %v981, 1.0
      %vm1756 = vcmp.gt.f32.partialorder %v988, 1.0
      %v1757 = vadd.f32 %v547, 1e-07
      %v1758 = vadd.f32 %v554, 1e-07
      %v1759 = vadd.f32 %v561, 1e-07
      %v1760 = vadd.f32 %v568, 1e-07
      %v1761 = vadd.f32 %v575, 1e-07
      %v1762 = vadd.f32 %v582, 1e-07
      %v1763 = vadd.f32 %v589, 1e-07
      %v1764 = vadd.f32 %v596, 1e-07
      %v1765 = vadd.f32 %v603, 1e-07
      %v1766 = vadd.f32 %v610, 1e-07
      %v1767 = vadd.f32 %v617, 1e-07
      %v1768 = vadd.f32 %v624, 1e-07
      %v1769 = vadd.f32 %v631, 1e-07
      %v1770 = vadd.f32 %v638, 1e-07
      %v1771 = vadd.f32 %v645, 1e-07
      %v1772 = vadd.f32 %v652, 1e-07
      %v1773 = vadd.f32 %v659, 1e-07
      %v1774 = vadd.f32 %v666, 1e-07
      %v1775 = vadd.f32 %v673, 1e-07
      %v1776 = vadd.f32 %v680, 1e-07
      %v1777 = vadd.f32 %v687, 1e-07
      %v1778 = vadd.f32 %v694, 1e-07
      %v1779 = vadd.f32 %v701, 1e-07
      %v1780 = vadd.f32 %v708, 1e-07
      %v1781 = vadd.f32 %v715, 1e-07
      %v1782 = vadd.f32 %v722, 1e-07
      %v1783 = vadd.f32 %v729, 1e-07
      %v1784 = vadd.f32 %v736, 1e-07
      %v1785 = vadd.f32 %v743, 1e-07
      %v1786 = vadd.f32 %v750, 1e-07
      %v1787 = vadd.f32 %v757, 1e-07
      %v1788 = vadd.f32 %v764, 1e-07
      %v1789 = vadd.f32 %v771, 1e-07
      %v1790 = vadd.f32 %v778, 1e-07
      %v1791 = vadd.f32 %v785, 1e-07
      %v1792 = vadd.f32 %v792, 1e-07
      %v1793 = vadd.f32 %v799, 1e-07
      %v1794 = vadd.f32 %v806, 1e-07
      %v1795 = vadd.f32 %v813, 1e-07
      %v1796 = vadd.f32 %v820, 1e-07
      %v1797 = vadd.f32 %v827, 1e-07
      %v1798 = vadd.f32 %v834, 1e-07
      %v1799 = vadd.f32 %v841, 1e-07
      %v1800 = vadd.f32 %v848, 1e-07
      %v1801 = vadd.f32 %v855, 1e-07
      %v1802 = vadd.f32 %v862, 1e-07
      %v1803 = vadd.f32 %v869, 1e-07
      %v1804 = vadd.f32 %v876, 1e-07
      %v1805 = vadd.f32 %v883, 1e-07
      %v1806 = vadd.f32 %v890, 1e-07
      %v1807 = vadd.f32 %v897, 1e-07
      %v1808 = vadd.f32 %v904, 1e-07
      %v1809 = vadd.f32 %v911, 1e-07
      %v1810 = vadd.f32 %v918, 1e-07
      %v1811 = vadd.f32 %v925, 1e-07
      %v1812 = vadd.f32 %v932, 1e-07
      %v1813 = vadd.f32 %v939, 1e-07
      %v1814 = vadd.f32 %v946, 1e-07
      %v1815 = vadd.f32 %v953, 1e-07
      %v1816 = vadd.f32 %v960, 1e-07
      %v1817 = vadd.f32 %v967, 1e-07
      %v1818 = vadd.f32 %v974, 1e-07
      %v1819 = vadd.f32 %v981, 1e-07
      %v1820 = vadd.f32 %v988, 1e-07
      %v1821 = vrcp.pop %v1757
      %v1822 = vmul.f32 1.0, %v1821
      %v1823 = vrcp.pop %v1758
      %v1824 = vmul.f32 1.0, %v1823
      %v1825 = vrcp.pop %v1759
      %v1826 = vmul.f32 1.0, %v1825
      %v1827 = vrcp.pop %v1760
      %v1828 = vmul.f32 1.0, %v1827
      %v1829 = vrcp.pop %v1761
      %v1830 = vmul.f32 1.0, %v1829
      %v1831 = vrcp.pop %v1762
      %v1832 = vmul.f32 1.0, %v1831
      %v1833 = vrcp.pop %v1763
      %v1834 = vmul.f32 1.0, %v1833
      %v1835 = vrcp.pop %v1764
      %v1836 = vmul.f32 1.0, %v1835
      %v1837 = vrcp.pop %v1765
      %v1838 = vmul.f32 1.0, %v1837
      %v1839 = vrcp.pop %v1766
      %v1840 = vmul.f32 1.0, %v1839
      %v1841 = vrcp.pop %v1767
      %v1842 = vmul.f32 1.0, %v1841
      %v1843 = vrcp.pop %v1768
      %v1844 = vmul.f32 1.0, %v1843
      %v1845 = vrcp.pop %v1769
      %v1846 = vmul.f32 1.0, %v1845
      %v1847 = vrcp.pop %v1770
      %v1848 = vmul.f32 1.0, %v1847
      %v1849 = vrcp.pop %v1771
      %v1850 = vmul.f32 1.0, %v1849
      %v1851 = vrcp.pop %v1772
      %v1852 = vmul.f32 1.0, %v1851
      %v1853 = vrcp.pop %v1773
      %v1854 = vmul.f32 1.0, %v1853
      %v1855 = vrcp.pop %v1774
      %v1856 = vmul.f32 1.0, %v1855
      %v1857 = vrcp.pop %v1775
      %v1858 = vmul.f32 1.0, %v1857
      %v1859 = vrcp.pop %v1776
      %v1860 = vmul.f32 1.0, %v1859
      %v1861 = vrcp.pop %v1777
      %v1862 = vmul.f32 1.0, %v1861
      %v1863 = vrcp.pop %v1778
      %v1864 = vmul.f32 1.0, %v1863
      %v1865 = vrcp.pop %v1779
      %v1866 = vmul.f32 1.0, %v1865
      %v1867 = vrcp.pop %v1780
      %v1868 = vmul.f32 1.0, %v1867
      %v1869 = vrcp.pop %v1781
      %v1870 = vmul.f32 1.0, %v1869
      %v1871 = vrcp.pop %v1782
      %v1872 = vmul.f32 1.0, %v1871
      %v1873 = vrcp.pop %v1783
      %v1874 = vmul.f32 1.0, %v1873
      %v1875 = vrcp.pop %v1784
      %v1876 = vmul.f32 1.0, %v1875
      %v1877 = vrcp.pop %v1785
      %v1878 = vmul.f32 1.0, %v1877
      %v1879 = vrcp.pop %v1786
      %v1880 = vmul.f32 1.0, %v1879
      %v1881 = vrcp.pop %v1787
      %v1882 = vmul.f32 1.0, %v1881
      %v1883 = vrcp.pop %v1788
      %v1884 = vmul.f32 1.0, %v1883
      %v1885 = vrcp.pop %v1789
      %v1886 = vmul.f32 1.0, %v1885
      %v1887 = vrcp.pop %v1790
      %v1888 = vmul.f32 1.0, %v1887
      %v1889 = vrcp.pop %v1791
      %v1890 = vmul.f32 1.0, %v1889
      %v1891 = vrcp.pop %v1792
      %v1892 = vmul.f32 1.0, %v1891
      %v1893 = vrcp.pop %v1793
      %v1894 = vmul.f32 1.0, %v1893
      %v1895 = vrcp.pop %v1794
      %v1896 = vmul.f32 1.0, %v1895
      %v1897 = vrcp.pop %v1795
      %v1898 = vmul.f32 1.0, %v1897
      %v1899 = vrcp.pop %v1796
      %v1900 = vmul.f32 1.0, %v1899
      %v1901 = vrcp.pop %v1797
      %v1902 = vmul.f32 1.0, %v1901
      %v1903 = vrcp.pop %v1798
      %v1904 = vmul.f32 1.0, %v1903
      %v1905 = vrcp.pop %v1799
      %v1906 = vmul.f32 1.0, %v1905
      %v1907 = vrcp.pop %v1800
      %v1908 = vmul.f32 1.0, %v1907
      %v1909 = vrcp.pop %v1801
      %v1910 = vmul.f32 1.0, %v1909
      %v1911 = vrcp.pop %v1802
      %v1912 = vmul.f32 1.0, %v1911
      %v1913 = vrcp.pop %v1803
      %v1914 = vmul.f32 1.0, %v1913
      %v1915 = vrcp.pop %v1804
      %v1916 = vmul.f32 1.0, %v1915
      %v1917 = vrcp.pop %v1805
      %v1918 = vmul.f32 1.0, %v1917
      %v1919 = vrcp.pop %v1806
      %v1920 = vmul.f32 1.0, %v1919
      %v1921 = vrcp.pop %v1807
      %v1922 = vmul.f32 1.0, %v1921
      %v1923 = vrcp.pop %v1808
      %v1924 = vmul.f32 1.0, %v1923
      %v1925 = vrcp.pop %v1809
      %v1926 = vmul.f32 1.0, %v1925
      %v1927 = vrcp.pop %v1810
      %v1928 = vmul.f32 1.0, %v1927
      %v1929 = vrcp.pop %v1811
      %v1930 = vmul.f32 1.0, %v1929
      %v1931 = vrcp.pop %v1812
      %v1932 = vmul.f32 1.0, %v1931
      %v1933 = vrcp.pop %v1813
      %v1934 = vmul.f32 1.0, %v1933
      %v1935 = vrcp.pop %v1814
      %v1936 = vmul.f32 1.0, %v1935
      %v1937 = vrcp.pop %v1815
      %v1938 = vmul.f32 1.0, %v1937
      %v1939 = vrcp.pop %v1816
      %v1940 = vmul.f32 1.0, %v1939
      %v1941 = vrcp.pop %v1817
      %v1942 = vmul.f32 1.0, %v1941
      %v1943 = vrcp.pop %v1818
      %v1944 = vmul.f32 1.0, %v1943
      %v1945 = vrcp.pop %v1819
      %v1946 = vmul.f32 1.0, %v1945
      %v1947 = vrcp.pop %v1820
      %v1948 = vmul.f32 1.0, %v1947
      %v1949 = vsel %vm1693, %v1822, 1.0
      %v1950 = vsel %vm1694, %v1824, 1.0
      %v1951 = vsel %vm1695, %v1826, 1.0
      %v1952 = vsel %vm1696, %v1828, 1.0
      %v1953 = vsel %vm1697, %v1830, 1.0
      %v1954 = vsel %vm1698, %v1832, 1.0
      %v1955 = vsel %vm1699, %v1834, 1.0
      %v1956 = vsel %vm1700, %v1836, 1.0
      %v1957 = vsel %vm1701, %v1838, 1.0
      %v1958 = vsel %vm1702, %v1840, 1.0
      %v1959 = vsel %vm1703, %v1842, 1.0
      %v1960 = vsel %vm1704, %v1844, 1.0
      %v1961 = vsel %vm1705, %v1846, 1.0
      %v1962 = vsel %vm1706, %v1848, 1.0
      %v1963 = vsel %vm1707, %v1850, 1.0
      %v1964 = vsel %vm1708, %v1852, 1.0
      %v1965 = vsel %vm1709, %v1854, 1.0
      %v1966 = vsel %vm1710, %v1856, 1.0
      %v1967 = vsel %vm1711, %v1858, 1.0
      %v1968 = vsel %vm1712, %v1860, 1.0
      %v1969 = vsel %vm1713, %v1862, 1.0
      %v1970 = vsel %vm1714, %v1864, 1.0
      %v1971 = vsel %vm1715, %v1866, 1.0
      %v1972 = vsel %vm1716, %v1868, 1.0
      %v1973 = vsel %vm1717, %v1870, 1.0
      %v1974 = vsel %vm1718, %v1872, 1.0
      %v1975 = vsel %vm1719, %v1874, 1.0
      %v1976 = vsel %vm1720, %v1876, 1.0
      %v1977 = vsel %vm1721, %v1878, 1.0
      %v1978 = vsel %vm1722, %v1880, 1.0
      %v1979 = vsel %vm1723, %v1882, 1.0
      %v1980 = vsel %vm1724, %v1884, 1.0
      %v1981 = vsel %vm1725, %v1886, 1.0
      %v1982 = vsel %vm1726, %v1888, 1.0
      %v1983 = vsel %vm1727, %v1890, 1.0
      %v1984 = vsel %vm1728, %v1892, 1.0
      %v1985 = vsel %vm1729, %v1894, 1.0
      %v1986 = vsel %vm1730, %v1896, 1.0
      %v1987 = vsel %vm1731, %v1898, 1.0
      %v1988 = vsel %vm1732, %v1900, 1.0
      %v1989 = vsel %vm1733, %v1902, 1.0
      %v1990 = vsel %vm1734, %v1904, 1.0
      %v1991 = vsel %vm1735, %v1906, 1.0
      %v1992 = vsel %vm1736, %v1908, 1.0
      %v1993 = vsel %vm1737, %v1910, 1.0
      %v1994 = vsel %vm1738, %v1912, 1.0
      %v1995 = vsel %vm1739, %v1914, 1.0
      %v1996 = vsel %vm1740, %v1916, 1.0
      %v1997 = vsel %vm1741, %v1918, 1.0
      %v1998 = vsel %vm1742, %v1920, 1.0
      %v1999 = vsel %vm1743, %v1922, 1.0
      %v2000 = vsel %vm1744, %v1924, 1.0
      %v2001 = vsel %vm1745, %v1926, 1.0
      %v2002 = vsel %vm1746, %v1928, 1.0
      %v2003 = vsel %vm1747, %v1930, 1.0
      %v2004 = vsel %vm1748, %v1932, 1.0
      %v2005 = vsel %vm1749, %v1934, 1.0
      %v2006 = vsel %vm1750, %v1936, 1.0
      %v2007 = vsel %vm1751, %v1938, 1.0
      %v2008 = vsel %vm1752, %v1940, 1.0
      %v2009 = vsel %vm1753, %v1942, 1.0
      %v2010 = vsel %vm1754, %v1944, 1.0
      %v2011 = vsel %vm1755, %v1946, 1.0
      %v2012 = vsel %vm1756, %v1948, 1.0
      %vm2013 = vcmp.gt.f32.partialorder %v1251, 1.0
      %vm2014 = vcmp.gt.f32.partialorder %v1258, 1.0
      %vm2015 = vcmp.gt.f32.partialorder %v1265, 1.0
      %vm2016 = vcmp.gt.f32.partialorder %v1272, 1.0
      %vm2017 = vcmp.gt.f32.partialorder %v1279, 1.0
      %vm2018 = vcmp.gt.f32.partialorder %v1286, 1.0
      %vm2019 = vcmp.gt.f32.partialorder %v1293, 1.0
      %vm2020 = vcmp.gt.f32.partialorder %v1300, 1.0
      %vm2021 = vcmp.gt.f32.partialorder %v1307, 1.0
      %vm2022 = vcmp.gt.f32.partialorder %v1314, 1.0
      %vm2023 = vcmp.gt.f32.partialorder %v1321, 1.0
      %vm2024 = vcmp.gt.f32.partialorder %v1328, 1.0
      %vm2025 = vcmp.gt.f32.partialorder %v1335, 1.0
      %vm2026 = vcmp.gt.f32.partialorder %v1342, 1.0
      %vm2027 = vcmp.gt.f32.partialorder %v1349, 1.0
      %vm2028 = vcmp.gt.f32.partialorder %v1356, 1.0
      %vm2029 = vcmp.gt.f32.partialorder %v1363, 1.0
      %vm2030 = vcmp.gt.f32.partialorder %v1370, 1.0
      %vm2031 = vcmp.gt.f32.partialorder %v1377, 1.0
      %vm2032 = vcmp.gt.f32.partialorder %v1384, 1.0
      %vm2033 = vcmp.gt.f32.partialorder %v1391, 1.0
      %vm2034 = vcmp.gt.f32.partialorder %v1398, 1.0
      %vm2035 = vcmp.gt.f32.partialorder %v1405, 1.0
      %vm2036 = vcmp.gt.f32.partialorder %v1412, 1.0
      %vm2037 = vcmp.gt.f32.partialorder %v1419, 1.0
      %vm2038 = vcmp.gt.f32.partialorder %v1426, 1.0
      %vm2039 = vcmp.gt.f32.partialorder %v1433, 1.0
      %vm2040 = vcmp.gt.f32.partialorder %v1440, 1.0
      %vm2041 = vcmp.gt.f32.partialorder %v1447, 1.0
      %vm2042 = vcmp.gt.f32.partialorder %v1454, 1.0
      %vm2043 = vcmp.gt.f32.partialorder %v1461, 1.0
      %vm2044 = vcmp.gt.f32.partialorder %v1468, 1.0
      %vm2045 = vcmp.gt.f32.partialorder %v1475, 1.0
      %vm2046 = vcmp.gt.f32.partialorder %v1482, 1.0
      %vm2047 = vcmp.gt.f32.partialorder %v1489, 1.0
      %vm2048 = vcmp.gt.f32.partialorder %v1496, 1.0
      %vm2049 = vcmp.gt.f32.partialorder %v1503, 1.0
      %vm2050 = vcmp.gt.f32.partialorder %v1510, 1.0
      %vm2051 = vcmp.gt.f32.partialorder %v1517, 1.0
      %vm2052 = vcmp.gt.f32.partialorder %v1524, 1.0
      %vm2053 = vcmp.gt.f32.partialorder %v1531, 1.0
      %vm2054 = vcmp.gt.f32.partialorder %v1538, 1.0
      %vm2055 = vcmp.gt.f32.partialorder %v1545, 1.0
      %vm2056 = vcmp.gt.f32.partialorder %v1552, 1.0
      %vm2057 = vcmp.gt.f32.partialorder %v1559, 1.0
      %vm2058 = vcmp.gt.f32.partialorder %v1566, 1.0
      %vm2059 = vcmp.gt.f32.partialorder %v1573, 1.0
      %vm2060 = vcmp.gt.f32.partialorder %v1580, 1.0
      %vm2061 = vcmp.gt.f32.partialorder %v1587, 1.0
      %vm2062 = vcmp.gt.f32.partialorder %v1594, 1.0
      %vm2063 = vcmp.gt.f32.partialorder %v1601, 1.0
      %vm2064 = vcmp.gt.f32.partialorder %v1608, 1.0
      %vm2065 = vcmp.gt.f32.partialorder %v1615, 1.0
      %vm2066 = vcmp.gt.f32.partialorder %v1622, 1.0
      %vm2067 = vcmp.gt.f32.partialorder %v1629, 1.0
      %vm2068 = vcmp.gt.f32.partialorder %v1636, 1.0
      %vm2069 = vcmp.gt.f32.partialorder %v1643, 1.0
      %vm2070 = vcmp.gt.f32.partialorder %v1650, 1.0
      %vm2071 = vcmp.gt.f32.partialorder %v1657, 1.0
      %vm2072 = vcmp.gt.f32.partialorder %v1664, 1.0
      %vm2073 = vcmp.gt.f32.partialorder %v1671, 1.0
      %vm2074 = vcmp.gt.f32.partialorder %v1678, 1.0
      %vm2075 = vcmp.gt.f32.partialorder %v1685, 1.0
      %vm2076 = vcmp.gt.f32.partialorder %v1692, 1.0
      %v2077 = vadd.f32 %v1251, 1e-07
      %v2078 = vadd.f32 %v1258, 1e-07
      %v2079 = vadd.f32 %v1265, 1e-07
      %v2080 = vadd.f32 %v1272, 1e-07
      %v2081 = vadd.f32 %v1279, 1e-07
      %v2082 = vadd.f32 %v1286, 1e-07
      %v2083 = vadd.f32 %v1293, 1e-07
      %v2084 = vadd.f32 %v1300, 1e-07
      %v2085 = vadd.f32 %v1307, 1e-07
      %v2086 = vadd.f32 %v1314, 1e-07
      %v2087 = vadd.f32 %v1321, 1e-07
      %v2088 = vadd.f32 %v1328, 1e-07
      %v2089 = vadd.f32 %v1335, 1e-07
      %v2090 = vadd.f32 %v1342, 1e-07
      %v2091 = vadd.f32 %v1349, 1e-07
      %v2092 = vadd.f32 %v1356, 1e-07
      %v2093 = vadd.f32 %v1363, 1e-07
      %v2094 = vadd.f32 %v1370, 1e-07
      %v2095 = vadd.f32 %v1377, 1e-07
      %v2096 = vadd.f32 %v1384, 1e-07
      %v2097 = vadd.f32 %v1391, 1e-07
      %v2098 = vadd.f32 %v1398, 1e-07
      %v2099 = vadd.f32 %v1405, 1e-07
      %v2100 = vadd.f32 %v1412, 1e-07
      %v2101 = vadd.f32 %v1419, 1e-07
      %v2102 = vadd.f32 %v1426, 1e-07
      %v2103 = vadd.f32 %v1433, 1e-07
      %v2104 = vadd.f32 %v1440, 1e-07
      %v2105 = vadd.f32 %v1447, 1e-07
      %v2106 = vadd.f32 %v1454, 1e-07
      %v2107 = vadd.f32 %v1461, 1e-07
      %v2108 = vadd.f32 %v1468, 1e-07
      %v2109 = vadd.f32 %v1475, 1e-07
      %v2110 = vadd.f32 %v1482, 1e-07
      %v2111 = vadd.f32 %v1489, 1e-07
      %v2112 = vadd.f32 %v1496, 1e-07
      %v2113 = vadd.f32 %v1503, 1e-07
      %v2114 = vadd.f32 %v1510, 1e-07
      %v2115 = vadd.f32 %v1517, 1e-07
      %v2116 = vadd.f32 %v1524, 1e-07
      %v2117 = vadd.f32 %v1531, 1e-07
      %v2118 = vadd.f32 %v1538, 1e-07
      %v2119 = vadd.f32 %v1545, 1e-07
      %v2120 = vadd.f32 %v1552, 1e-07
      %v2121 = vadd.f32 %v1559, 1e-07
      %v2122 = vadd.f32 %v1566, 1e-07
      %v2123 = vadd.f32 %v1573, 1e-07
      %v2124 = vadd.f32 %v1580, 1e-07
      %v2125 = vadd.f32 %v1587, 1e-07
      %v2126 = vadd.f32 %v1594, 1e-07
      %v2127 = vadd.f32 %v1601, 1e-07
      %v2128 = vadd.f32 %v1608, 1e-07
      %v2129 = vadd.f32 %v1615, 1e-07
      %v2130 = vadd.f32 %v1622, 1e-07
      %v2131 = vadd.f32 %v1629, 1e-07
      %v2132 = vadd.f32 %v1636, 1e-07
      %v2133 = vadd.f32 %v1643, 1e-07
      %v2134 = vadd.f32 %v1650, 1e-07
      %v2135 = vadd.f32 %v1657, 1e-07
      %v2136 = vadd.f32 %v1664, 1e-07
      %v2137 = vadd.f32 %v1671, 1e-07
      %v2138 = vadd.f32 %v1678, 1e-07
      %v2139 = vadd.f32 %v1685, 1e-07
      %v2140 = vadd.f32 %v1692, 1e-07
      %v2141 = vrcp.pop %v2077
      %v2142 = vmul.f32 1.0, %v2141
      %v2143 = vrcp.pop %v2078
      %v2144 = vmul.f32 1.0, %v2143
      %v2145 = vrcp.pop %v2079
      %v2146 = vmul.f32 1.0, %v2145
      %v2147 = vrcp.pop %v2080
      %v2148 = vmul.f32 1.0, %v2147
      %v2149 = vrcp.pop %v2081
      %v2150 = vmul.f32 1.0, %v2149
      %v2151 = vrcp.pop %v2082
      %v2152 = vmul.f32 1.0, %v2151
      %v2153 = vrcp.pop %v2083
      %v2154 = vmul.f32 1.0, %v2153
      %v2155 = vrcp.pop %v2084
      %v2156 = vmul.f32 1.0, %v2155
      %v2157 = vrcp.pop %v2085
      %v2158 = vmul.f32 1.0, %v2157
      %v2159 = vrcp.pop %v2086
      %v2160 = vmul.f32 1.0, %v2159
      %v2161 = vrcp.pop %v2087
      %v2162 = vmul.f32 1.0, %v2161
      %v2163 = vrcp.pop %v2088
      %v2164 = vmul.f32 1.0, %v2163
      %v2165 = vrcp.pop %v2089
      %v2166 = vmul.f32 1.0, %v2165
      %v2167 = vrcp.pop %v2090
      %v2168 = vmul.f32 1.0, %v2167
      %v2169 = vrcp.pop %v2091
      %v2170 = vmul.f32 1.0, %v2169
      %v2171 = vrcp.pop %v2092
      %v2172 = vmul.f32 1.0, %v2171
      %v2173 = vrcp.pop %v2093
      %v2174 = vmul.f32 1.0, %v2173
      %v2175 = vrcp.pop %v2094
      %v2176 = vmul.f32 1.0, %v2175
      %v2177 = vrcp.pop %v2095
      %v2178 = vmul.f32 1.0, %v2177
      %v2179 = vrcp.pop %v2096
      %v2180 = vmul.f32 1.0, %v2179
      %v2181 = vrcp.pop %v2097
      %v2182 = vmul.f32 1.0, %v2181
      %v2183 = vrcp.pop %v2098
      %v2184 = vmul.f32 1.0, %v2183
      %v2185 = vrcp.pop %v2099
      %v2186 = vmul.f32 1.0, %v2185
      %v2187 = vrcp.pop %v2100
      %v2188 = vmul.f32 1.0, %v2187
      %v2189 = vrcp.pop %v2101
      %v2190 = vmul.f32 1.0, %v2189
      %v2191 = vrcp.pop %v2102
      %v2192 = vmul.f32 1.0, %v2191
      %v2193 = vrcp.pop %v2103
      %v2194 = vmul.f32 1.0, %v2193
      %v2195 = vrcp.pop %v2104
      %v2196 = vmul.f32 1.0, %v2195
      %v2197 = vrcp.pop %v2105
      %v2198 = vmul.f32 1.0, %v2197
      %v2199 = vrcp.pop %v2106
      %v2200 = vmul.f32 1.0, %v2199
      %v2201 = vrcp.pop %v2107
      %v2202 = vmul.f32 1.0, %v2201
      %v2203 = vrcp.pop %v2108
      %v2204 = vmul.f32 1.0, %v2203
      %v2205 = vrcp.pop %v2109
      %v2206 = vmul.f32 1.0, %v2205
      %v2207 = vrcp.pop %v2110
      %v2208 = vmul.f32 1.0, %v2207
      %v2209 = vrcp.pop %v2111
      %v2210 = vmul.f32 1.0, %v2209
      %v2211 = vrcp.pop %v2112
      %v2212 = vmul.f32 1.0, %v2211
      %v2213 = vrcp.pop %v2113
      %v2214 = vmul.f32 1.0, %v2213
      %v2215 = vrcp.pop %v2114
      %v2216 = vmul.f32 1.0, %v2215
      %v2217 = vrcp.pop %v2115
      %v2218 = vmul.f32 1.0, %v2217
      %v2219 = vrcp.pop %v2116
      %v2220 = vmul.f32 1.0, %v2219
      %v2221 = vrcp.pop %v2117
      %v2222 = vmul.f32 1.0, %v2221
      %v2223 = vrcp.pop %v2118
      %v2224 = vmul.f32 1.0, %v2223
      %v2225 = vrcp.pop %v2119
      %v2226 = vmul.f32 1.0, %v2225
      %v2227 = vrcp.pop %v2120
      %v2228 = vmul.f32 1.0, %v2227
      %v2229 = vrcp.pop %v2121
      %v2230 = vmul.f32 1.0, %v2229
      %v2231 = vrcp.pop %v2122
      %v2232 = vmul.f32 1.0, %v2231
      %v2233 = vrcp.pop %v2123
      %v2234 = vmul.f32 1.0, %v2233
      %v2235 = vrcp.pop %v2124
      %v2236 = vmul.f32 1.0, %v2235
      %v2237 = vrcp.pop %v2125
      %v2238 = vmul.f32 1.0, %v2237
      %v2239 = vrcp.pop %v2126
      %v2240 = vmul.f32 1.0, %v2239
      %v2241 = vrcp.pop %v2127
      %v2242 = vmul.f32 1.0, %v2241
      %v2243 = vrcp.pop %v2128
      %v2244 = vmul.f32 1.0, %v2243
      %v2245 = vrcp.pop %v2129
      %v2246 = vmul.f32 1.0, %v2245
      %v2247 = vrcp.pop %v2130
      %v2248 = vmul.f32 1.0, %v2247
      %v2249 = vrcp.pop %v2131
      %v2250 = vmul.f32 1.0, %v2249
      %v2251 = vrcp.pop %v2132
      %v2252 = vmul.f32 1.0, %v2251
      %v2253 = vrcp.pop %v2133
      %v2254 = vmul.f32 1.0, %v2253
      %v2255 = vrcp.pop %v2134
      %v2256 = vmul.f32 1.0, %v2255
      %v2257 = vrcp.pop %v2135
      %v2258 = vmul.f32 1.0, %v2257
      %v2259 = vrcp.pop %v2136
      %v2260 = vmul.f32 1.0, %v2259
      %v2261 = vrcp.pop %v2137
      %v2262 = vmul.f32 1.0, %v2261
      %v2263 = vrcp.pop %v2138
      %v2264 = vmul.f32 1.0, %v2263
      %v2265 = vrcp.pop %v2139
      %v2266 = vmul.f32 1.0, %v2265
      %v2267 = vrcp.pop %v2140
      %v2268 = vmul.f32 1.0, %v2267
      %v2269 = vsel %vm2013, %v2142, 1.0
      %v2270 = vsel %vm2014, %v2144, 1.0
      %v2271 = vsel %vm2015, %v2146, 1.0
      %v2272 = vsel %vm2016, %v2148, 1.0
      %v2273 = vsel %vm2017, %v2150, 1.0
      %v2274 = vsel %vm2018, %v2152, 1.0
      %v2275 = vsel %vm2019, %v2154, 1.0
      %v2276 = vsel %vm2020, %v2156, 1.0
      %v2277 = vsel %vm2021, %v2158, 1.0
      %v2278 = vsel %vm2022, %v2160, 1.0
      %v2279 = vsel %vm2023, %v2162, 1.0
      %v2280 = vsel %vm2024, %v2164, 1.0
      %v2281 = vsel %vm2025, %v2166, 1.0
      %v2282 = vsel %vm2026, %v2168, 1.0
      %v2283 = vsel %vm2027, %v2170, 1.0
      %v2284 = vsel %vm2028, %v2172, 1.0
      %v2285 = vsel %vm2029, %v2174, 1.0
      %v2286 = vsel %vm2030, %v2176, 1.0
      %v2287 = vsel %vm2031, %v2178, 1.0
      %v2288 = vsel %vm2032, %v2180, 1.0
      %v2289 = vsel %vm2033, %v2182, 1.0
      %v2290 = vsel %vm2034, %v2184, 1.0
      %v2291 = vsel %vm2035, %v2186, 1.0
      %v2292 = vsel %vm2036, %v2188, 1.0
      %v2293 = vsel %vm2037, %v2190, 1.0
      %v2294 = vsel %vm2038, %v2192, 1.0
      %v2295 = vsel %vm2039, %v2194, 1.0
      %v2296 = vsel %vm2040, %v2196, 1.0
      %v2297 = vsel %vm2041, %v2198, 1.0
      %v2298 = vsel %vm2042, %v2200, 1.0
      %v2299 = vsel %vm2043, %v2202, 1.0
      %v2300 = vsel %vm2044, %v2204, 1.0
      %v2301 = vsel %vm2045, %v2206, 1.0
      %v2302 = vsel %vm2046, %v2208, 1.0
      %v2303 = vsel %vm2047, %v2210, 1.0
      %v2304 = vsel %vm2048, %v2212, 1.0
      %v2305 = vsel %vm2049, %v2214, 1.0
      %v2306 = vsel %vm2050, %v2216, 1.0
      %v2307 = vsel %vm2051, %v2218, 1.0
      %v2308 = vsel %vm2052, %v2220, 1.0
      %v2309 = vsel %vm2053, %v2222, 1.0
      %v2310 = vsel %vm2054, %v2224, 1.0
      %v2311 = vsel %vm2055, %v2226, 1.0
      %v2312 = vsel %vm2056, %v2228, 1.0
      %v2313 = vsel %vm2057, %v2230, 1.0
      %v2314 = vsel %vm2058, %v2232, 1.0
      %v2315 = vsel %vm2059, %v2234, 1.0
      %v2316 = vsel %vm2060, %v2236, 1.0
      %v2317 = vsel %vm2061, %v2238, 1.0
      %v2318 = vsel %vm2062, %v2240, 1.0
      %v2319 = vsel %vm2063, %v2242, 1.0
      %v2320 = vsel %vm2064, %v2244, 1.0
      %v2321 = vsel %vm2065, %v2246, 1.0
      %v2322 = vsel %vm2066, %v2248, 1.0
      %v2323 = vsel %vm2067, %v2250, 1.0
      %v2324 = vsel %vm2068, %v2252, 1.0
      %v2325 = vsel %vm2069, %v2254, 1.0
      %v2326 = vsel %vm2070, %v2256, 1.0
      %v2327 = vsel %vm2071, %v2258, 1.0
      %v2328 = vsel %vm2072, %v2260, 1.0
      %v2329 = vsel %vm2073, %v2262, 1.0
      %v2330 = vsel %vm2074, %v2264, 1.0
      %v2331 = vsel %vm2075, %v2266, 1.0
      %v2332 = vsel %vm2076, %v2268, 1.0
      %v2333 = vmul.f32 %v156, %v220
      %v2334 = vmul.f32 %v157, %v221
      %v2335 = vmul.f32 %v158, %v222
      %v2336 = vmul.f32 %v159, %v223
      %v2337 = vmul.f32 %v160, %v224
      %v2338 = vmul.f32 %v161, %v225
      %v2339 = vmul.f32 %v162, %v226
      %v2340 = vmul.f32 %v163, %v227
      %v2341 = vmul.f32 %v164, %v228
      %v2342 = vmul.f32 %v165, %v229
      %v2343 = vmul.f32 %v166, %v230
      %v2344 = vmul.f32 %v167, %v231
      %v2345 = vmul.f32 %v168, %v232
      %v2346 = vmul.f32 %v169, %v233
      %v2347 = vmul.f32 %v170, %v234
      %v2348 = vmul.f32 %v171, %v235
      %v2349 = vmul.f32 %v172, %v236
      %v2350 = vmul.f32 %v173, %v237
      %v2351 = vmul.f32 %v174, %v238
      %v2352 = vmul.f32 %v175, %v239
      %v2353 = vmul.f32 %v176, %v240
      %v2354 = vmul.f32 %v177, %v241
      %v2355 = vmul.f32 %v178, %v242
      %v2356 = vmul.f32 %v179, %v243
      %v2357 = vmul.f32 %v180, %v244
      %v2358 = vmul.f32 %v181, %v245
      %v2359 = vmul.f32 %v182, %v246
      %v2360 = vmul.f32 %v183, %v247
      %v2361 = vmul.f32 %v184, %v248
      %v2362 = vmul.f32 %v185, %v249
      %v2363 = vmul.f32 %v186, %v250
      %v2364 = vmul.f32 %v187, %v251
      %v2365 = vmul.f32 %v188, %v252
      %v2366 = vmul.f32 %v189, %v253
      %v2367 = vmul.f32 %v190, %v254
      %v2368 = vmul.f32 %v191, %v255
      %v2369 = vmul.f32 %v192, %v256
      %v2370 = vmul.f32 %v193, %v257
      %v2371 = vmul.f32 %v194, %v258
      %v2372 = vmul.f32 %v195, %v259
      %v2373 = vmul.f32 %v196, %v260
      %v2374 = vmul.f32 %v197, %v261
      %v2375 = vmul.f32 %v198, %v262
      %v2376 = vmul.f32 %v199, %v263
      %v2377 = vmul.f32 %v200, %v264
      %v2378 = vmul.f32 %v201, %v265
      %v2379 = vmul.f32 %v202, %v266
      %v2380 = vmul.f32 %v203, %v267
      %v2381 = vmul.f32 %v204, %v268
      %v2382 = vmul.f32 %v205, %v269
      %v2383 = vmul.f32 %v206, %v270
      %v2384 = vmul.f32 %v207, %v271
      %v2385 = vmul.f32 %v208, %v272
      %v2386 = vmul.f32 %v209, %v273
      %v2387 = vmul.f32 %v210, %v274
      %v2388 = vmul.f32 %v211, %v275
      %v2389 = vmul.f32 %v212, %v276
      %v2390 = vmul.f32 %v213, %v277
      %v2391 = vmul.f32 %v214, %v278
      %v2392 = vmul.f32 %v215, %v279
      %v2393 = vmul.f32 %v216, %v280
      %v2394 = vmul.f32 %v217, %v281
      %v2395 = vmul.f32 %v218, %v282
      %v2396 = vmul.f32 %v219, %v283
      %v2397 = vsel %vm348, %v2333, 0.0
      %2398 = vadd.xlane.f32.xlu0 %v2397
      %v2399 = vpop.xlane.xlu0 %2398
      %v2400 = vsel %vm348, %v2334, 0.0
      %2401 = vadd.xlane.f32.xlu0 %v2400
      %v2402 = vpop.xlane.xlu0 %2401
      %v2403 = vsel %vm348, %v2335, 0.0
      %2404 = vadd.xlane.f32.xlu0 %v2403
      %v2405 = vpop.xlane.xlu0 %2404
      %v2406 = vsel %vm348, %v2336, 0.0
      %2407 = vadd.xlane.f32.xlu0 %v2406
      %v2408 = vpop.xlane.xlu0 %2407
      %v2409 = vsel %vm348, %v2337, 0.0
      %2410 = vadd.xlane.f32.xlu0 %v2409
      %v2411 = vpop.xlane.xlu0 %2410
      %v2412 = vsel %vm348, %v2338, 0.0
      %2413 = vadd.xlane.f32.xlu0 %v2412
      %v2414 = vpop.xlane.xlu0 %2413
      %v2415 = vsel %vm348, %v2339, 0.0
      %2416 = vadd.xlane.f32.xlu0 %v2415
      %v2417 = vpop.xlane.xlu0 %2416
      %v2418 = vsel %vm348, %v2340, 0.0
      %2419 = vadd.xlane.f32.xlu0 %v2418
      %v2420 = vpop.xlane.xlu0 %2419
      %v2421 = vsel %vm348, %v2341, 0.0
      %2422 = vadd.xlane.f32.xlu0 %v2421
      %v2423 = vpop.xlane.xlu0 %2422
      %v2424 = vsel %vm348, %v2342, 0.0
      %2425 = vadd.xlane.f32.xlu0 %v2424
      %v2426 = vpop.xlane.xlu0 %2425
      %v2427 = vsel %vm348, %v2343, 0.0
      %2428 = vadd.xlane.f32.xlu0 %v2427
      %v2429 = vpop.xlane.xlu0 %2428
      %v2430 = vsel %vm348, %v2344, 0.0
      %2431 = vadd.xlane.f32.xlu0 %v2430
      %v2432 = vpop.xlane.xlu0 %2431
      %v2433 = vsel %vm348, %v2345, 0.0
      %2434 = vadd.xlane.f32.xlu0 %v2433
      %v2435 = vpop.xlane.xlu0 %2434
      %v2436 = vsel %vm348, %v2346, 0.0
      %2437 = vadd.xlane.f32.xlu0 %v2436
      %v2438 = vpop.xlane.xlu0 %2437
      %v2439 = vsel %vm348, %v2347, 0.0
      %2440 = vadd.xlane.f32.xlu0 %v2439
      %v2441 = vpop.xlane.xlu0 %2440
      %v2442 = vsel %vm348, %v2348, 0.0
      %2443 = vadd.xlane.f32.xlu0 %v2442
      %v2444 = vpop.xlane.xlu0 %2443
      %v2445 = vsel %vm348, %v2349, 0.0
      %2446 = vadd.xlane.f32.xlu0 %v2445
      %v2447 = vpop.xlane.xlu0 %2446
      %v2448 = vsel %vm348, %v2350, 0.0
      %2449 = vadd.xlane.f32.xlu0 %v2448
      %v2450 = vpop.xlane.xlu0 %2449
      %v2451 = vsel %vm348, %v2351, 0.0
      %2452 = vadd.xlane.f32.xlu0 %v2451
      %v2453 = vpop.xlane.xlu0 %2452
      %v2454 = vsel %vm348, %v2352, 0.0
      %2455 = vadd.xlane.f32.xlu0 %v2454
      %v2456 = vpop.xlane.xlu0 %2455
      %v2457 = vsel %vm348, %v2353, 0.0
      %2458 = vadd.xlane.f32.xlu0 %v2457
      %v2459 = vpop.xlane.xlu0 %2458
      %v2460 = vsel %vm348, %v2354, 0.0
      %2461 = vadd.xlane.f32.xlu0 %v2460
      %v2462 = vpop.xlane.xlu0 %2461
      %v2463 = vsel %vm348, %v2355, 0.0
      %2464 = vadd.xlane.f32.xlu0 %v2463
      %v2465 = vpop.xlane.xlu0 %2464
      %v2466 = vsel %vm348, %v2356, 0.0
      %2467 = vadd.xlane.f32.xlu0 %v2466
      %v2468 = vpop.xlane.xlu0 %2467
      %v2469 = vsel %vm348, %v2357, 0.0
      %2470 = vadd.xlane.f32.xlu0 %v2469
      %v2471 = vpop.xlane.xlu0 %2470
      %v2472 = vsel %vm348, %v2358, 0.0
      %2473 = vadd.xlane.f32.xlu0 %v2472
      %v2474 = vpop.xlane.xlu0 %2473
      %v2475 = vsel %vm348, %v2359, 0.0
      %2476 = vadd.xlane.f32.xlu0 %v2475
      %v2477 = vpop.xlane.xlu0 %2476
      %v2478 = vsel %vm348, %v2360, 0.0
      %2479 = vadd.xlane.f32.xlu0 %v2478
      %v2480 = vpop.xlane.xlu0 %2479
      %v2481 = vsel %vm348, %v2361, 0.0
      %2482 = vadd.xlane.f32.xlu0 %v2481
      %v2483 = vpop.xlane.xlu0 %2482
      %v2484 = vsel %vm348, %v2362, 0.0
      %2485 = vadd.xlane.f32.xlu0 %v2484
      %v2486 = vpop.xlane.xlu0 %2485
      %v2487 = vsel %vm348, %v2363, 0.0
      %2488 = vadd.xlane.f32.xlu0 %v2487
      %v2489 = vpop.xlane.xlu0 %2488
      %v2490 = vsel %vm348, %v2364, 0.0
      %2491 = vadd.xlane.f32.xlu0 %v2490
      %v2492 = vpop.xlane.xlu0 %2491
      %v2493 = vsel %vm348, %v2365, 0.0
      %2494 = vadd.xlane.f32.xlu0 %v2493
      %v2495 = vpop.xlane.xlu0 %2494
      %v2496 = vsel %vm348, %v2366, 0.0
      %2497 = vadd.xlane.f32.xlu0 %v2496
      %v2498 = vpop.xlane.xlu0 %2497
      %v2499 = vsel %vm348, %v2367, 0.0
      %2500 = vadd.xlane.f32.xlu0 %v2499
      %v2501 = vpop.xlane.xlu0 %2500
      %v2502 = vsel %vm348, %v2368, 0.0
      %2503 = vadd.xlane.f32.xlu0 %v2502
      %v2504 = vpop.xlane.xlu0 %2503
      %v2505 = vsel %vm348, %v2369, 0.0
      %2506 = vadd.xlane.f32.xlu0 %v2505
      %v2507 = vpop.xlane.xlu0 %2506
      %v2508 = vsel %vm348, %v2370, 0.0
      %2509 = vadd.xlane.f32.xlu0 %v2508
      %v2510 = vpop.xlane.xlu0 %2509
      %v2511 = vsel %vm348, %v2371, 0.0
      %2512 = vadd.xlane.f32.xlu0 %v2511
      %v2513 = vpop.xlane.xlu0 %2512
      %v2514 = vsel %vm348, %v2372, 0.0
      %2515 = vadd.xlane.f32.xlu0 %v2514
      %v2516 = vpop.xlane.xlu0 %2515
      %v2517 = vsel %vm348, %v2373, 0.0
      %2518 = vadd.xlane.f32.xlu0 %v2517
      %v2519 = vpop.xlane.xlu0 %2518
      %v2520 = vsel %vm348, %v2374, 0.0
      %2521 = vadd.xlane.f32.xlu0 %v2520
      %v2522 = vpop.xlane.xlu0 %2521
      %v2523 = vsel %vm348, %v2375, 0.0
      %2524 = vadd.xlane.f32.xlu0 %v2523
      %v2525 = vpop.xlane.xlu0 %2524
      %v2526 = vsel %vm348, %v2376, 0.0
      %2527 = vadd.xlane.f32.xlu0 %v2526
      %v2528 = vpop.xlane.xlu0 %2527
      %v2529 = vsel %vm348, %v2377, 0.0
      %2530 = vadd.xlane.f32.xlu0 %v2529
      %v2531 = vpop.xlane.xlu0 %2530
      %v2532 = vsel %vm348, %v2378, 0.0
      %2533 = vadd.xlane.f32.xlu0 %v2532
      %v2534 = vpop.xlane.xlu0 %2533
      %v2535 = vsel %vm348, %v2379, 0.0
      %2536 = vadd.xlane.f32.xlu0 %v2535
      %v2537 = vpop.xlane.xlu0 %2536
      %v2538 = vsel %vm348, %v2380, 0.0
      %2539 = vadd.xlane.f32.xlu0 %v2538
      %v2540 = vpop.xlane.xlu0 %2539
      %v2541 = vsel %vm348, %v2381, 0.0
      %2542 = vadd.xlane.f32.xlu0 %v2541
      %v2543 = vpop.xlane.xlu0 %2542
      %v2544 = vsel %vm348, %v2382, 0.0
      %2545 = vadd.xlane.f32.xlu0 %v2544
      %v2546 = vpop.xlane.xlu0 %2545
      %v2547 = vsel %vm348, %v2383, 0.0
      %2548 = vadd.xlane.f32.xlu0 %v2547
      %v2549 = vpop.xlane.xlu0 %2548
      %v2550 = vsel %vm348, %v2384, 0.0
      %2551 = vadd.xlane.f32.xlu0 %v2550
      %v2552 = vpop.xlane.xlu0 %2551
      %v2553 = vsel %vm348, %v2385, 0.0
      %2554 = vadd.xlane.f32.xlu0 %v2553
      %v2555 = vpop.xlane.xlu0 %2554
      %v2556 = vsel %vm348, %v2386, 0.0
      %2557 = vadd.xlane.f32.xlu0 %v2556
      %v2558 = vpop.xlane.xlu0 %2557
      %v2559 = vsel %vm348, %v2387, 0.0
      %2560 = vadd.xlane.f32.xlu0 %v2559
      %v2561 = vpop.xlane.xlu0 %2560
      %v2562 = vsel %vm348, %v2388, 0.0
      %2563 = vadd.xlane.f32.xlu0 %v2562
      %v2564 = vpop.xlane.xlu0 %2563
      %v2565 = vsel %vm348, %v2389, 0.0
      %2566 = vadd.xlane.f32.xlu0 %v2565
      %v2567 = vpop.xlane.xlu0 %2566
      %v2568 = vsel %vm348, %v2390, 0.0
      %2569 = vadd.xlane.f32.xlu0 %v2568
      %v2570 = vpop.xlane.xlu0 %2569
      %v2571 = vsel %vm348, %v2391, 0.0
      %2572 = vadd.xlane.f32.xlu0 %v2571
      %v2573 = vpop.xlane.xlu0 %2572
      %v2574 = vsel %vm348, %v2392, 0.0
      %2575 = vadd.xlane.f32.xlu0 %v2574
      %v2576 = vpop.xlane.xlu0 %2575
      %v2577 = vsel %vm348, %v2393, 0.0
      %2578 = vadd.xlane.f32.xlu0 %v2577
      %v2579 = vpop.xlane.xlu0 %2578
      %v2580 = vsel %vm348, %v2394, 0.0
      %2581 = vadd.xlane.f32.xlu0 %v2580
      %v2582 = vpop.xlane.xlu0 %2581
      %v2583 = vsel %vm348, %v2395, 0.0
      %2584 = vadd.xlane.f32.xlu0 %v2583
      %v2585 = vpop.xlane.xlu0 %2584
      %v2586 = vsel %vm348, %v2396, 0.0
      %2587 = vadd.xlane.f32.xlu0 %v2586
      %v2588 = vpop.xlane.xlu0 %2587
      %v2589 = vmul.f32 %v2399, %v1949
      %v2590 = vmul.f32 %v2402, %v1950
      %v2591 = vmul.f32 %v2405, %v1951
      %v2592 = vmul.f32 %v2408, %v1952
      %v2593 = vmul.f32 %v2411, %v1953
      %v2594 = vmul.f32 %v2414, %v1954
      %v2595 = vmul.f32 %v2417, %v1955
      %v2596 = vmul.f32 %v2420, %v1956
      %v2597 = vmul.f32 %v2423, %v1957
      %v2598 = vmul.f32 %v2426, %v1958
      %v2599 = vmul.f32 %v2429, %v1959
      %v2600 = vmul.f32 %v2432, %v1960
      %v2601 = vmul.f32 %v2435, %v1961
      %v2602 = vmul.f32 %v2438, %v1962
      %v2603 = vmul.f32 %v2441, %v1963
      %v2604 = vmul.f32 %v2444, %v1964
      %v2605 = vmul.f32 %v2447, %v1965
      %v2606 = vmul.f32 %v2450, %v1966
      %v2607 = vmul.f32 %v2453, %v1967
      %v2608 = vmul.f32 %v2456, %v1968
      %v2609 = vmul.f32 %v2459, %v1969
      %v2610 = vmul.f32 %v2462, %v1970
      %v2611 = vmul.f32 %v2465, %v1971
      %v2612 = vmul.f32 %v2468, %v1972
      %v2613 = vmul.f32 %v2471, %v1973
      %v2614 = vmul.f32 %v2474, %v1974
      %v2615 = vmul.f32 %v2477, %v1975
      %v2616 = vmul.f32 %v2480, %v1976
      %v2617 = vmul.f32 %v2483, %v1977
      %v2618 = vmul.f32 %v2486, %v1978
      %v2619 = vmul.f32 %v2489, %v1979
      %v2620 = vmul.f32 %v2492, %v1980
      %v2621 = vmul.f32 %v2495, %v1981
      %v2622 = vmul.f32 %v2498, %v1982
      %v2623 = vmul.f32 %v2501, %v1983
      %v2624 = vmul.f32 %v2504, %v1984
      %v2625 = vmul.f32 %v2507, %v1985
      %v2626 = vmul.f32 %v2510, %v1986
      %v2627 = vmul.f32 %v2513, %v1987
      %v2628 = vmul.f32 %v2516, %v1988
      %v2629 = vmul.f32 %v2519, %v1989
      %v2630 = vmul.f32 %v2522, %v1990
      %v2631 = vmul.f32 %v2525, %v1991
      %v2632 = vmul.f32 %v2528, %v1992
      %v2633 = vmul.f32 %v2531, %v1993
      %v2634 = vmul.f32 %v2534, %v1994
      %v2635 = vmul.f32 %v2537, %v1995
      %v2636 = vmul.f32 %v2540, %v1996
      %v2637 = vmul.f32 %v2543, %v1997
      %v2638 = vmul.f32 %v2546, %v1998
      %v2639 = vmul.f32 %v2549, %v1999
      %v2640 = vmul.f32 %v2552, %v2000
      %v2641 = vmul.f32 %v2555, %v2001
      %v2642 = vmul.f32 %v2558, %v2002
      %v2643 = vmul.f32 %v2561, %v2003
      %v2644 = vmul.f32 %v2564, %v2004
      %v2645 = vmul.f32 %v2567, %v2005
      %v2646 = vmul.f32 %v2570, %v2006
      %v2647 = vmul.f32 %v2573, %v2007
      %v2648 = vmul.f32 %v2576, %v2008
      %v2649 = vmul.f32 %v2579, %v2009
      %v2650 = vmul.f32 %v2582, %v2010
      %v2651 = vmul.f32 %v2585, %v2011
      %v2652 = vmul.f32 %v2588, %v2012
      %v2653 = vmul.f32 %v2589, %v2269
      %v2654 = vmul.f32 %v2590, %v2270
      %v2655 = vmul.f32 %v2591, %v2271
      %v2656 = vmul.f32 %v2592, %v2272
      %v2657 = vmul.f32 %v2593, %v2273
      %v2658 = vmul.f32 %v2594, %v2274
      %v2659 = vmul.f32 %v2595, %v2275
      %v2660 = vmul.f32 %v2596, %v2276
      %v2661 = vmul.f32 %v2597, %v2277
      %v2662 = vmul.f32 %v2598, %v2278
      %v2663 = vmul.f32 %v2599, %v2279
      %v2664 = vmul.f32 %v2600, %v2280
      %v2665 = vmul.f32 %v2601, %v2281
      %v2666 = vmul.f32 %v2602, %v2282
      %v2667 = vmul.f32 %v2603, %v2283
      %v2668 = vmul.f32 %v2604, %v2284
      %v2669 = vmul.f32 %v2605, %v2285
      %v2670 = vmul.f32 %v2606, %v2286
      %v2671 = vmul.f32 %v2607, %v2287
      %v2672 = vmul.f32 %v2608, %v2288
      %v2673 = vmul.f32 %v2609, %v2289
      %v2674 = vmul.f32 %v2610, %v2290
      %v2675 = vmul.f32 %v2611, %v2291
      %v2676 = vmul.f32 %v2612, %v2292
      %v2677 = vmul.f32 %v2613, %v2293
      %v2678 = vmul.f32 %v2614, %v2294
      %v2679 = vmul.f32 %v2615, %v2295
      %v2680 = vmul.f32 %v2616, %v2296
      %v2681 = vmul.f32 %v2617, %v2297
      %v2682 = vmul.f32 %v2618, %v2298
      %v2683 = vmul.f32 %v2619, %v2299
      %v2684 = vmul.f32 %v2620, %v2300
      %v2685 = vmul.f32 %v2621, %v2301
      %v2686 = vmul.f32 %v2622, %v2302
      %v2687 = vmul.f32 %v2623, %v2303
      %v2688 = vmul.f32 %v2624, %v2304
      %v2689 = vmul.f32 %v2625, %v2305
      %v2690 = vmul.f32 %v2626, %v2306
      %v2691 = vmul.f32 %v2627, %v2307
      %v2692 = vmul.f32 %v2628, %v2308
      %v2693 = vmul.f32 %v2629, %v2309
      %v2694 = vmul.f32 %v2630, %v2310
      %v2695 = vmul.f32 %v2631, %v2311
      %v2696 = vmul.f32 %v2632, %v2312
      %v2697 = vmul.f32 %v2633, %v2313
      %v2698 = vmul.f32 %v2634, %v2314
      %v2699 = vmul.f32 %v2635, %v2315
      %v2700 = vmul.f32 %v2636, %v2316
      %v2701 = vmul.f32 %v2637, %v2317
      %v2702 = vmul.f32 %v2638, %v2318
      %v2703 = vmul.f32 %v2639, %v2319
      %v2704 = vmul.f32 %v2640, %v2320
      %v2705 = vmul.f32 %v2641, %v2321
      %v2706 = vmul.f32 %v2642, %v2322
      %v2707 = vmul.f32 %v2643, %v2323
      %v2708 = vmul.f32 %v2644, %v2324
      %v2709 = vmul.f32 %v2645, %v2325
      %v2710 = vmul.f32 %v2646, %v2326
      %v2711 = vmul.f32 %v2647, %v2327
      %v2712 = vmul.f32 %v2648, %v2328
      %v2713 = vmul.f32 %v2649, %v2329
      %v2714 = vmul.f32 %v2650, %v2330
      %v2715 = vmul.f32 %v2651, %v2331
      %v2716 = vmul.f32 %v2652, %v2332
      %v2717 = vxor.u32 %v2653, 2147483648
      %v2718 = vxor.u32 %v2654, 2147483648
      %v2719 = vxor.u32 %v2655, 2147483648
      %v2720 = vxor.u32 %v2656, 2147483648
      %v2721 = vxor.u32 %v2657, 2147483648
      %v2722 = vxor.u32 %v2658, 2147483648
      %v2723 = vxor.u32 %v2659, 2147483648
      %v2724 = vxor.u32 %v2660, 2147483648
      %v2725 = vxor.u32 %v2661, 2147483648
      %v2726 = vxor.u32 %v2662, 2147483648
      %v2727 = vxor.u32 %v2663, 2147483648
      %v2728 = vxor.u32 %v2664, 2147483648
      %v2729 = vxor.u32 %v2665, 2147483648
      %v2730 = vxor.u32 %v2666, 2147483648
      %v2731 = vxor.u32 %v2667, 2147483648
      %v2732 = vxor.u32 %v2668, 2147483648
      %v2733 = vxor.u32 %v2669, 2147483648
      %v2734 = vxor.u32 %v2670, 2147483648
      %v2735 = vxor.u32 %v2671, 2147483648
      %v2736 = vxor.u32 %v2672, 2147483648
      %v2737 = vxor.u32 %v2673, 2147483648
      %v2738 = vxor.u32 %v2674, 2147483648
      %v2739 = vxor.u32 %v2675, 2147483648
      %v2740 = vxor.u32 %v2676, 2147483648
      %v2741 = vxor.u32 %v2677, 2147483648
      %v2742 = vxor.u32 %v2678, 2147483648
      %v2743 = vxor.u32 %v2679, 2147483648
      %v2744 = vxor.u32 %v2680, 2147483648
      %v2745 = vxor.u32 %v2681, 2147483648
      %v2746 = vxor.u32 %v2682, 2147483648
      %v2747 = vxor.u32 %v2683, 2147483648
      %v2748 = vxor.u32 %v2684, 2147483648
      %v2749 = vxor.u32 %v2685, 2147483648
      %v2750 = vxor.u32 %v2686, 2147483648
      %v2751 = vxor.u32 %v2687, 2147483648
      %v2752 = vxor.u32 %v2688, 2147483648
      %v2753 = vxor.u32 %v2689, 2147483648
      %v2754 = vxor.u32 %v2690, 2147483648
      %v2755 = vxor.u32 %v2691, 2147483648
      %v2756 = vxor.u32 %v2692, 2147483648
      %v2757 = vxor.u32 %v2693, 2147483648
      %v2758 = vxor.u32 %v2694, 2147483648
      %v2759 = vxor.u32 %v2695, 2147483648
      %v2760 = vxor.u32 %v2696, 2147483648
      %v2761 = vxor.u32 %v2697, 2147483648
      %v2762 = vxor.u32 %v2698, 2147483648
      %v2763 = vxor.u32 %v2699, 2147483648
      %v2764 = vxor.u32 %v2700, 2147483648
      %v2765 = vxor.u32 %v2701, 2147483648
      %v2766 = vxor.u32 %v2702, 2147483648
      %v2767 = vxor.u32 %v2703, 2147483648
      %v2768 = vxor.u32 %v2704, 2147483648
      %v2769 = vxor.u32 %v2705, 2147483648
      %v2770 = vxor.u32 %v2706, 2147483648
      %v2771 = vxor.u32 %v2707, 2147483648
      %v2772 = vxor.u32 %v2708, 2147483648
      %v2773 = vxor.u32 %v2709, 2147483648
      %v2774 = vxor.u32 %v2710, 2147483648
      %v2775 = vxor.u32 %v2711, 2147483648
      %v2776 = vxor.u32 %v2712, 2147483648
      %v2777 = vxor.u32 %v2713, 2147483648
      %v2778 = vxor.u32 %v2714, 2147483648
      %v2779 = vxor.u32 %v2715, 2147483648
      %v2780 = vxor.u32 %v2716, 2147483648
      %v2781 = vmul.f32 %v2717, 1.442695
      %v2782 = vpow.pop %v2781
      %v2783 = vmul.f32 %v2718, 1.442695
      %v2784 = vpow.pop %v2783
      %v2785 = vmul.f32 %v2719, 1.442695
      %v2786 = vpow.pop %v2785
      %v2787 = vmul.f32 %v2720, 1.442695
      %v2788 = vpow.pop %v2787
      %v2789 = vmul.f32 %v2721, 1.442695
      %v2790 = vpow.pop %v2789
      %v2791 = vmul.f32 %v2722, 1.442695
      %v2792 = vpow.pop %v2791
      %v2793 = vmul.f32 %v2723, 1.442695
      %v2794 = vpow.pop %v2793
      %v2795 = vmul.f32 %v2724, 1.442695
      %v2796 = vpow.pop %v2795
      %v2797 = vmul.f32 %v2725, 1.442695
      %v2798 = vpow.pop %v2797
      %v2799 = vmul.f32 %v2726, 1.442695
      %v2800 = vpow.pop %v2799
      %v2801 = vmul.f32 %v2727, 1.442695
      %v2802 = vpow.pop %v2801
      %v2803 = vmul.f32 %v2728, 1.442695
      %v2804 = vpow.pop %v2803
      %v2805 = vmul.f32 %v2729, 1.442695
      %v2806 = vpow.pop %v2805
      %v2807 = vmul.f32 %v2730, 1.442695
      %v2808 = vpow.pop %v2807
      %v2809 = vmul.f32 %v2731, 1.442695
      %v2810 = vpow.pop %v2809
      %v2811 = vmul.f32 %v2732, 1.442695
      %v2812 = vpow.pop %v2811
      %v2813 = vmul.f32 %v2733, 1.442695
      %v2814 = vpow.pop %v2813
      %v2815 = vmul.f32 %v2734, 1.442695
      %v2816 = vpow.pop %v2815
      %v2817 = vmul.f32 %v2735, 1.442695
      %v2818 = vpow.pop %v2817
      %v2819 = vmul.f32 %v2736, 1.442695
      %v2820 = vpow.pop %v2819
      %v2821 = vmul.f32 %v2737, 1.442695
      %v2822 = vpow.pop %v2821
      %v2823 = vmul.f32 %v2738, 1.442695
      %v2824 = vpow.pop %v2823
      %v2825 = vmul.f32 %v2739, 1.442695
      %v2826 = vpow.pop %v2825
      %v2827 = vmul.f32 %v2740, 1.442695
      %v2828 = vpow.pop %v2827
      %v2829 = vmul.f32 %v2741, 1.442695
      %v2830 = vpow.pop %v2829
      %v2831 = vmul.f32 %v2742, 1.442695
      %v2832 = vpow.pop %v2831
      %v2833 = vmul.f32 %v2743, 1.442695
      %v2834 = vpow.pop %v2833
      %v2835 = vmul.f32 %v2744, 1.442695
      %v2836 = vpow.pop %v2835
      %v2837 = vmul.f32 %v2745, 1.442695
      %v2838 = vpow.pop %v2837
      %v2839 = vmul.f32 %v2746, 1.442695
      %v2840 = vpow.pop %v2839
      %v2841 = vmul.f32 %v2747, 1.442695
      %v2842 = vpow.pop %v2841
      %v2843 = vmul.f32 %v2748, 1.442695
      %v2844 = vpow.pop %v2843
      %v2845 = vmul.f32 %v2749, 1.442695
      %v2846 = vpow.pop %v2845
      %v2847 = vmul.f32 %v2750, 1.442695
      %v2848 = vpow.pop %v2847
      %v2849 = vmul.f32 %v2751, 1.442695
      %v2850 = vpow.pop %v2849
      %v2851 = vmul.f32 %v2752, 1.442695
      %v2852 = vpow.pop %v2851
      %v2853 = vmul.f32 %v2753, 1.442695
      %v2854 = vpow.pop %v2853
      %v2855 = vmul.f32 %v2754, 1.442695
      %v2856 = vpow.pop %v2855
      %v2857 = vmul.f32 %v2755, 1.442695
      %v2858 = vpow.pop %v2857
      %v2859 = vmul.f32 %v2756, 1.442695
      %v2860 = vpow.pop %v2859
      %v2861 = vmul.f32 %v2757, 1.442695
      %v2862 = vpow.pop %v2861
      %v2863 = vmul.f32 %v2758, 1.442695
      %v2864 = vpow.pop %v2863
      %v2865 = vmul.f32 %v2759, 1.442695
      %v2866 = vpow.pop %v2865
      %v2867 = vmul.f32 %v2760, 1.442695
      %v2868 = vpow.pop %v2867
      %v2869 = vmul.f32 %v2761, 1.442695
      %v2870 = vpow.pop %v2869
      %v2871 = vmul.f32 %v2762, 1.442695
      %v2872 = vpow.pop %v2871
      %v2873 = vmul.f32 %v2763, 1.442695
      %v2874 = vpow.pop %v2873
      %v2875 = vmul.f32 %v2764, 1.442695
      %v2876 = vpow.pop %v2875
      %v2877 = vmul.f32 %v2765, 1.442695
      %v2878 = vpow.pop %v2877
      %v2879 = vmul.f32 %v2766, 1.442695
      %v2880 = vpow.pop %v2879
      %v2881 = vmul.f32 %v2767, 1.442695
      %v2882 = vpow.pop %v2881
      %v2883 = vmul.f32 %v2768, 1.442695
      %v2884 = vpow.pop %v2883
      %v2885 = vmul.f32 %v2769, 1.442695
      %v2886 = vpow.pop %v2885
      %v2887 = vmul.f32 %v2770, 1.442695
      %v2888 = vpow.pop %v2887
      %v2889 = vmul.f32 %v2771, 1.442695
      %v2890 = vpow.pop %v2889
      %v2891 = vmul.f32 %v2772, 1.442695
      %v2892 = vpow.pop %v2891
      %v2893 = vmul.f32 %v2773, 1.442695
      %v2894 = vpow.pop %v2893
      %v2895 = vmul.f32 %v2774, 1.442695
      %v2896 = vpow.pop %v2895
      %v2897 = vmul.f32 %v2775, 1.442695
      %v2898 = vpow.pop %v2897
      %v2899 = vmul.f32 %v2776, 1.442695
      %v2900 = vpow.pop %v2899
      %v2901 = vmul.f32 %v2777, 1.442695
      %v2902 = vpow.pop %v2901
      %v2903 = vmul.f32 %v2778, 1.442695
      %v2904 = vpow.pop %v2903
      %v2905 = vmul.f32 %v2779, 1.442695
      %v2906 = vpow.pop %v2905
      %v2907 = vmul.f32 %v2780, 1.442695
      %v2908 = vpow.pop %v2907
      %v2909 = vadd.f32 %v2782, 1.0
      %v2910 = vadd.f32 %v2784, 1.0
      %v2911 = vadd.f32 %v2786, 1.0
      %v2912 = vadd.f32 %v2788, 1.0
      %v2913 = vadd.f32 %v2790, 1.0
      %v2914 = vadd.f32 %v2792, 1.0
      %v2915 = vadd.f32 %v2794, 1.0
      %v2916 = vadd.f32 %v2796, 1.0
      %v2917 = vadd.f32 %v2798, 1.0
      %v2918 = vadd.f32 %v2800, 1.0
      %v2919 = vadd.f32 %v2802, 1.0
      %v2920 = vadd.f32 %v2804, 1.0
      %v2921 = vadd.f32 %v2806, 1.0
      %v2922 = vadd.f32 %v2808, 1.0
      %v2923 = vadd.f32 %v2810, 1.0
      %v2924 = vadd.f32 %v2812, 1.0
      %v2925 = vadd.f32 %v2814, 1.0
      %v2926 = vadd.f32 %v2816, 1.0
      %v2927 = vadd.f32 %v2818, 1.0
      %v2928 = vadd.f32 %v2820, 1.0
      %v2929 = vadd.f32 %v2822, 1.0
      %v2930 = vadd.f32 %v2824, 1.0
      %v2931 = vadd.f32 %v2826, 1.0
      %v2932 = vadd.f32 %v2828, 1.0
      %v2933 = vadd.f32 %v2830, 1.0
      %v2934 = vadd.f32 %v2832, 1.0
      %v2935 = vadd.f32 %v2834, 1.0
      %v2936 = vadd.f32 %v2836, 1.0
      %v2937 = vadd.f32 %v2838, 1.0
      %v2938 = vadd.f32 %v2840, 1.0
      %v2939 = vadd.f32 %v2842, 1.0
      %v2940 = vadd.f32 %v2844, 1.0
      %v2941 = vadd.f32 %v2846, 1.0
      %v2942 = vadd.f32 %v2848, 1.0
      %v2943 = vadd.f32 %v2850, 1.0
      %v2944 = vadd.f32 %v2852, 1.0
      %v2945 = vadd.f32 %v2854, 1.0
      %v2946 = vadd.f32 %v2856, 1.0
      %v2947 = vadd.f32 %v2858, 1.0
      %v2948 = vadd.f32 %v2860, 1.0
      %v2949 = vadd.f32 %v2862, 1.0
      %v2950 = vadd.f32 %v2864, 1.0
      %v2951 = vadd.f32 %v2866, 1.0
      %v2952 = vadd.f32 %v2868, 1.0
      %v2953 = vadd.f32 %v2870, 1.0
      %v2954 = vadd.f32 %v2872, 1.0
      %v2955 = vadd.f32 %v2874, 1.0
      %v2956 = vadd.f32 %v2876, 1.0
      %v2957 = vadd.f32 %v2878, 1.0
      %v2958 = vadd.f32 %v2880, 1.0
      %v2959 = vadd.f32 %v2882, 1.0
      %v2960 = vadd.f32 %v2884, 1.0
      %v2961 = vadd.f32 %v2886, 1.0
      %v2962 = vadd.f32 %v2888, 1.0
      %v2963 = vadd.f32 %v2890, 1.0
      %v2964 = vadd.f32 %v2892, 1.0
      %v2965 = vadd.f32 %v2894, 1.0
      %v2966 = vadd.f32 %v2896, 1.0
      %v2967 = vadd.f32 %v2898, 1.0
      %v2968 = vadd.f32 %v2900, 1.0
      %v2969 = vadd.f32 %v2902, 1.0
      %v2970 = vadd.f32 %v2904, 1.0
      %v2971 = vadd.f32 %v2906, 1.0
      %v2972 = vadd.f32 %v2908, 1.0
      %v2973 = vrcp.pop %v2909
      %v2974 = vmul.f32 1.0, %v2973
      %v2975 = vrcp.pop %v2910
      %v2976 = vmul.f32 1.0, %v2975
      %v2977 = vrcp.pop %v2911
      %v2978 = vmul.f32 1.0, %v2977
      %v2979 = vrcp.pop %v2912
      %v2980 = vmul.f32 1.0, %v2979
      %v2981 = vrcp.pop %v2913
      %v2982 = vmul.f32 1.0, %v2981
      %v2983 = vrcp.pop %v2914
      %v2984 = vmul.f32 1.0, %v2983
      %v2985 = vrcp.pop %v2915
      %v2986 = vmul.f32 1.0, %v2985
      %v2987 = vrcp.pop %v2916
      %v2988 = vmul.f32 1.0, %v2987
      %v2989 = vrcp.pop %v2917
      %v2990 = vmul.f32 1.0, %v2989
      %v2991 = vrcp.pop %v2918
      %v2992 = vmul.f32 1.0, %v2991
      %v2993 = vrcp.pop %v2919
      %v2994 = vmul.f32 1.0, %v2993
      %v2995 = vrcp.pop %v2920
      %v2996 = vmul.f32 1.0, %v2995
      %v2997 = vrcp.pop %v2921
      %v2998 = vmul.f32 1.0, %v2997
      %v2999 = vrcp.pop %v2922
      %v3000 = vmul.f32 1.0, %v2999
      %v3001 = vrcp.pop %v2923
      %v3002 = vmul.f32 1.0, %v3001
      %v3003 = vrcp.pop %v2924
      %v3004 = vmul.f32 1.0, %v3003
      %v3005 = vrcp.pop %v2925
      %v3006 = vmul.f32 1.0, %v3005
      %v3007 = vrcp.pop %v2926
      %v3008 = vmul.f32 1.0, %v3007
      %v3009 = vrcp.pop %v2927
      %v3010 = vmul.f32 1.0, %v3009
      %v3011 = vrcp.pop %v2928
      %v3012 = vmul.f32 1.0, %v3011
      %v3013 = vrcp.pop %v2929
      %v3014 = vmul.f32 1.0, %v3013
      %v3015 = vrcp.pop %v2930
      %v3016 = vmul.f32 1.0, %v3015
      %v3017 = vrcp.pop %v2931
      %v3018 = vmul.f32 1.0, %v3017
      %v3019 = vrcp.pop %v2932
      %v3020 = vmul.f32 1.0, %v3019
      %v3021 = vrcp.pop %v2933
      %v3022 = vmul.f32 1.0, %v3021
      %v3023 = vrcp.pop %v2934
      %v3024 = vmul.f32 1.0, %v3023
      %v3025 = vrcp.pop %v2935
      %v3026 = vmul.f32 1.0, %v3025
      %v3027 = vrcp.pop %v2936
      %v3028 = vmul.f32 1.0, %v3027
      %v3029 = vrcp.pop %v2937
      %v3030 = vmul.f32 1.0, %v3029
      %v3031 = vrcp.pop %v2938
      %v3032 = vmul.f32 1.0, %v3031
      %v3033 = vrcp.pop %v2939
      %v3034 = vmul.f32 1.0, %v3033
      %v3035 = vrcp.pop %v2940
      %v3036 = vmul.f32 1.0, %v3035
      %v3037 = vrcp.pop %v2941
      %v3038 = vmul.f32 1.0, %v3037
      %v3039 = vrcp.pop %v2942
      %v3040 = vmul.f32 1.0, %v3039
      %v3041 = vrcp.pop %v2943
      %v3042 = vmul.f32 1.0, %v3041
      %v3043 = vrcp.pop %v2944
      %v3044 = vmul.f32 1.0, %v3043
      %v3045 = vrcp.pop %v2945
      %v3046 = vmul.f32 1.0, %v3045
      %v3047 = vrcp.pop %v2946
      %v3048 = vmul.f32 1.0, %v3047
      %v3049 = vrcp.pop %v2947
      %v3050 = vmul.f32 1.0, %v3049
      %v3051 = vrcp.pop %v2948
      %v3052 = vmul.f32 1.0, %v3051
      %v3053 = vrcp.pop %v2949
      %v3054 = vmul.f32 1.0, %v3053
      %v3055 = vrcp.pop %v2950
      %v3056 = vmul.f32 1.0, %v3055
      %v3057 = vrcp.pop %v2951
      %v3058 = vmul.f32 1.0, %v3057
      %v3059 = vrcp.pop %v2952
      %v3060 = vmul.f32 1.0, %v3059
      %v3061 = vrcp.pop %v2953
      %v3062 = vmul.f32 1.0, %v3061
      %v3063 = vrcp.pop %v2954
      %v3064 = vmul.f32 1.0, %v3063
      %v3065 = vrcp.pop %v2955
      %v3066 = vmul.f32 1.0, %v3065
      %v3067 = vrcp.pop %v2956
      %v3068 = vmul.f32 1.0, %v3067
      %v3069 = vrcp.pop %v2957
      %v3070 = vmul.f32 1.0, %v3069
      %v3071 = vrcp.pop %v2958
      %v3072 = vmul.f32 1.0, %v3071
      %v3073 = vrcp.pop %v2959
      %v3074 = vmul.f32 1.0, %v3073
      %v3075 = vrcp.pop %v2960
      %v3076 = vmul.f32 1.0, %v3075
      %v3077 = vrcp.pop %v2961
      %v3078 = vmul.f32 1.0, %v3077
      %v3079 = vrcp.pop %v2962
      %v3080 = vmul.f32 1.0, %v3079
      %v3081 = vrcp.pop %v2963
      %v3082 = vmul.f32 1.0, %v3081
      %v3083 = vrcp.pop %v2964
      %v3084 = vmul.f32 1.0, %v3083
      %v3085 = vrcp.pop %v2965
      %v3086 = vmul.f32 1.0, %v3085
      %v3087 = vrcp.pop %v2966
      %v3088 = vmul.f32 1.0, %v3087
      %v3089 = vrcp.pop %v2967
      %v3090 = vmul.f32 1.0, %v3089
      %v3091 = vrcp.pop %v2968
      %v3092 = vmul.f32 1.0, %v3091
      %v3093 = vrcp.pop %v2969
      %v3094 = vmul.f32 1.0, %v3093
      %v3095 = vrcp.pop %v2970
      %v3096 = vmul.f32 1.0, %v3095
      %v3097 = vrcp.pop %v2971
      %v3098 = vmul.f32 1.0, %v3097
      %v3099 = vrcp.pop %v2972
      %v3100 = vmul.f32 1.0, %v3099
      %vm3101 = vcmask 7168
      %3102 = vst.msk [vmem:[%s135] sm:$0xff] %vm3101, %v2974
      %3103 = vst.msk [vmem:[%s135 + $0x8] sm:$0xff] %vm3101, %v2976
      %3104 = vst.msk [vmem:[%s135 + $0x10] sm:$0xff] %vm3101, %v2978
      %3105 = vst.msk [vmem:[%s135 + $0x18] sm:$0xff] %vm3101, %v2980
      %3106 = vst.msk [vmem:[%s135 + $0x20] sm:$0xff] %vm3101, %v2982
      %3107 = vst.msk [vmem:[%s135 + $0x28] sm:$0xff] %vm3101, %v2984
      %3108 = vst.msk [vmem:[%s135 + $0x30] sm:$0xff] %vm3101, %v2986
      %3109 = vst.msk [vmem:[%s135 + $0x38] sm:$0xff] %vm3101, %v2988
      %3110 = vst.msk [vmem:[%s135 + $0x40] sm:$0xff] %vm3101, %v2990
      %3111 = vst.msk [vmem:[%s135 + $0x48] sm:$0xff] %vm3101, %v2992
      %3112 = vst.msk [vmem:[%s135 + $0x50] sm:$0xff] %vm3101, %v2994
      %3113 = vst.msk [vmem:[%s135 + $0x58] sm:$0xff] %vm3101, %v2996
      %3114 = vst.msk [vmem:[%s135 + $0x60] sm:$0xff] %vm3101, %v2998
      %3115 = vst.msk [vmem:[%s135 + $0x68] sm:$0xff] %vm3101, %v3000
      %3116 = vst.msk [vmem:[%s135 + $0x70] sm:$0xff] %vm3101, %v3002
      %3117 = vst.msk [vmem:[%s135 + $0x78] sm:$0xff] %vm3101, %v3004
      %3118 = vst.msk [vmem:[%s135 + $0x80] sm:$0xff] %vm3101, %v3006
      %3119 = vst.msk [vmem:[%s135 + $0x88] sm:$0xff] %vm3101, %v3008
      %3120 = vst.msk [vmem:[%s135 + $0x90] sm:$0xff] %vm3101, %v3010
      %3121 = vst.msk [vmem:[%s135 + $0x98] sm:$0xff] %vm3101, %v3012
      %3122 = vst.msk [vmem:[%s135 + $0xa0] sm:$0xff] %vm3101, %v3014
      %3123 = vst.msk [vmem:[%s135 + $0xa8] sm:$0xff] %vm3101, %v3016
      %3124 = vst.msk [vmem:[%s135 + $0xb0] sm:$0xff] %vm3101, %v3018
      %3125 = vst.msk [vmem:[%s135 + $0xb8] sm:$0xff] %vm3101, %v3020
      %3126 = vst.msk [vmem:[%s135 + $0xc0] sm:$0xff] %vm3101, %v3022
      %3127 = vst.msk [vmem:[%s135 + $0xc8] sm:$0xff] %vm3101, %v3024
      %3128 = vst.msk [vmem:[%s135 + $0xd0] sm:$0xff] %vm3101, %v3026
      %3129 = vst.msk [vmem:[%s135 + $0xd8] sm:$0xff] %vm3101, %v3028
      %3130 = vst.msk [vmem:[%s135 + $0xe0] sm:$0xff] %vm3101, %v3030
      %3131 = vst.msk [vmem:[%s135 + $0xe8] sm:$0xff] %vm3101, %v3032
      %3132 = vst.msk [vmem:[%s135 + $0xf0] sm:$0xff] %vm3101, %v3034
      %3133 = vst.msk [vmem:[%s135 + $0xf8] sm:$0xff] %vm3101, %v3036
      %3134 = vst.msk [vmem:[%s135 + $0x100] sm:$0xff] %vm3101, %v3038
      %3135 = vst.msk [vmem:[%s135 + $0x108] sm:$0xff] %vm3101, %v3040
      %3136 = vst.msk [vmem:[%s135 + $0x110] sm:$0xff] %vm3101, %v3042
      %3137 = vst.msk [vmem:[%s135 + $0x118] sm:$0xff] %vm3101, %v3044
      %3138 = vst.msk [vmem:[%s135 + $0x120] sm:$0xff] %vm3101, %v3046
      %3139 = vst.msk [vmem:[%s135 + $0x128] sm:$0xff] %vm3101, %v3048
      %3140 = vst.msk [vmem:[%s135 + $0x130] sm:$0xff] %vm3101, %v3050
      %3141 = vst.msk [vmem:[%s135 + $0x138] sm:$0xff] %vm3101, %v3052
      %3142 = vst.msk [vmem:[%s135 + $0x140] sm:$0xff] %vm3101, %v3054
      %3143 = vst.msk [vmem:[%s135 + $0x148] sm:$0xff] %vm3101, %v3056
      %3144 = vst.msk [vmem:[%s135 + $0x150] sm:$0xff] %vm3101, %v3058
      %3145 = vst.msk [vmem:[%s135 + $0x158] sm:$0xff] %vm3101, %v3060
      %3146 = vst.msk [vmem:[%s135 + $0x160] sm:$0xff] %vm3101, %v3062
      %3147 = vst.msk [vmem:[%s135 + $0x168] sm:$0xff] %vm3101, %v3064
      %3148 = vst.msk [vmem:[%s135 + $0x170] sm:$0xff] %vm3101, %v3066
      %3149 = vst.msk [vmem:[%s135 + $0x178] sm:$0xff] %vm3101, %v3068
      %3150 = vst.msk [vmem:[%s135 + $0x180] sm:$0xff] %vm3101, %v3070
      %3151 = vst.msk [vmem:[%s135 + $0x188] sm:$0xff] %vm3101, %v3072
      %3152 = vst.msk [vmem:[%s135 + $0x190] sm:$0xff] %vm3101, %v3074
      %3153 = vst.msk [vmem:[%s135 + $0x198] sm:$0xff] %vm3101, %v3076
      %3154 = vst.msk [vmem:[%s135 + $0x1a0] sm:$0xff] %vm3101, %v3078
      %3155 = vst.msk [vmem:[%s135 + $0x1a8] sm:$0xff] %vm3101, %v3080
      %3156 = vst.msk [vmem:[%s135 + $0x1b0] sm:$0xff] %vm3101, %v3082
      %3157 = vst.msk [vmem:[%s135 + $0x1b8] sm:$0xff] %vm3101, %v3084
      %3158 = vst.msk [vmem:[%s135 + $0x1c0] sm:$0xff] %vm3101, %v3086
      %3159 = vst.msk [vmem:[%s135 + $0x1c8] sm:$0xff] %vm3101, %v3088
      %3160 = vst.msk [vmem:[%s135 + $0x1d0] sm:$0xff] %vm3101, %v3090
      %3161 = vst.msk [vmem:[%s135 + $0x1d8] sm:$0xff] %vm3101, %v3092
      %3162 = vst.msk [vmem:[%s135 + $0x1e0] sm:$0xff] %vm3101, %v3094
      %3163 = vst.msk [vmem:[%s135 + $0x1e8] sm:$0xff] %vm3101, %v3096
      %3164 = vst.msk [vmem:[%s135 + $0x1f0] sm:$0xff] %vm3101, %v3098
      %3165 = vst.msk [vmem:[%s135 + $0x1f8] sm:$0xff] %vm3101, %v3100
      %s3166 = smul.u32 64, %s25
      %p3167 = scmp.lt.s32.totalorder %s3166, 127
      %s3168 = scalar_select %p3167, %s3166, 127
      %s3169 = smul.addr %s3168, 8
      %s3170 = scalar_lea.vmem %s4, %s3169
      // Predicated region
      $region36: #{tpu_custom_call.1} parent=27 // pred_check
        %p3171 = pneg %p85
      $region37: #{tpu_custom_call.1} parent=27 // pred_check_branch
        %3173 = sbr.rel (%p3171) target = $region39
      $region38: #{tpu_custom_call.1} parent=27 // pred_region
        %s3174 = smul.u32 64, %s25
      $region39: #{tpu_custom_call.1} parent=27 // pred_fallthru
        _
    $region28: #{tpu_custom_call.1} parent=5 // pred_fallthru
      _
    %p3175 = scmp.le.s32.totalorder 2, %s20
    // Predicated region
    $region40: #{tpu_custom_call.1} parent=5 // pred_check
      %p3176 = pneg %p3175
    $region41: #{tpu_custom_call.1} parent=5 // pred_check_branch
      %3178 = sbr.rel (%p3176) target = $region43
    $region42: #{tpu_custom_call.1} parent=5 // pred_region
      %s3179 = ssub.s32 %s20, 2
      // Predicated region
      $region44: #{tpu_custom_call.1} parent=42 // pred_check
        %p3180 = pneg %p91
      $region45: #{tpu_custom_call.1} parent=42 // pred_check_branch
        %3182 = sbr.rel (%p3180) target = $region47
      $region46: #{tpu_custom_call.1} parent=42 // pred_region
        %s3183 = smul.u32 64, %s26
        %p3184 = scmp.lt.s32.totalorder %s3183, 127
        %s3185 = scalar_select %p3184, %s3183, 127
        %s3186 = smul.addr %s3185, 8
        %s3187 = scalar_lea.vmem %s4, %s3186
      $region47: #{tpu_custom_call.1} parent=42 // pred_fallthru
        _
    $region43: #{tpu_custom_call.1} parent=5 // pred_fallthru
      _
  $region6: #{tpu_custom_call.1} parent=0 // loop_footer
    %s24 = sadd.s32 1, %s20
  $region7: #{tpu_custom_call.1} parent=0 // loop_footer_branch
    %19 = sbr.rel target = $region3
  $region8: #{tpu_custom_call.1} parent=0 // loop_exit
    _

</llo_original>
